<compile_context>
chip_gen: v7x
topology: tpu7x:2x2x1
jax: 0.10.0
libtpu: 0.0.40
codegen_flags: <defaults>
</compile_context>

<pallas_src>
import functools
import numpy as np

import jax
import jax.numpy as jnp
from jax import lax
from jax.experimental import pallas as pl
from jax.experimental.pallas import tpu as pltpu


_VMEM = pl.BlockSpec(memory_space=pltpu.MemorySpace.VMEM)
_SUBLANE = 8          # pad effective batch to a multiple of 8 -> dense sublanes and
                      # trivially legal in-kernel reshapes (row groups preserved).
_NEG_INF = -1e30


def _round_up(n, m):
    return ((n + m - 1) // m) * m


# --------------------------------------------------------------------------- fused kernel
def _bigru_attention_kernel(*refs, classify):
    """Fused bidirectional GRU + HAN attention (+ optional classifier head).

    Inputs (time-major, flattened to (T*N, Din)):
      x        : (T*N, Din)  row t*N + n  = features of step t, batch row n
      lens     : (N, 1) int32   sequence length per batch row (packed-seq emulation)
      att_bias : (T, N, 1) f32  0 where attention may look, -1e30 where trimmed
      w_ih     : (Din, 6H)   [fwd r z n | bwd r z n]   (transposed PyTorch layout)
      gi_bias  : (1, 6H)     b_ih with b_hh folded into the r/z columns
      whh_f/b  : (H, 3H)     recurrent weights per direction
      bhh_n    : (1, 2H)     [fwd | bwd] hidden bias of the n gate (needed inside r*(...))
      aw1,ab1,aw2            attention Linear1 / Linear2 params
      (wlin, blin)           classifier params, only when classify=True
    Output:
      (N, 2H) attention-pooled vectors, or (N, C) softmax probs when classify=True.
    """
    if classify:
        (x_ref, lens_ref, abias_ref, wih_ref, gibias_ref, whhf_ref, whhb_ref,
         bhhn_ref, aw1_ref, ab1_ref, aw2_ref, wlin_ref, blin_ref,
         out_ref, gif_ref, gib_ref, hf_ref, hb_ref) = refs
    else:
        (x_ref, lens_ref, abias_ref, wih_ref, gibias_ref, whhf_ref, whhb_ref,
         bhhn_ref, aw1_ref, ab1_ref, aw2_ref,
         out_ref, gif_ref, gib_ref, hf_ref, hb_ref) = refs

    T, N, _ = gif_ref.shape
    H = hf_ref.shape[-1]

    # ---- hoisted input projection: one (T*N, Din) x (Din, 6H) MXU matmul ----------
    gi_all = jnp.dot(x_ref[...], wih_ref[...],
                     preferred_element_type=jnp.float32) + gibias_ref[...]
    gif_ref[...] = gi_all[:, 0:3 * H].reshape(T, N, 3 * H)       # N % 8 == 0 -> no-op reshape
    gib_ref[...] = gi_all[:, 3 * H:6 * H].reshape(T, N, 3 * H)

    lens = lens_ref[...]            # (N, 1) int32
    bhh_n = bhhn_ref[...]           # (1, 2H)
    whh_f = whhf_ref[...]           # (H, 3H)
    whh_b = whhb_ref[...]

    def _gate(gi, gh, h_prev, b_n):
        # PyTorch GRU (gate order r, z, n); b_ih(+b_hh for r/z) already folded into gi.
        r = jax.nn.sigmoid(gi[:, 0:H] + gh[:, 0:H])
        z = jax.nn.sigmoid(gi[:, H:2 * H] + gh[:, H:2 * H])
        n = jnp.tanh(gi[:, 2 * H:3 * H] + r * (gh[:, 2 * H:3 * H] + b_n))
        return (1.0 - z) * n + z * h_prev

    def step(i, carry):
        hf, hb = carry
        tf = i                       # forward direction walks t = 0 .. T-1
        tb = T - 1 - i               # backward direction walks t = T-1 .. 0
        # only these two (N,H)x(H,3H) matmuls + gate math sit on the serial chain
        ghf = jnp.dot(hf, whh_f, preferred_element_type=jnp.float32)
        ghb = jnp.dot(hb, whh_b, preferred_element_type=jnp.float32)
        hf_new = _gate(gif_ref[tf], ghf, hf, bhh_n[:, 0:H])
        hb_new = _gate(gib_ref[tb], ghb, hb, bhh_n[:, H:2 * H])
        vf = lens > tf
        vb = lens > tb
        hf_ref[tf] = jnp.where(vf, hf_new, 0.0)   # pad_packed_sequence pads with zeros
        hb_ref[tb] = jnp.where(vb, hb_new, 0.0)
        # hidden state only advances inside the valid region (packed-sequence semantics)
        return (jnp.where(vf, hf_new, hf), jnp.where(vb, hb_new, hb))

    h0 = jnp.zeros((N, H), jnp.float32)
    lax.fori_loop(0, T, step, (h0, h0), unroll=True)   # short fixed trip count -> unroll

    # ---- HAN attention epilogue (fused: h never leaves VMEM) -----------------------
    hf3 = hf_ref[...]                                  # (T, N, H)
    hb3 = hb_ref[...]
    hf2d = hf3.reshape(T * N, H)
    hb2d = hb3.reshape(T * N, H)
    aw1 = aw1_ref[...]                                 # (2H, 2H)
    u = jnp.tanh(jnp.dot(hf2d, aw1[0:H, :], preferred_element_type=jnp.float32)
                 + jnp.dot(hb2d, aw1[H:2 * H, :], preferred_element_type=jnp.float32)
                 + ab1_ref[...])
    s = jnp.dot(u, aw2_ref[...],
                preferred_element_type=jnp.float32).reshape(T, N, 2 * H)
    # Positions >= per-sentence max length were trimmed by pad_packed_sequence in the
    # reference -> exclude them; positions in [len, t_eff) keep their (zero-h, bias-only)
    # score, exactly like the unmasked PyTorch attention on zero-padded GRU output.
    s = s + abias_ref[...]                             # (T, N, 1) broadcast
    m = jnp.max(s, axis=0, keepdims=True)
    e = jnp.exp(s - m)
    alphas = e / jnp.sum(e, axis=0, keepdims=True)     # softmax over time, per channel
    pooled_f = jnp.sum(alphas[:, :, 0:H] * hf3, axis=0)        # (N, H)
    pooled_b = jnp.sum(alphas[:, :, H:2 * H] * hb3, axis=0)    # (N, H)

    if classify:
        wlin = wlin_ref[...]                                   # (2H, C)
        logits = (jnp.dot(pooled_f, wlin[0:H, :], preferred_element_type=jnp.float32)
                  + jnp.dot(pooled_b, wlin[H:2 * H, :], preferred_element_type=jnp.float32)
                  + blin_ref[...])
        lm = jnp.max(logits, axis=1, keepdims=True)
        le = jnp.exp(logits - lm)
        out_ref[...] = le / jnp.sum(le, axis=1, keepdims=True)
    else:
        out_ref[:, 0:H] = pooled_f
        out_ref[:, H:2 * H] = pooled_b


def _run_encoder(x_flat, lens, att_bias, gru, att, *, classifier=None):
    """One fused bidir-GRU+attention pallas_call. Everything is VMEM-resident (tiny)."""
    N = lens.shape[0]
    T = x_flat.shape[0] // N
    w_ih, gi_bias, whh_f, whh_b, bhh_n = gru
    H = whh_f.shape[0]

    inputs = [x_flat, lens, att_bias, w_ih, gi_bias, whh_f, whh_b, bhh_n,
              att["w1"], att["b1"], att["w2"]]
    classify = classifier is not None
    if classify:
        inputs += [classifier["w"], classifier["b"]]
        out_dim = classifier["w"].shape[1]
    else:
        out_dim = 2 * H

    kernel = functools.partial(_bigru_attention_kernel, classify=classify)
    return pl.pallas_call(
        kernel,
        out_shape=jax.ShapeDtypeStruct((N, out_dim), jnp.float32),
        in_specs=[_VMEM] * len(inputs),
        out_specs=_VMEM,
        scratch_shapes=[
            pltpu.VMEM((T, N, 3 * H), jnp.float32),   # hoisted gi, forward direction
            pltpu.VMEM((T, N, 3 * H), jnp.float32),   # hoisted gi, backward direction
            pltpu.VMEM((T, N, H), jnp.float32),       # per-step hidden, forward
            pltpu.VMEM((T, N, H), jnp.float32),       # per-step hidden, backward
        ],
    )(*inputs)


# ----------------------------------------------------------------------- param utilities
def _fuse_bigru_params(p_fwd, p_bwd, hidden):
    """Pack both GRU directions for the fused kernel (done once per call in XLA)."""
    H = hidden
    w_ih = jnp.concatenate([p_fwd["w_ih"], p_bwd["w_ih"]], axis=1)   # (Din, 6H)

    def _dir(p):
        b_ih, b_hh = p["b"][0:1, :], p["b"][1:2, :]
        # r/z gates use (b_ih + b_hh) jointly -> fold both into the hoisted projection;
        # the n gate needs b_hh inside r * (h @ W_hh_n + b_hh_n), keep that separate.
        gi_bias = jnp.concatenate([b_ih[:, :2 * H] + b_hh[:, :2 * H],
                                   b_ih[:, 2 * H:]], axis=1)
        return gi_bias, b_hh[:, 2 * H:]

    gf, nf = _dir(p_fwd)
    gb, nb = _dir(p_bwd)
    return (w_ih,
            jnp.concatenate([gf, gb], axis=1),        # (1, 6H)
            p_fwd["w_hh"], p_bwd["w_hh"],             # (H, 3H) each
            jnp.concatenate([nf, nb], axis=1))        # (1, 2H)


def init_params(key, vocab, emb_dim, hw, hs, num_classes):
    keys = list(jax.random.split(key, 32))
    it = iter(keys)

    def u(shape, scale):
        return jax.random.uniform(next(it), shape, jnp.float32, -scale, scale)

    def gru_dir(din, h, scale):
        return dict(
            w_ih=u((din, 3 * h), scale),                                  # W_ih^T
            w_hh=u((h, 3 * h), scale),                                    # W_hh^T
            b=jnp.concatenate([u((1, 3 * h), scale), u((1, 3 * h), scale)], axis=0),
        )

    kw = 1.0 / float(np.sqrt(hw))
    ks = 1.0 / float(np.sqrt(hs))
    params = {}
    params["embedding"] = u((vocab, emb_dim), 1.0)
    params["word_gru_f"] = gru_dir(emb_dim, hw, kw)
    params["word_gru_b"] = gru_dir(emb_dim, hw, kw)
    params["word_att"] = dict(w1=u((2 * hw, 2 * hw), kw), b1=u((1, 2 * hw), kw),
                              w2=u((2 * hw, 2 * hw), kw))
    params["sent_gru_f"] = gru_dir(2 * hw, hs, ks)
    params["sent_gru_b"] = gru_dir(2 * hw, hs, ks)
    params["sent_att"] = dict(w1=u((2 * hs, 2 * hs), ks), b1=u((1, 2 * hs), ks),
                              w2=u((2 * hs, 2 * hs), ks))
    params["linear1"] = dict(w=u((2 * hs, num_classes), ks), b=u((1, num_classes), ks))
    return params


# ------------------------------------------------------------------------------ HAN fwd
@jax.jit
def _han_apply(params, tokens, lens):
    """tokens: (S, B, L) int32; lens: (S, B) int32.  Returns (B, num_classes) probs."""
    S, B, L = tokens.shape
    hw = params["word_gru_f"]["w_hh"].shape[0]
    hs = params["sent_gru_f"]["w_hh"].shape[0]

    # ---------- word level: all sentences of all documents in ONE kernel call -------
    n_raw = S * B
    n_pad = _round_up(n_raw, _SUBLANE)
    tok_tm = jnp.transpose(tokens.reshape(n_raw, L))              # (L, n_raw) time-major ints
    tok_tm = jnp.pad(tok_tm, ((0, 0), (0, n_pad - n_raw)))
    # TODO(synk): embedding gather stays in XLA (a real vocab table does not fit VMEM).
    x_word = jnp.take(params["embedding"], tok_tm.reshape(L * n_pad), axis=0)   # (L*Np, E)

    lens_w = jnp.pad(lens.reshape(n_raw).astype(jnp.int32), (0, n_pad - n_raw))
    lens_w = lens_w.reshape(n_pad, 1)
    # pad_packed_sequence trims each sentence batch to its max length -> attention mask.
    teff = jnp.broadcast_to(jnp.max(lens.astype(jnp.int32), axis=1, keepdims=True), (S, B))
    teff = jnp.pad(teff.reshape(n_raw), (0, n_pad - n_raw))       # padded rows -> fully masked
    att_bias_w = jnp.where(jnp.arange(L)[:, None] < teff[None, :], 0.0, _NEG_INF)
    att_bias_w = att_bias_w[:, :, None].astype(jnp.float32)       # (L, Np, 1)

    word_gru = _fuse_bigru_params(params["word_gru_f"], params["word_gru_b"], hw)
    word_vecs = _run_encoder(x_word, lens_w, att_bias_w, word_gru,
                             params["word_att"])                  # (Np, 2*hw)

    # ---------- sentence level: GRU over sentence vectors + attention + classifier ---
    # TODO(synk): intermediate per-iteration sentence-encoder calls (and
    # return_attention_weights=True) are skipped; only the final call feeds the output.
    sents = word_vecs[:n_raw].reshape(S, B, 2 * hw)               # already sentence-major
    b_pad = _round_up(B, _SUBLANE)
    sents = jnp.pad(sents, ((0, 0), (0, b_pad - B), (0, 0)))      # (S, Bp, 2hw)
    x_sent = sents.reshape(S * b_pad, 2 * hw)
    lens_s = jnp.full((b_pad, 1), S, jnp.int32)                   # every sentence slot valid
    att_bias_s = jnp.zeros((S, b_pad, 1), jnp.float32)

    sent_gru = _fuse_bigru_params(params["sent_gru_f"], params["sent_gru_b"], hs)
    probs = _run_encoder(x_sent, lens_s, att_bias_s, sent_gru, params["sent_att"],
                         classifier=params["linear1"])            # (Bp, C)
    # F.dropout with p=0 is identity.
    return probs[:B]


def han_forward(params, seqs, seq_lens, hid_state_word=None, hid_state_sent=None,
                *, hidden_words=None, hidden_sent=None):
    """seqs: iterable of (B, L) int32 token-id arrays (one per sentence position);
       seq_lens: iterable of length-B arrays.  Returns (B, num_classes) softmax probs."""
    # hid_state_* are ignored: the PyTorch module never feeds them into its GRUs either
    # (GRUs start from zeros).  Hidden sizes are derived from the parameter shapes.
    del hid_state_word, hid_state_sent, hidden_words, hidden_sent
    tokens = jnp.stack([jnp.asarray(s).astype(jnp.int32) for s in seqs], axis=0)      # (S,B,L)
    lens = jnp.stack([jnp.asarray(np.asarray(l)).astype(jnp.int32) for l in seq_lens],
                     axis=0)                                                          # (S,B)
    return _han_apply(params, tokens, lens)


# ------------------------------------------------------------------------------- main
if __name__ == "__main__":
    vocab, emb_dim = 20, 16
    hidden_words, hidden_sent = 16, 16
    num_classes, batch, num_sent, seq_length = 4, 2, 3, 8

    key = jax.random.PRNGKey(0)
    pkey, dkey = jax.random.split(key)
    params = init_params(pkey, vocab, emb_dim, hidden_words, hidden_sent, num_classes)

    seqs = jax.random.randint(dkey, (num_sent, batch, seq_length), 0, vocab, dtype=jnp.int32)
    seq_lens = [np.array([8, 6]), np.array([5, 8]), np.array([7, 7])]

    pred = han_forward(params, list(seqs), seq_lens,
                       hidden_words=hidden_words, hidden_sent=hidden_sent)
    pred = jax.block_until_ready(pred)

    assert pred.shape == (batch, num_classes)
    row_sums = np.asarray(jnp.sum(pred, axis=1))
    assert np.allclose(row_sums, 1.0, atol=1e-5), row_sums
    assert np.all(np.isfinite(np.asarray(pred)))
    print("KERNEL_OK")
</pallas_src>

<mosaic_0001>
module attributes {stable_mosaic.version = 11 : i64} {
  func.func @_bigru_attention_kernel(%arg0: memref<24x32xf32, #tpu.memory_space<vmem>>, %arg1: memref<8x1xi32, #tpu.memory_space<vmem>>, %arg2: memref<3x8x1xf32, #tpu.memory_space<vmem>>, %arg3: memref<32x96xf32, #tpu.memory_space<vmem>>, %arg4: memref<1x96xf32, #tpu.memory_space<vmem>>, %arg5: memref<16x48xf32, #tpu.memory_space<vmem>>, %arg6: memref<16x48xf32, #tpu.memory_space<vmem>>, %arg7: memref<1x32xf32, #tpu.memory_space<vmem>>, %arg8: memref<32x32xf32, #tpu.memory_space<vmem>>, %arg9: memref<1x32xf32, #tpu.memory_space<vmem>>, %arg10: memref<32x32xf32, #tpu.memory_space<vmem>>, %arg11: memref<32x4xf32, #tpu.memory_space<vmem>>, %arg12: memref<1x4xf32, #tpu.memory_space<vmem>>, %arg13: memref<8x4xf32, #tpu.memory_space<vmem>>, %arg14: memref<3x8x48xf32, #tpu.memory_space<vmem>>, %arg15: memref<3x8x48xf32, #tpu.memory_space<vmem>>, %arg16: memref<3x8x16xf32, #tpu.memory_space<vmem>>, %arg17: memref<3x8x16xf32, #tpu.memory_space<vmem>>) attributes {dimension_semantics = [], scalar_prefetch = 0 : i64, scratch_operands = 4 : i64, tpu.core_type = #tpu.core_type<tc>} {
    %c0 = arith.constant 0 : index
    %c0_0 = arith.constant 0 : index
    %0 = vector.load %arg0[%c0, %c0_0] : memref<24x32xf32, #tpu.memory_space<vmem>>, vector<24x32xf32>
    %c0_1 = arith.constant 0 : index
    %c0_2 = arith.constant 0 : index
    %1 = vector.load %arg3[%c0_1, %c0_2] : memref<32x96xf32, #tpu.memory_space<vmem>>, vector<32x96xf32>
    %cst = arith.constant dense<0.000000e+00> : vector<24x96xf32>
    %2 = tpu.matmul %0, %1, %cst {dimension_numbers = #tpu.dot_dimension_numbers<[1], [0], [0], [1], [0, 0, 1, 1], [], []>} : vector<24x32xf32>, vector<32x96xf32>, vector<24x96xf32> -> vector<24x96xf32>
    %c0_3 = arith.constant 0 : index
    %c0_4 = arith.constant 0 : index
    %3 = vector.load %arg4[%c0_3, %c0_4] : memref<1x96xf32, #tpu.memory_space<vmem>>, vector<1x96xf32>
    %4 = vector.broadcast %3 : vector<1x96xf32> to vector<24x96xf32>
    %5 = arith.addf %2, %4 : vector<24x96xf32>
    %6 = vector.extract_strided_slice %5 {offsets = [0, 0], sizes = [24, 48], strides = [1, 1]} : vector<24x96xf32> to vector<24x48xf32>
    %7 = vector.shape_cast %6 : vector<24x48xf32> to vector<3x8x48xf32>
    %c0_5 = arith.constant 0 : index
    %c0_6 = arith.constant 0 : index
    %c0_7 = arith.constant 0 : index
    %8 = vector.load %arg14[%c0_5, %c0_6, %c0_7] : memref<3x8x48xf32, #tpu.memory_space<vmem>>, vector<3x8x48xf32>
    tpu.vector_store %arg14[%c0_5, %c0_6, %c0_7], %7 {strides = array<i32>} : memref<3x8x48xf32, #tpu.memory_space<vmem>>, vector<3x8x48xf32>,
    %9 = vector.extract_strided_slice %5 {offsets = [0, 48], sizes = [24, 48], strides = [1, 1]} : vector<24x96xf32> to vector<24x48xf32>
    %10 = vector.shape_cast %9 : vector<24x48xf32> to vector<3x8x48xf32>
    %c0_8 = arith.constant 0 : index
    %c0_9 = arith.constant 0 : index
    %c0_10 = arith.constant 0 : index
    %11 = vector.load %arg15[%c0_8, %c0_9, %c0_10] : memref<3x8x48xf32, #tpu.memory_space<vmem>>, vector<3x8x48xf32>
    tpu.vector_store %arg15[%c0_8, %c0_9, %c0_10], %10 {strides = array<i32>} : memref<3x8x48xf32, #tpu.memory_space<vmem>>, vector<3x8x48xf32>,
    %c0_11 = arith.constant 0 : index
    %c0_12 = arith.constant 0 : index
    %12 = vector.load %arg1[%c0_11, %c0_12] : memref<8x1xi32, #tpu.memory_space<vmem>>, vector<8x1xi32>
    %c0_13 = arith.constant 0 : index
    %c0_14 = arith.constant 0 : index
    %13 = vector.load %arg7[%c0_13, %c0_14] : memref<1x32xf32, #tpu.memory_space<vmem>>, vector<1x32xf32>
    %c0_15 = arith.constant 0 : index
    %c0_16 = arith.constant 0 : index
    %14 = vector.load %arg5[%c0_15, %c0_16] : memref<16x48xf32, #tpu.memory_space<vmem>>, vector<16x48xf32>
    %c0_17 = arith.constant 0 : index
    %c0_18 = arith.constant 0 : index
    %15 = vector.load %arg6[%c0_17, %c0_18] : memref<16x48xf32, #tpu.memory_space<vmem>>, vector<16x48xf32>
    %cst_19 = arith.constant 0.000000e+00 : f32
    %16 = vector.broadcast %cst_19 : f32 to vector<8x16xf32>
    %c0_i32 = arith.constant 0 : i32
    %c2_i32 = arith.constant 2 : i32
    %17 = arith.subi %c2_i32, %c0_i32 : i32
    %cst_20 = arith.constant dense<0.000000e+00> : vector<8x48xf32>
    %18 = tpu.matmul %16, %14, %cst_20 {dimension_numbers = #tpu.dot_dimension_numbers<[1], [0], [0], [1], [0, 0, 1, 1], [], []>} : vector<8x16xf32>, vector<16x48xf32>, vector<8x48xf32> -> vector<8x48xf32>
    %cst_21 = arith.constant dense<0.000000e+00> : vector<8x48xf32>
    %19 = tpu.matmul %16, %15, %cst_21 {dimension_numbers = #tpu.dot_dimension_numbers<[1], [0], [0], [1], [0, 0, 1, 1], [], []>} : vector<8x16xf32>, vector<16x48xf32>, vector<8x48xf32> -> vector<8x48xf32>
    %20 = arith.index_cast %c0_i32 : i32 to index
    %c0_22 = arith.constant 0 : index
    %c0_23 = arith.constant 0 : index
    %21 = vector.load %arg14[%20, %c0_22, %c0_23] : memref<3x8x48xf32, #tpu.memory_space<vmem>>, vector<1x8x48xf32>
    %22 = vector.shape_cast %21 : vector<1x8x48xf32> to vector<8x48xf32>
    %23 = vector.extract_strided_slice %13 {offsets = [0, 0], sizes = [1, 16], strides = [1, 1]} : vector<1x32xf32> to vector<1x16xf32>
    %24 = vector.extract_strided_slice %22 {offsets = [0, 0], sizes = [8, 16], strides = [1, 1]} : vector<8x48xf32> to vector<8x16xf32>
    %25 = vector.extract_strided_slice %18 {offsets = [0, 0], sizes = [8, 16], strides = [1, 1]} : vector<8x48xf32> to vector<8x16xf32>
    %26 = arith.addf %24, %25 : vector<8x16xf32>
    %27 = arith.negf %26 : vector<8x16xf32>
    %28 = math.exp %27 : vector<8x16xf32>
    %cst_24 = arith.constant 1.000000e+00 : f32
    %29 = vector.broadcast %cst_24 : f32 to vector<8x16xf32>
    %30 = arith.addf %29, %28 : vector<8x16xf32>
    %31 = arith.divf %29, %30 : vector<8x16xf32>
    %32 = vector.extract_strided_slice %22 {offsets = [0, 16], sizes = [8, 16], strides = [1, 1]} : vector<8x48xf32> to vector<8x16xf32>
    %33 = vector.extract_strided_slice %18 {offsets = [0, 16], sizes = [8, 16], strides = [1, 1]} : vector<8x48xf32> to vector<8x16xf32>
    %34 = arith.addf %32, %33 : vector<8x16xf32>
    %35 = arith.negf %34 : vector<8x16xf32>
    %36 = math.exp %35 : vector<8x16xf32>
    %cst_25 = arith.constant 1.000000e+00 : f32
    %37 = vector.broadcast %cst_25 : f32 to vector<8x16xf32>
    %38 = arith.addf %37, %36 : vector<8x16xf32>
    %39 = arith.divf %37, %38 : vector<8x16xf32>
    %40 = vector.extract_strided_slice %22 {offsets = [0, 32], sizes = [8, 16], strides = [1, 1]} : vector<8x48xf32> to vector<8x16xf32>
    %41 = vector.extract_strided_slice %18 {offsets = [0, 32], sizes = [8, 16], strides = [1, 1]} : vector<8x48xf32> to vector<8x16xf32>
    %42 = vector.broadcast %23 : vector<1x16xf32> to vector<8x16xf32>
    %43 = arith.addf %41, %42 : vector<8x16xf32>
    %44 = arith.mulf %31, %43 : vector<8x16xf32>
    %45 = arith.addf %40, %44 : vector<8x16xf32>
    %46 = math.tanh %45 : vector<8x16xf32>
    %cst_26 = arith.constant 1.000000e+00 : f32
    %47 = vector.broadcast %cst_26 : f32 to vector<8x16xf32>
    %48 = arith.subf %47, %39 : vector<8x16xf32>
    %49 = arith.mulf %48, %46 : vector<8x16xf32>
    %50 = arith.mulf %39, %16 : vector<8x16xf32>
    %51 = arith.addf %49, %50 : vector<8x16xf32>
    %52 = arith.index_cast %17 : i32 to index
    %c0_27 = arith.constant 0 : index
    %c0_28 = arith.constant 0 : index
    %53 = vector.load %arg15[%52, %c0_27, %c0_28] : memref<3x8x48xf32, #tpu.memory_space<vmem>>, vector<1x8x48xf32>
    %54 = vector.shape_cast %53 : vector<1x8x48xf32> to vector<8x48xf32>
    %55 = vector.extract_strided_slice %13 {offsets = [0, 16], sizes = [1, 16], strides = [1, 1]} : vector<1x32xf32> to vector<1x16xf32>
    %56 = vector.extract_strided_slice %54 {offsets = [0, 0], sizes = [8, 16], strides = [1, 1]} : vector<8x48xf32> to vector<8x16xf32>
    %57 = vector.extract_strided_slice %19 {offsets = [0, 0], sizes = [8, 16], strides = [1, 1]} : vector<8x48xf32> to vector<8x16xf32>
    %58 = arith.addf %56, %57 : vector<8x16xf32>
    %59 = arith.negf %58 : vector<8x16xf32>
    %60 = math.exp %59 : vector<8x16xf32>
    %cst_29 = arith.constant 1.000000e+00 : f32
    %61 = vector.broadcast %cst_29 : f32 to vector<8x16xf32>
    %62 = arith.addf %61, %60 : vector<8x16xf32>
    %63 = arith.divf %61, %62 : vector<8x16xf32>
    %64 = vector.extract_strided_slice %54 {offsets = [0, 16], sizes = [8, 16], strides = [1, 1]} : vector<8x48xf32> to vector<8x16xf32>
    %65 = vector.extract_strided_slice %19 {offsets = [0, 16], sizes = [8, 16], strides = [1, 1]} : vector<8x48xf32> to vector<8x16xf32>
    %66 = arith.addf %64, %65 : vector<8x16xf32>
    %67 = arith.negf %66 : vector<8x16xf32>
    %68 = math.exp %67 : vector<8x16xf32>
    %cst_30 = arith.constant 1.000000e+00 : f32
    %69 = vector.broadcast %cst_30 : f32 to vector<8x16xf32>
    %70 = arith.addf %69, %68 : vector<8x16xf32>
    %71 = arith.divf %69, %70 : vector<8x16xf32>
    %72 = vector.extract_strided_slice %54 {offsets = [0, 32], sizes = [8, 16], strides = [1, 1]} : vector<8x48xf32> to vector<8x16xf32>
    %73 = vector.extract_strided_slice %19 {offsets = [0, 32], sizes = [8, 16], strides = [1, 1]} : vector<8x48xf32> to vector<8x16xf32>
    %74 = vector.broadcast %55 : vector<1x16xf32> to vector<8x16xf32>
    %75 = arith.addf %73, %74 : vector<8x16xf32>
    %76 = arith.mulf %63, %75 : vector<8x16xf32>
    %77 = arith.addf %72, %76 : vector<8x16xf32>
    %78 = math.tanh %77 : vector<8x16xf32>
    %cst_31 = arith.constant 1.000000e+00 : f32
    %79 = vector.broadcast %cst_31 : f32 to vector<8x16xf32>
    %80 = arith.subf %79, %71 : vector<8x16xf32>
    %81 = arith.mulf %80, %78 : vector<8x16xf32>
    %82 = arith.mulf %71, %16 : vector<8x16xf32>
    %83 = arith.addf %81, %82 : vector<8x16xf32>
    %84 = vector.broadcast %c0_i32 : i32 to vector<8x1xi32>
    %85 = arith.cmpi sgt, %12, %84 : vector<8x1xi32>
    %86 = vector.broadcast %17 : i32 to vector<8x1xi32>
    %87 = arith.cmpi sgt, %12, %86 : vector<8x1xi32>
    %cst_32 = arith.constant 0.000000e+00 : f32
    %88 = vector.shape_cast %85 : vector<8x1xi1> to vector<8x1xi1>
    %89 = vector.broadcast %88 : vector<8x1xi1> to vector<8x16xi1>
    %90 = vector.broadcast %cst_32 : f32 to vector<8x16xf32>
    %91 = arith.select %89, %51, %90 : vector<8x16xi1>, vector<8x16xf32>
    %92 = arith.index_cast %c0_i32 : i32 to index
    %c0_33 = arith.constant 0 : index
    %c0_34 = arith.constant 0 : index
    %93 = vector.load %arg16[%92, %c0_33, %c0_34] : memref<3x8x16xf32, #tpu.memory_space<vmem>>, vector<1x8x16xf32>
    %94 = vector.shape_cast %93 : vector<1x8x16xf32> to vector<8x16xf32>
    %95 = vector.shape_cast %91 : vector<8x16xf32> to vector<1x8x16xf32>
    tpu.vector_store %arg16[%92, %c0_33, %c0_34], %95 {strides = array<i32>} : memref<3x8x16xf32, #tpu.memory_space<vmem>>, vector<1x8x16xf32>,
    %cst_35 = arith.constant 0.000000e+00 : f32
    %96 = vector.shape_cast %87 : vector<8x1xi1> to vector<8x1xi1>
    %97 = vector.broadcast %96 : vector<8x1xi1> to vector<8x16xi1>
    %98 = vector.broadcast %cst_35 : f32 to vector<8x16xf32>
    %99 = arith.select %97, %83, %98 : vector<8x16xi1>, vector<8x16xf32>
    %100 = arith.index_cast %17 : i32 to index
    %c0_36 = arith.constant 0 : index
    %c0_37 = arith.constant 0 : index
    %101 = vector.load %arg17[%100, %c0_36, %c0_37] : memref<3x8x16xf32, #tpu.memory_space<vmem>>, vector<1x8x16xf32>
    %102 = vector.shape_cast %101 : vector<1x8x16xf32> to vector<8x16xf32>
    %103 = vector.shape_cast %99 : vector<8x16xf32> to vector<1x8x16xf32>
    tpu.vector_store %arg17[%100, %c0_36, %c0_37], %103 {strides = array<i32>} : memref<3x8x16xf32, #tpu.memory_space<vmem>>, vector<1x8x16xf32>,
    %104 = vector.shape_cast %85 : vector<8x1xi1> to vector<8x1xi1>
    %105 = vector.broadcast %104 : vector<8x1xi1> to vector<8x16xi1>
    %106 = arith.select %105, %51, %16 : vector<8x16xi1>, vector<8x16xf32>
    %107 = vector.shape_cast %87 : vector<8x1xi1> to vector<8x1xi1>
    %108 = vector.broadcast %107 : vector<8x1xi1> to vector<8x16xi1>
    %109 = arith.select %108, %83, %16 : vector<8x16xi1>, vector<8x16xf32>
    %c1_i32 = arith.constant 1 : i32
    %c2_i32_38 = arith.constant 2 : i32
    %110 = arith.subi %c2_i32_38, %c1_i32 : i32
    %cst_39 = arith.constant dense<0.000000e+00> : vector<8x48xf32>
    %111 = tpu.matmul %106, %14, %cst_39 {dimension_numbers = #tpu.dot_dimension_numbers<[1], [0], [0], [1], [0, 0, 1, 1], [], []>} : vector<8x16xf32>, vector<16x48xf32>, vector<8x48xf32> -> vector<8x48xf32>
    %cst_40 = arith.constant dense<0.000000e+00> : vector<8x48xf32>
    %112 = tpu.matmul %109, %15, %cst_40 {dimension_numbers = #tpu.dot_dimension_numbers<[1], [0], [0], [1], [0, 0, 1, 1], [], []>} : vector<8x16xf32>, vector<16x48xf32>, vector<8x48xf32> -> vector<8x48xf32>
    %113 = arith.index_cast %c1_i32 : i32 to index
    %c0_41 = arith.constant 0 : index
    %c0_42 = arith.constant 0 : index
    %114 = vector.load %arg14[%113, %c0_41, %c0_42] : memref<3x8x48xf32, #tpu.memory_space<vmem>>, vector<1x8x48xf32>
    %115 = vector.shape_cast %114 : vector<1x8x48xf32> to vector<8x48xf32>
    %116 = vector.extract_strided_slice %13 {offsets = [0, 0], sizes = [1, 16], strides = [1, 1]} : vector<1x32xf32> to vector<1x16xf32>
    %117 = vector.extract_strided_slice %115 {offsets = [0, 0], sizes = [8, 16], strides = [1, 1]} : vector<8x48xf32> to vector<8x16xf32>
    %118 = vector.extract_strided_slice %111 {offsets = [0, 0], sizes = [8, 16], strides = [1, 1]} : vector<8x48xf32> to vector<8x16xf32>
    %119 = arith.addf %117, %118 : vector<8x16xf32>
    %120 = arith.negf %119 : vector<8x16xf32>
    %121 = math.exp %120 : vector<8x16xf32>
    %cst_43 = arith.constant 1.000000e+00 : f32
    %122 = vector.broadcast %cst_43 : f32 to vector<8x16xf32>
    %123 = arith.addf %122, %121 : vector<8x16xf32>
    %124 = arith.divf %122, %123 : vector<8x16xf32>
    %125 = vector.extract_strided_slice %115 {offsets = [0, 16], sizes = [8, 16], strides = [1, 1]} : vector<8x48xf32> to vector<8x16xf32>
    %126 = vector.extract_strided_slice %111 {offsets = [0, 16], sizes = [8, 16], strides = [1, 1]} : vector<8x48xf32> to vector<8x16xf32>
    %127 = arith.addf %125, %126 : vector<8x16xf32>
    %128 = arith.negf %127 : vector<8x16xf32>
    %129 = math.exp %128 : vector<8x16xf32>
    %cst_44 = arith.constant 1.000000e+00 : f32
    %130 = vector.broadcast %cst_44 : f32 to vector<8x16xf32>
    %131 = arith.addf %130, %129 : vector<8x16xf32>
    %132 = arith.divf %130, %131 : vector<8x16xf32>
    %133 = vector.extract_strided_slice %115 {offsets = [0, 32], sizes = [8, 16], strides = [1, 1]} : vector<8x48xf32> to vector<8x16xf32>
    %134 = vector.extract_strided_slice %111 {offsets = [0, 32], sizes = [8, 16], strides = [1, 1]} : vector<8x48xf32> to vector<8x16xf32>
    %135 = vector.broadcast %116 : vector<1x16xf32> to vector<8x16xf32>
    %136 = arith.addf %134, %135 : vector<8x16xf32>
    %137 = arith.mulf %124, %136 : vector<8x16xf32>
    %138 = arith.addf %133, %137 : vector<8x16xf32>
    %139 = math.tanh %138 : vector<8x16xf32>
    %cst_45 = arith.constant 1.000000e+00 : f32
    %140 = vector.broadcast %cst_45 : f32 to vector<8x16xf32>
    %141 = arith.subf %140, %132 : vector<8x16xf32>
    %142 = arith.mulf %141, %139 : vector<8x16xf32>
    %143 = arith.mulf %132, %106 : vector<8x16xf32>
    %144 = arith.addf %142, %143 : vector<8x16xf32>
    %145 = arith.index_cast %110 : i32 to index
    %c0_46 = arith.constant 0 : index
    %c0_47 = arith.constant 0 : index
    %146 = vector.load %arg15[%145, %c0_46, %c0_47] : memref<3x8x48xf32, #tpu.memory_space<vmem>>, vector<1x8x48xf32>
    %147 = vector.shape_cast %146 : vector<1x8x48xf32> to vector<8x48xf32>
    %148 = vector.extract_strided_slice %13 {offsets = [0, 16], sizes = [1, 16], strides = [1, 1]} : vector<1x32xf32> to vector<1x16xf32>
    %149 = vector.extract_strided_slice %147 {offsets = [0, 0], sizes = [8, 16], strides = [1, 1]} : vector<8x48xf32> to vector<8x16xf32>
    %150 = vector.extract_strided_slice %112 {offsets = [0, 0], sizes = [8, 16], strides = [1, 1]} : vector<8x48xf32> to vector<8x16xf32>
    %151 = arith.addf %149, %150 : vector<8x16xf32>
    %152 = arith.negf %151 : vector<8x16xf32>
    %153 = math.exp %152 : vector<8x16xf32>
    %cst_48 = arith.constant 1.000000e+00 : f32
    %154 = vector.broadcast %cst_48 : f32 to vector<8x16xf32>
    %155 = arith.addf %154, %153 : vector<8x16xf32>
    %156 = arith.divf %154, %155 : vector<8x16xf32>
    %157 = vector.extract_strided_slice %147 {offsets = [0, 16], sizes = [8, 16], strides = [1, 1]} : vector<8x48xf32> to vector<8x16xf32>
    %158 = vector.extract_strided_slice %112 {offsets = [0, 16], sizes = [8, 16], strides = [1, 1]} : vector<8x48xf32> to vector<8x16xf32>
    %159 = arith.addf %157, %158 : vector<8x16xf32>
    %160 = arith.negf %159 : vector<8x16xf32>
    %161 = math.exp %160 : vector<8x16xf32>
    %cst_49 = arith.constant 1.000000e+00 : f32
    %162 = vector.broadcast %cst_49 : f32 to vector<8x16xf32>
    %163 = arith.addf %162, %161 : vector<8x16xf32>
    %164 = arith.divf %162, %163 : vector<8x16xf32>
    %165 = vector.extract_strided_slice %147 {offsets = [0, 32], sizes = [8, 16], strides = [1, 1]} : vector<8x48xf32> to vector<8x16xf32>
    %166 = vector.extract_strided_slice %112 {offsets = [0, 32], sizes = [8, 16], strides = [1, 1]} : vector<8x48xf32> to vector<8x16xf32>
    %167 = vector.broadcast %148 : vector<1x16xf32> to vector<8x16xf32>
    %168 = arith.addf %166, %167 : vector<8x16xf32>
    %169 = arith.mulf %156, %168 : vector<8x16xf32>
    %170 = arith.addf %165, %169 : vector<8x16xf32>
    %171 = math.tanh %170 : vector<8x16xf32>
    %cst_50 = arith.constant 1.000000e+00 : f32
    %172 = vector.broadcast %cst_50 : f32 to vector<8x16xf32>
    %173 = arith.subf %172, %164 : vector<8x16xf32>
    %174 = arith.mulf %173, %171 : vector<8x16xf32>
    %175 = arith.mulf %164, %109 : vector<8x16xf32>
    %176 = arith.addf %174, %175 : vector<8x16xf32>
    %177 = vector.broadcast %c1_i32 : i32 to vector<8x1xi32>
    %178 = arith.cmpi sgt, %12, %177 : vector<8x1xi32>
    %179 = vector.broadcast %110 : i32 to vector<8x1xi32>
    %180 = arith.cmpi sgt, %12, %179 : vector<8x1xi32>
    %cst_51 = arith.constant 0.000000e+00 : f32
    %181 = vector.shape_cast %178 : vector<8x1xi1> to vector<8x1xi1>
    %182 = vector.broadcast %181 : vector<8x1xi1> to vector<8x16xi1>
    %183 = vector.broadcast %cst_51 : f32 to vector<8x16xf32>
    %184 = arith.select %182, %144, %183 : vector<8x16xi1>, vector<8x16xf32>
    %185 = arith.index_cast %c1_i32 : i32 to index
    %c0_52 = arith.constant 0 : index
    %c0_53 = arith.constant 0 : index
    %186 = vector.load %arg16[%185, %c0_52, %c0_53] : memref<3x8x16xf32, #tpu.memory_space<vmem>>, vector<1x8x16xf32>
    %187 = vector.shape_cast %186 : vector<1x8x16xf32> to vector<8x16xf32>
    %188 = vector.shape_cast %184 : vector<8x16xf32> to vector<1x8x16xf32>
    tpu.vector_store %arg16[%185, %c0_52, %c0_53], %188 {strides = array<i32>} : memref<3x8x16xf32, #tpu.memory_space<vmem>>, vector<1x8x16xf32>,
    %cst_54 = arith.constant 0.000000e+00 : f32
    %189 = vector.shape_cast %180 : vector<8x1xi1> to vector<8x1xi1>
    %190 = vector.broadcast %189 : vector<8x1xi1> to vector<8x16xi1>
    %191 = vector.broadcast %cst_54 : f32 to vector<8x16xf32>
    %192 = arith.select %190, %176, %191 : vector<8x16xi1>, vector<8x16xf32>
    %193 = arith.index_cast %110 : i32 to index
    %c0_55 = arith.constant 0 : index
    %c0_56 = arith.constant 0 : index
    %194 = vector.load %arg17[%193, %c0_55, %c0_56] : memref<3x8x16xf32, #tpu.memory_space<vmem>>, vector<1x8x16xf32>
    %195 = vector.shape_cast %194 : vector<1x8x16xf32> to vector<8x16xf32>
    %196 = vector.shape_cast %192 : vector<8x16xf32> to vector<1x8x16xf32>
    tpu.vector_store %arg17[%193, %c0_55, %c0_56], %196 {strides = array<i32>} : memref<3x8x16xf32, #tpu.memory_space<vmem>>, vector<1x8x16xf32>,
    %197 = vector.shape_cast %178 : vector<8x1xi1> to vector<8x1xi1>
    %198 = vector.broadcast %197 : vector<8x1xi1> to vector<8x16xi1>
    %199 = arith.select %198, %144, %106 : vector<8x16xi1>, vector<8x16xf32>
    %200 = vector.shape_cast %180 : vector<8x1xi1> to vector<8x1xi1>
    %201 = vector.broadcast %200 : vector<8x1xi1> to vector<8x16xi1>
    %202 = arith.select %201, %176, %109 : vector<8x16xi1>, vector<8x16xf32>
    %c2_i32_57 = arith.constant 2 : i32
    %c2_i32_58 = arith.constant 2 : i32
    %203 = arith.subi %c2_i32_58, %c2_i32_57 : i32
    %cst_59 = arith.constant dense<0.000000e+00> : vector<8x48xf32>
    %204 = tpu.matmul %199, %14, %cst_59 {dimension_numbers = #tpu.dot_dimension_numbers<[1], [0], [0], [1], [0, 0, 1, 1], [], []>} : vector<8x16xf32>, vector<16x48xf32>, vector<8x48xf32> -> vector<8x48xf32>
    %cst_60 = arith.constant dense<0.000000e+00> : vector<8x48xf32>
    %205 = tpu.matmul %202, %15, %cst_60 {dimension_numbers = #tpu.dot_dimension_numbers<[1], [0], [0], [1], [0, 0, 1, 1], [], []>} : vector<8x16xf32>, vector<16x48xf32>, vector<8x48xf32> -> vector<8x48xf32>
    %206 = arith.index_cast %c2_i32_57 : i32 to index
    %c0_61 = arith.constant 0 : index
    %c0_62 = arith.constant 0 : index
    %207 = vector.load %arg14[%206, %c0_61, %c0_62] : memref<3x8x48xf32, #tpu.memory_space<vmem>>, vector<1x8x48xf32>
    %208 = vector.shape_cast %207 : vector<1x8x48xf32> to vector<8x48xf32>
    %209 = vector.extract_strided_slice %13 {offsets = [0, 0], sizes = [1, 16], strides = [1, 1]} : vector<1x32xf32> to vector<1x16xf32>
    %210 = vector.extract_strided_slice %208 {offsets = [0, 0], sizes = [8, 16], strides = [1, 1]} : vector<8x48xf32> to vector<8x16xf32>
    %211 = vector.extract_strided_slice %204 {offsets = [0, 0], sizes = [8, 16], strides = [1, 1]} : vector<8x48xf32> to vector<8x16xf32>
    %212 = arith.addf %210, %211 : vector<8x16xf32>
    %213 = arith.negf %212 : vector<8x16xf32>
    %214 = math.exp %213 : vector<8x16xf32>
    %cst_63 = arith.constant 1.000000e+00 : f32
    %215 = vector.broadcast %cst_63 : f32 to vector<8x16xf32>
    %216 = arith.addf %215, %214 : vector<8x16xf32>
    %217 = arith.divf %215, %216 : vector<8x16xf32>
    %218 = vector.extract_strided_slice %208 {offsets = [0, 16], sizes = [8, 16], strides = [1, 1]} : vector<8x48xf32> to vector<8x16xf32>
    %219 = vector.extract_strided_slice %204 {offsets = [0, 16], sizes = [8, 16], strides = [1, 1]} : vector<8x48xf32> to vector<8x16xf32>
    %220 = arith.addf %218, %219 : vector<8x16xf32>
    %221 = arith.negf %220 : vector<8x16xf32>
    %222 = math.exp %221 : vector<8x16xf32>
    %cst_64 = arith.constant 1.000000e+00 : f32
    %223 = vector.broadcast %cst_64 : f32 to vector<8x16xf32>
    %224 = arith.addf %223, %222 : vector<8x16xf32>
    %225 = arith.divf %223, %224 : vector<8x16xf32>
    %226 = vector.extract_strided_slice %208 {offsets = [0, 32], sizes = [8, 16], strides = [1, 1]} : vector<8x48xf32> to vector<8x16xf32>
    %227 = vector.extract_strided_slice %204 {offsets = [0, 32], sizes = [8, 16], strides = [1, 1]} : vector<8x48xf32> to vector<8x16xf32>
    %228 = vector.broadcast %209 : vector<1x16xf32> to vector<8x16xf32>
    %229 = arith.addf %227, %228 : vector<8x16xf32>
    %230 = arith.mulf %217, %229 : vector<8x16xf32>
    %231 = arith.addf %226, %230 : vector<8x16xf32>
    %232 = math.tanh %231 : vector<8x16xf32>
    %cst_65 = arith.constant 1.000000e+00 : f32
    %233 = vector.broadcast %cst_65 : f32 to vector<8x16xf32>
    %234 = arith.subf %233, %225 : vector<8x16xf32>
    %235 = arith.mulf %234, %232 : vector<8x16xf32>
    %236 = arith.mulf %225, %199 : vector<8x16xf32>
    %237 = arith.addf %235, %236 : vector<8x16xf32>
    %238 = arith.index_cast %203 : i32 to index
    %c0_66 = arith.constant 0 : index
    %c0_67 = arith.constant 0 : index
    %239 = vector.load %arg15[%238, %c0_66, %c0_67] : memref<3x8x48xf32, #tpu.memory_space<vmem>>, vector<1x8x48xf32>
    %240 = vector.shape_cast %239 : vector<1x8x48xf32> to vector<8x48xf32>
    %241 = vector.extract_strided_slice %13 {offsets = [0, 16], sizes = [1, 16], strides = [1, 1]} : vector<1x32xf32> to vector<1x16xf32>
    %242 = vector.extract_strided_slice %240 {offsets = [0, 0], sizes = [8, 16], strides = [1, 1]} : vector<8x48xf32> to vector<8x16xf32>
    %243 = vector.extract_strided_slice %205 {offsets = [0, 0], sizes = [8, 16], strides = [1, 1]} : vector<8x48xf32> to vector<8x16xf32>
    %244 = arith.addf %242, %243 : vector<8x16xf32>
    %245 = arith.negf %244 : vector<8x16xf32>
    %246 = math.exp %245 : vector<8x16xf32>
    %cst_68 = arith.constant 1.000000e+00 : f32
    %247 = vector.broadcast %cst_68 : f32 to vector<8x16xf32>
    %248 = arith.addf %247, %246 : vector<8x16xf32>
    %249 = arith.divf %247, %248 : vector<8x16xf32>
    %250 = vector.extract_strided_slice %240 {offsets = [0, 16], sizes = [8, 16], strides = [1, 1]} : vector<8x48xf32> to vector<8x16xf32>
    %251 = vector.extract_strided_slice %205 {offsets = [0, 16], sizes = [8, 16], strides = [1, 1]} : vector<8x48xf32> to vector<8x16xf32>
    %252 = arith.addf %250, %251 : vector<8x16xf32>
    %253 = arith.negf %252 : vector<8x16xf32>
    %254 = math.exp %253 : vector<8x16xf32>
    %cst_69 = arith.constant 1.000000e+00 : f32
    %255 = vector.broadcast %cst_69 : f32 to vector<8x16xf32>
    %256 = arith.addf %255, %254 : vector<8x16xf32>
    %257 = arith.divf %255, %256 : vector<8x16xf32>
    %258 = vector.extract_strided_slice %240 {offsets = [0, 32], sizes = [8, 16], strides = [1, 1]} : vector<8x48xf32> to vector<8x16xf32>
    %259 = vector.extract_strided_slice %205 {offsets = [0, 32], sizes = [8, 16], strides = [1, 1]} : vector<8x48xf32> to vector<8x16xf32>
    %260 = vector.broadcast %241 : vector<1x16xf32> to vector<8x16xf32>
    %261 = arith.addf %259, %260 : vector<8x16xf32>
    %262 = arith.mulf %249, %261 : vector<8x16xf32>
    %263 = arith.addf %258, %262 : vector<8x16xf32>
    %264 = math.tanh %263 : vector<8x16xf32>
    %cst_70 = arith.constant 1.000000e+00 : f32
    %265 = vector.broadcast %cst_70 : f32 to vector<8x16xf32>
    %266 = arith.subf %265, %257 : vector<8x16xf32>
    %267 = arith.mulf %266, %264 : vector<8x16xf32>
    %268 = arith.mulf %257, %202 : vector<8x16xf32>
    %269 = arith.addf %267, %268 : vector<8x16xf32>
    %270 = vector.broadcast %c2_i32_57 : i32 to vector<8x1xi32>
    %271 = arith.cmpi sgt, %12, %270 : vector<8x1xi32>
    %272 = vector.broadcast %203 : i32 to vector<8x1xi32>
    %273 = arith.cmpi sgt, %12, %272 : vector<8x1xi32>
    %cst_71 = arith.constant 0.000000e+00 : f32
    %274 = vector.shape_cast %271 : vector<8x1xi1> to vector<8x1xi1>
    %275 = vector.broadcast %274 : vector<8x1xi1> to vector<8x16xi1>
    %276 = vector.broadcast %cst_71 : f32 to vector<8x16xf32>
    %277 = arith.select %275, %237, %276 : vector<8x16xi1>, vector<8x16xf32>
    %278 = arith.index_cast %c2_i32_57 : i32 to index
    %c0_72 = arith.constant 0 : index
    %c0_73 = arith.constant 0 : index
    %279 = vector.load %arg16[%278, %c0_72, %c0_73] : memref<3x8x16xf32, #tpu.memory_space<vmem>>, vector<1x8x16xf32>
    %280 = vector.shape_cast %279 : vector<1x8x16xf32> to vector<8x16xf32>
    %281 = vector.shape_cast %277 : vector<8x16xf32> to vector<1x8x16xf32>
    tpu.vector_store %arg16[%278, %c0_72, %c0_73], %281 {strides = array<i32>} : memref<3x8x16xf32, #tpu.memory_space<vmem>>, vector<1x8x16xf32>,
    %cst_74 = arith.constant 0.000000e+00 : f32
    %282 = vector.shape_cast %273 : vector<8x1xi1> to vector<8x1xi1>
    %283 = vector.broadcast %282 : vector<8x1xi1> to vector<8x16xi1>
    %284 = vector.broadcast %cst_74 : f32 to vector<8x16xf32>
    %285 = arith.select %283, %269, %284 : vector<8x16xi1>, vector<8x16xf32>
    %286 = arith.index_cast %203 : i32 to index
    %c0_75 = arith.constant 0 : index
    %c0_76 = arith.constant 0 : index
    %287 = vector.load %arg17[%286, %c0_75, %c0_76] : memref<3x8x16xf32, #tpu.memory_space<vmem>>, vector<1x8x16xf32>
    %288 = vector.shape_cast %287 : vector<1x8x16xf32> to vector<8x16xf32>
    %289 = vector.shape_cast %285 : vector<8x16xf32> to vector<1x8x16xf32>
    tpu.vector_store %arg17[%286, %c0_75, %c0_76], %289 {strides = array<i32>} : memref<3x8x16xf32, #tpu.memory_space<vmem>>, vector<1x8x16xf32>,
    %290 = vector.shape_cast %271 : vector<8x1xi1> to vector<8x1xi1>
    %291 = vector.broadcast %290 : vector<8x1xi1> to vector<8x16xi1>
    %292 = arith.select %291, %237, %199 : vector<8x16xi1>, vector<8x16xf32>
    %293 = vector.shape_cast %273 : vector<8x1xi1> to vector<8x1xi1>
    %294 = vector.broadcast %293 : vector<8x1xi1> to vector<8x16xi1>
    %295 = arith.select %294, %269, %202 : vector<8x16xi1>, vector<8x16xf32>
    %c3_i32 = arith.constant 3 : i32
    %c0_77 = arith.constant 0 : index
    %c0_78 = arith.constant 0 : index
    %c0_79 = arith.constant 0 : index
    %296 = vector.load %arg16[%c0_77, %c0_78, %c0_79] : memref<3x8x16xf32, #tpu.memory_space<vmem>>, vector<3x8x16xf32>
    %c0_80 = arith.constant 0 : index
    %c0_81 = arith.constant 0 : index
    %c0_82 = arith.constant 0 : index
    %297 = vector.load %arg17[%c0_80, %c0_81, %c0_82] : memref<3x8x16xf32, #tpu.memory_space<vmem>>, vector<3x8x16xf32>
    %298 = vector.shape_cast %296 : vector<3x8x16xf32> to vector<24x16xf32>
    %299 = vector.shape_cast %297 : vector<3x8x16xf32> to vector<24x16xf32>
    %c0_83 = arith.constant 0 : index
    %c0_84 = arith.constant 0 : index
    %300 = vector.load %arg8[%c0_83, %c0_84] : memref<32x32xf32, #tpu.memory_space<vmem>>, vector<32x32xf32>
    %301 = vector.extract_strided_slice %300 {offsets = [0, 0], sizes = [16, 32], strides = [1, 1]} : vector<32x32xf32> to vector<16x32xf32>
    %cst_85 = arith.constant dense<0.000000e+00> : vector<24x32xf32>
    %302 = tpu.matmul %298, %301, %cst_85 {dimension_numbers = #tpu.dot_dimension_numbers<[1], [0], [0], [1], [0, 0, 1, 1], [], []>} : vector<24x16xf32>, vector<16x32xf32>, vector<24x32xf32> -> vector<24x32xf32>
    %303 = vector.extract_strided_slice %300 {offsets = [16, 0], sizes = [16, 32], strides = [1, 1]} : vector<32x32xf32> to vector<16x32xf32>
    %cst_86 = arith.constant dense<0.000000e+00> : vector<24x32xf32>
    %304 = tpu.matmul %299, %303, %cst_86 {dimension_numbers = #tpu.dot_dimension_numbers<[1], [0], [0], [1], [0, 0, 1, 1], [], []>} : vector<24x16xf32>, vector<16x32xf32>, vector<24x32xf32> -> vector<24x32xf32>
    %305 = arith.addf %302, %304 : vector<24x32xf32>
    %c0_87 = arith.constant 0 : index
    %c0_88 = arith.constant 0 : index
    %306 = vector.load %arg9[%c0_87, %c0_88] : memref<1x32xf32, #tpu.memory_space<vmem>>, vector<1x32xf32>
    %307 = vector.broadcast %306 : vector<1x32xf32> to vector<24x32xf32>
    %308 = arith.addf %305, %307 : vector<24x32xf32>
    %309 = math.tanh %308 : vector<24x32xf32>
    %c0_89 = arith.constant 0 : index
    %c0_90 = arith.constant 0 : index
    %310 = vector.load %arg10[%c0_89, %c0_90] : memref<32x32xf32, #tpu.memory_space<vmem>>, vector<32x32xf32>
    %cst_91 = arith.constant dense<0.000000e+00> : vector<24x32xf32>
    %311 = tpu.matmul %309, %310, %cst_91 {dimension_numbers = #tpu.dot_dimension_numbers<[1], [0], [0], [1], [0, 0, 1, 1], [], []>} : vector<24x32xf32>, vector<32x32xf32>, vector<24x32xf32> -> vector<24x32xf32>
    %312 = vector.shape_cast %311 : vector<24x32xf32> to vector<3x8x32xf32>
    %c0_92 = arith.constant 0 : index
    %c0_93 = arith.constant 0 : index
    %c0_94 = arith.constant 0 : index
    %313 = vector.load %arg2[%c0_92, %c0_93, %c0_94] : memref<3x8x1xf32, #tpu.memory_space<vmem>>, vector<3x8x1xf32>
    %314 = vector.broadcast %313 : vector<3x8x1xf32> to vector<3x8x32xf32>
    %315 = arith.addf %312, %314 : vector<3x8x32xf32>
    %cst_95 = arith.constant dense<0xFF800000> : vector<8x32xf32>
    %316 = vector.multi_reduction <maximumf>, %315, %cst_95 [0] : vector<3x8x32xf32> to vector<8x32xf32>
    %317 = vector.shape_cast %316 : vector<8x32xf32> to vector<1x8x32xf32>
    %318 = vector.broadcast %317 : vector<1x8x32xf32> to vector<3x8x32xf32>
    %319 = arith.subf %315, %318 : vector<3x8x32xf32>
    %320 = math.exp %319 : vector<3x8x32xf32>
    %cst_96 = arith.constant dense<0.000000e+00> : vector<8x32xf32>
    %321 = vector.multi_reduction <add>, %320, %cst_96 [0] : vector<3x8x32xf32> to vector<8x32xf32>
    %322 = vector.shape_cast %321 : vector<8x32xf32> to vector<1x8x32xf32>
    %323 = vector.broadcast %322 : vector<1x8x32xf32> to vector<3x8x32xf32>
    %324 = arith.divf %320, %323 : vector<3x8x32xf32>
    %325 = vector.extract_strided_slice %324 {offsets = [0, 0, 0], sizes = [3, 8, 16], strides = [1, 1, 1]} : vector<3x8x32xf32> to vector<3x8x16xf32>
    %326 = arith.mulf %325, %296 : vector<3x8x16xf32>
    %cst_97 = arith.constant dense<0.000000e+00> : vector<8x16xf32>
    %327 = vector.multi_reduction <add>, %326, %cst_97 [0] : vector<3x8x16xf32> to vector<8x16xf32>
    %328 = vector.extract_strided_slice %324 {offsets = [0, 0, 16], sizes = [3, 8, 16], strides = [1, 1, 1]} : vector<3x8x32xf32> to vector<3x8x16xf32>
    %329 = arith.mulf %328, %297 : vector<3x8x16xf32>
    %cst_98 = arith.constant dense<0.000000e+00> : vector<8x16xf32>
    %330 = vector.multi_reduction <add>, %329, %cst_98 [0] : vector<3x8x16xf32> to vector<8x16xf32>
    %c0_99 = arith.constant 0 : index
    %c0_100 = arith.constant 0 : index
    %331 = vector.load %arg11[%c0_99, %c0_100] : memref<32x4xf32, #tpu.memory_space<vmem>>, vector<32x4xf32>
    %332 = vector.extract_strided_slice %331 {offsets = [0, 0], sizes = [16, 4], strides = [1, 1]} : vector<32x4xf32> to vector<16x4xf32>
    %cst_101 = arith.constant dense<0.000000e+00> : vector<8x4xf32>
    %333 = tpu.matmul %327, %332, %cst_101 {dimension_numbers = #tpu.dot_dimension_numbers<[1], [0], [0], [1], [0, 0, 1, 1], [], []>} : vector<8x16xf32>, vector<16x4xf32>, vector<8x4xf32> -> vector<8x4xf32>
    %334 = vector.extract_strided_slice %331 {offsets = [16, 0], sizes = [16, 4], strides = [1, 1]} : vector<32x4xf32> to vector<16x4xf32>
    %cst_102 = arith.constant dense<0.000000e+00> : vector<8x4xf32>
    %335 = tpu.matmul %330, %334, %cst_102 {dimension_numbers = #tpu.dot_dimension_numbers<[1], [0], [0], [1], [0, 0, 1, 1], [], []>} : vector<8x16xf32>, vector<16x4xf32>, vector<8x4xf32> -> vector<8x4xf32>
    %336 = arith.addf %333, %335 : vector<8x4xf32>
    %c0_103 = arith.constant 0 : index
    %c0_104 = arith.constant 0 : index
    %337 = vector.load %arg12[%c0_103, %c0_104] : memref<1x4xf32, #tpu.memory_space<vmem>>, vector<1x4xf32>
    %338 = vector.broadcast %337 : vector<1x4xf32> to vector<8x4xf32>
    %339 = arith.addf %336, %338 : vector<8x4xf32>
    %cst_105 = arith.constant dense<0xFF800000> : vector<8xf32>
    %340 = vector.multi_reduction <maximumf>, %339, %cst_105 [1] : vector<8x4xf32> to vector<8xf32>
    %341 = vector.shape_cast %340 : vector<8xf32> to vector<8x1xf32>
    %342 = vector.broadcast %341 : vector<8x1xf32> to vector<8x4xf32>
    %343 = arith.subf %339, %342 : vector<8x4xf32>
    %344 = math.exp %343 : vector<8x4xf32>
    %cst_106 = arith.constant dense<0.000000e+00> : vector<8xf32>
    %345 = vector.multi_reduction <add>, %344, %cst_106 [1] : vector<8x4xf32> to vector<8xf32>
    %346 = vector.shape_cast %345 : vector<8xf32> to vector<8x1xf32>
    %347 = vector.broadcast %346 : vector<8x1xf32> to vector<8x4xf32>
    %348 = arith.divf %344, %347 : vector<8x4xf32>
    %c0_107 = arith.constant 0 : index
    %c0_108 = arith.constant 0 : index
    %349 = vector.load %arg13[%c0_107, %c0_108] : memref<8x4xf32, #tpu.memory_space<vmem>>, vector<8x4xf32>
    tpu.vector_store %arg13[%c0_107, %c0_108], %348 {strides = array<i32>} : memref<8x4xf32, #tpu.memory_space<vmem>>, vector<8x4xf32>,
    return
  }
}

module attributes {stable_mosaic.version = 11 : i64} {
  func.func @_bigru_attention_kernel(%arg0: memref<64x16xf32, #tpu.memory_space<vmem>>, %arg1: memref<8x1xi32, #tpu.memory_space<vmem>>, %arg2: memref<8x8x1xf32, #tpu.memory_space<vmem>>, %arg3: memref<16x96xf32, #tpu.memory_space<vmem>>, %arg4: memref<1x96xf32, #tpu.memory_space<vmem>>, %arg5: memref<16x48xf32, #tpu.memory_space<vmem>>, %arg6: memref<16x48xf32, #tpu.memory_space<vmem>>, %arg7: memref<1x32xf32, #tpu.memory_space<vmem>>, %arg8: memref<32x32xf32, #tpu.memory_space<vmem>>, %arg9: memref<1x32xf32, #tpu.memory_space<vmem>>, %arg10: memref<32x32xf32, #tpu.memory_space<vmem>>, %arg11: memref<8x32xf32, #tpu.memory_space<vmem>>, %arg12: memref<8x8x48xf32, #tpu.memory_space<vmem>>, %arg13: memref<8x8x48xf32, #tpu.memory_space<vmem>>, %arg14: memref<8x8x16xf32, #tpu.memory_space<vmem>>, %arg15: memref<8x8x16xf32, #tpu.memory_space<vmem>>) attributes {dimension_semantics = [], scalar_prefetch = 0 : i64, scratch_operands = 4 : i64, tpu.core_type = #tpu.core_type<tc>} {
    %c0 = arith.constant 0 : index
    %c0_0 = arith.constant 0 : index
    %0 = vector.load %arg0[%c0, %c0_0] : memref<64x16xf32, #tpu.memory_space<vmem>>, vector<64x16xf32>
    %c0_1 = arith.constant 0 : index
    %c0_2 = arith.constant 0 : index
    %1 = vector.load %arg3[%c0_1, %c0_2] : memref<16x96xf32, #tpu.memory_space<vmem>>, vector<16x96xf32>
    %cst = arith.constant dense<0.000000e+00> : vector<64x96xf32>
    %2 = tpu.matmul %0, %1, %cst {dimension_numbers = #tpu.dot_dimension_numbers<[1], [0], [0], [1], [0, 0, 1, 1], [], []>} : vector<64x16xf32>, vector<16x96xf32>, vector<64x96xf32> -> vector<64x96xf32>
    %c0_3 = arith.constant 0 : index
    %c0_4 = arith.constant 0 : index
    %3 = vector.load %arg4[%c0_3, %c0_4] : memref<1x96xf32, #tpu.memory_space<vmem>>, vector<1x96xf32>
    %4 = vector.broadcast %3 : vector<1x96xf32> to vector<64x96xf32>
    %5 = arith.addf %2, %4 : vector<64x96xf32>
    %6 = vector.extract_strided_slice %5 {offsets = [0, 0], sizes = [64, 48], strides = [1, 1]} : vector<64x96xf32> to vector<64x48xf32>
    %7 = vector.shape_cast %6 : vector<64x48xf32> to vector<8x8x48xf32>
    %c0_5 = arith.constant 0 : index
    %c0_6 = arith.constant 0 : index
    %c0_7 = arith.constant 0 : index
    %8 = vector.load %arg12[%c0_5, %c0_6, %c0_7] : memref<8x8x48xf32, #tpu.memory_space<vmem>>, vector<8x8x48xf32>
    tpu.vector_store %arg12[%c0_5, %c0_6, %c0_7], %7 {strides = array<i32>} : memref<8x8x48xf32, #tpu.memory_space<vmem>>, vector<8x8x48xf32>,
    %9 = vector.extract_strided_slice %5 {offsets = [0, 48], sizes = [64, 48], strides = [1, 1]} : vector<64x96xf32> to vector<64x48xf32>
    %10 = vector.shape_cast %9 : vector<64x48xf32> to vector<8x8x48xf32>
    %c0_8 = arith.constant 0 : index
    %c0_9 = arith.constant 0 : index
    %c0_10 = arith.constant 0 : index
    %11 = vector.load %arg13[%c0_8, %c0_9, %c0_10] : memref<8x8x48xf32, #tpu.memory_space<vmem>>, vector<8x8x48xf32>
    tpu.vector_store %arg13[%c0_8, %c0_9, %c0_10], %10 {strides = array<i32>} : memref<8x8x48xf32, #tpu.memory_space<vmem>>, vector<8x8x48xf32>,
    %c0_11 = arith.constant 0 : index
    %c0_12 = arith.constant 0 : index
    %12 = vector.load %arg1[%c0_11, %c0_12] : memref<8x1xi32, #tpu.memory_space<vmem>>, vector<8x1xi32>
    %c0_13 = arith.constant 0 : index
    %c0_14 = arith.constant 0 : index
    %13 = vector.load %arg7[%c0_13, %c0_14] : memref<1x32xf32, #tpu.memory_space<vmem>>, vector<1x32xf32>
    %c0_15 = arith.constant 0 : index
    %c0_16 = arith.constant 0 : index
    %14 = vector.load %arg5[%c0_15, %c0_16] : memref<16x48xf32, #tpu.memory_space<vmem>>, vector<16x48xf32>
    %c0_17 = arith.constant 0 : index
    %c0_18 = arith.constant 0 : index
    %15 = vector.load %arg6[%c0_17, %c0_18] : memref<16x48xf32, #tpu.memory_space<vmem>>, vector<16x48xf32>
    %cst_19 = arith.constant 0.000000e+00 : f32
    %16 = vector.broadcast %cst_19 : f32 to vector<8x16xf32>
    %c0_i32 = arith.constant 0 : i32
    %c7_i32 = arith.constant 7 : i32
    %17 = arith.subi %c7_i32, %c0_i32 : i32
    %cst_20 = arith.constant dense<0.000000e+00> : vector<8x48xf32>
    %18 = tpu.matmul %16, %14, %cst_20 {dimension_numbers = #tpu.dot_dimension_numbers<[1], [0], [0], [1], [0, 0, 1, 1], [], []>} : vector<8x16xf32>, vector<16x48xf32>, vector<8x48xf32> -> vector<8x48xf32>
    %cst_21 = arith.constant dense<0.000000e+00> : vector<8x48xf32>
    %19 = tpu.matmul %16, %15, %cst_21 {dimension_numbers = #tpu.dot_dimension_numbers<[1], [0], [0], [1], [0, 0, 1, 1], [], []>} : vector<8x16xf32>, vector<16x48xf32>, vector<8x48xf32> -> vector<8x48xf32>
    %20 = arith.index_cast %c0_i32 : i32 to index
    %c0_22 = arith.constant 0 : index
    %c0_23 = arith.constant 0 : index
    %21 = vector.load %arg12[%20, %c0_22, %c0_23] : memref<8x8x48xf32, #tpu.memory_space<vmem>>, vector<1x8x48xf32>
    %22 = vector.shape_cast %21 : vector<1x8x48xf32> to vector<8x48xf32>
    %23 = vector.extract_strided_slice %13 {offsets = [0, 0], sizes = [1, 16], strides = [1, 1]} : vector<1x32xf32> to vector<1x16xf32>
    %24 = vector.extract_strided_slice %22 {offsets = [0, 0], sizes = [8, 16], strides = [1, 1]} : vector<8x48xf32> to vector<8x16xf32>
    %25 = vector.extract_strided_slice %18 {offsets = [0, 0], sizes = [8, 16], strides = [1, 1]} : vector<8x48xf32> to vector<8x16xf32>
    %26 = arith.addf %24, %25 : vector<8x16xf32>
    %27 = arith.negf %26 : vector<8x16xf32>
    %28 = math.exp %27 : vector<8x16xf32>
    %cst_24 = arith.constant 1.000000e+00 : f32
    %29 = vector.broadcast %cst_24 : f32 to vector<8x16xf32>
    %30 = arith.addf %29, %28 : vector<8x16xf32>
    %31 = arith.divf %29, %30 : vector<8x16xf32>
    %32 = vector.extract_strided_slice %22 {offsets = [0, 16], sizes = [8, 16], strides = [1, 1]} : vector<8x48xf32> to vector<8x16xf32>
    %33 = vector.extract_strided_slice %18 {offsets = [0, 16], sizes = [8, 16], strides = [1, 1]} : vector<8x48xf32> to vector<8x16xf32>
    %34 = arith.addf %32, %33 : vector<8x16xf32>
    %35 = arith.negf %34 : vector<8x16xf32>
    %36 = math.exp %35 : vector<8x16xf32>
    %cst_25 = arith.constant 1.000000e+00 : f32
    %37 = vector.broadcast %cst_25 : f32 to vector<8x16xf32>
    %38 = arith.addf %37, %36 : vector<8x16xf32>
    %39 = arith.divf %37, %38 : vector<8x16xf32>
    %40 = vector.extract_strided_slice %22 {offsets = [0, 32], sizes = [8, 16], strides = [1, 1]} : vector<8x48xf32> to vector<8x16xf32>
    %41 = vector.extract_strided_slice %18 {offsets = [0, 32], sizes = [8, 16], strides = [1, 1]} : vector<8x48xf32> to vector<8x16xf32>
    %42 = vector.broadcast %23 : vector<1x16xf32> to vector<8x16xf32>
    %43 = arith.addf %41, %42 : vector<8x16xf32>
    %44 = arith.mulf %31, %43 : vector<8x16xf32>
    %45 = arith.addf %40, %44 : vector<8x16xf32>
    %46 = math.tanh %45 : vector<8x16xf32>
    %cst_26 = arith.constant 1.000000e+00 : f32
    %47 = vector.broadcast %cst_26 : f32 to vector<8x16xf32>
    %48 = arith.subf %47, %39 : vector<8x16xf32>
    %49 = arith.mulf %48, %46 : vector<8x16xf32>
    %50 = arith.mulf %39, %16 : vector<8x16xf32>
    %51 = arith.addf %49, %50 : vector<8x16xf32>
    %52 = arith.index_cast %17 : i32 to index
    %c0_27 = arith.constant 0 : index
    %c0_28 = arith.constant 0 : index
    %53 = vector.load %arg13[%52, %c0_27, %c0_28] : memref<8x8x48xf32, #tpu.memory_space<vmem>>, vector<1x8x48xf32>
    %54 = vector.shape_cast %53 : vector<1x8x48xf32> to vector<8x48xf32>
    %55 = vector.extract_strided_slice %13 {offsets = [0, 16], sizes = [1, 16], strides = [1, 1]} : vector<1x32xf32> to vector<1x16xf32>
    %56 = vector.extract_strided_slice %54 {offsets = [0, 0], sizes = [8, 16], strides = [1, 1]} : vector<8x48xf32> to vector<8x16xf32>
    %57 = vector.extract_strided_slice %19 {offsets = [0, 0], sizes = [8, 16], strides = [1, 1]} : vector<8x48xf32> to vector<8x16xf32>
    %58 = arith.addf %56, %57 : vector<8x16xf32>
    %59 = arith.negf %58 : vector<8x16xf32>
    %60 = math.exp %59 : vector<8x16xf32>
    %cst_29 = arith.constant 1.000000e+00 : f32
    %61 = vector.broadcast %cst_29 : f32 to vector<8x16xf32>
    %62 = arith.addf %61, %60 : vector<8x16xf32>
    %63 = arith.divf %61, %62 : vector<8x16xf32>
    %64 = vector.extract_strided_slice %54 {offsets = [0, 16], sizes = [8, 16], strides = [1, 1]} : vector<8x48xf32> to vector<8x16xf32>
    %65 = vector.extract_strided_slice %19 {offsets = [0, 16], sizes = [8, 16], strides = [1, 1]} : vector<8x48xf32> to vector<8x16xf32>
    %66 = arith.addf %64, %65 : vector<8x16xf32>
    %67 = arith.negf %66 : vector<8x16xf32>
    %68 = math.exp %67 : vector<8x16xf32>
    %cst_30 = arith.constant 1.000000e+00 : f32
    %69 = vector.broadcast %cst_30 : f32 to vector<8x16xf32>
    %70 = arith.addf %69, %68 : vector<8x16xf32>
    %71 = arith.divf %69, %70 : vector<8x16xf32>
    %72 = vector.extract_strided_slice %54 {offsets = [0, 32], sizes = [8, 16], strides = [1, 1]} : vector<8x48xf32> to vector<8x16xf32>
    %73 = vector.extract_strided_slice %19 {offsets = [0, 32], sizes = [8, 16], strides = [1, 1]} : vector<8x48xf32> to vector<8x16xf32>
    %74 = vector.broadcast %55 : vector<1x16xf32> to vector<8x16xf32>
    %75 = arith.addf %73, %74 : vector<8x16xf32>
    %76 = arith.mulf %63, %75 : vector<8x16xf32>
    %77 = arith.addf %72, %76 : vector<8x16xf32>
    %78 = math.tanh %77 : vector<8x16xf32>
    %cst_31 = arith.constant 1.000000e+00 : f32
    %79 = vector.broadcast %cst_31 : f32 to vector<8x16xf32>
    %80 = arith.subf %79, %71 : vector<8x16xf32>
    %81 = arith.mulf %80, %78 : vector<8x16xf32>
    %82 = arith.mulf %71, %16 : vector<8x16xf32>
    %83 = arith.addf %81, %82 : vector<8x16xf32>
    %84 = vector.broadcast %c0_i32 : i32 to vector<8x1xi32>
    %85 = arith.cmpi sgt, %12, %84 : vector<8x1xi32>
    %86 = vector.broadcast %17 : i32 to vector<8x1xi32>
    %87 = arith.cmpi sgt, %12, %86 : vector<8x1xi32>
    %cst_32 = arith.constant 0.000000e+00 : f32
    %88 = vector.shape_cast %85 : vector<8x1xi1> to vector<8x1xi1>
    %89 = vector.broadcast %88 : vector<8x1xi1> to vector<8x16xi1>
    %90 = vector.broadcast %cst_32 : f32 to vector<8x16xf32>
    %91 = arith.select %89, %51, %90 : vector<8x16xi1>, vector<8x16xf32>
    %92 = arith.index_cast %c0_i32 : i32 to index
    %c0_33 = arith.constant 0 : index
    %c0_34 = arith.constant 0 : index
    %93 = vector.load %arg14[%92, %c0_33, %c0_34] : memref<8x8x16xf32, #tpu.memory_space<vmem>>, vector<1x8x16xf32>
    %94 = vector.shape_cast %93 : vector<1x8x16xf32> to vector<8x16xf32>
    %95 = vector.shape_cast %91 : vector<8x16xf32> to vector<1x8x16xf32>
    tpu.vector_store %arg14[%92, %c0_33, %c0_34], %95 {strides = array<i32>} : memref<8x8x16xf32, #tpu.memory_space<vmem>>, vector<1x8x16xf32>,
    %cst_35 = arith.constant 0.000000e+00 : f32
    %96 = vector.shape_cast %87 : vector<8x1xi1> to vector<8x1xi1>
    %97 = vector.broadcast %96 : vector<8x1xi1> to vector<8x16xi1>
    %98 = vector.broadcast %cst_35 : f32 to vector<8x16xf32>
    %99 = arith.select %97, %83, %98 : vector<8x16xi1>, vector<8x16xf32>
    %100 = arith.index_cast %17 : i32 to index
    %c0_36 = arith.constant 0 : index
    %c0_37 = arith.constant 0 : index
    %101 = vector.load %arg15[%100, %c0_36, %c0_37] : memref<8x8x16xf32, #tpu.memory_space<vmem>>, vector<1x8x16xf32>
    %102 = vector.shape_cast %101 : vector<1x8x16xf32> to vector<8x16xf32>
    %103 = vector.shape_cast %99 : vector<8x16xf32> to vector<1x8x16xf32>
    tpu.vector_store %arg15[%100, %c0_36, %c0_37], %103 {strides = array<i32>} : memref<8x8x16xf32, #tpu.memory_space<vmem>>, vector<1x8x16xf32>,
    %104 = vector.shape_cast %85 : vector<8x1xi1> to vector<8x1xi1>
    %105 = vector.broadcast %104 : vector<8x1xi1> to vector<8x16xi1>
    %106 = arith.select %105, %51, %16 : vector<8x16xi1>, vector<8x16xf32>
    %107 = vector.shape_cast %87 : vector<8x1xi1> to vector<8x1xi1>
    %108 = vector.broadcast %107 : vector<8x1xi1> to vector<8x16xi1>
    %109 = arith.select %108, %83, %16 : vector<8x16xi1>, vector<8x16xf32>
    %c1_i32 = arith.constant 1 : i32
    %c7_i32_38 = arith.constant 7 : i32
    %110 = arith.subi %c7_i32_38, %c1_i32 : i32
    %cst_39 = arith.constant dense<0.000000e+00> : vector<8x48xf32>
    %111 = tpu.matmul %106, %14, %cst_39 {dimension_numbers = #tpu.dot_dimension_numbers<[1], [0], [0], [1], [0, 0, 1, 1], [], []>} : vector<8x16xf32>, vector<16x48xf32>, vector<8x48xf32> -> vector<8x48xf32>
    %cst_40 = arith.constant dense<0.000000e+00> : vector<8x48xf32>
    %112 = tpu.matmul %109, %15, %cst_40 {dimension_numbers = #tpu.dot_dimension_numbers<[1], [0], [0], [1], [0, 0, 1, 1], [], []>} : vector<8x16xf32>, vector<16x48xf32>, vector<8x48xf32> -> vector<8x48xf32>
    %113 = arith.index_cast %c1_i32 : i32 to index
    %c0_41 = arith.constant 0 : index
    %c0_42 = arith.constant 0 : index
    %114 = vector.load %arg12[%113, %c0_41, %c0_42] : memref<8x8x48xf32, #tpu.memory_space<vmem>>, vector<1x8x48xf32>
    %115 = vector.shape_cast %114 : vector<1x8x48xf32> to vector<8x48xf32>
    %116 = vector.extract_strided_slice %13 {offsets = [0, 0], sizes = [1, 16], strides = [1, 1]} : vector<1x32xf32> to vector<1x16xf32>
    %117 = vector.extract_strided_slice %115 {offsets = [0, 0], sizes = [8, 16], strides = [1, 1]} : vector<8x48xf32> to vector<8x16xf32>
    %118 = vector.extract_strided_slice %111 {offsets = [0, 0], sizes = [8, 16], strides = [1, 1]} : vector<8x48xf32> to vector<8x16xf32>
    %119 = arith.addf %117, %118 : vector<8x16xf32>
    %120 = arith.negf %119 : vector<8x16xf32>
    %121 = math.exp %120 : vector<8x16xf32>
    %cst_43 = arith.constant 1.000000e+00 : f32
    %122 = vector.broadcast %cst_43 : f32 to vector<8x16xf32>
    %123 = arith.addf %122, %121 : vector<8x16xf32>
    %124 = arith.divf %122, %123 : vector<8x16xf32>
    %125 = vector.extract_strided_slice %115 {offsets = [0, 16], sizes = [8, 16], strides = [1, 1]} : vector<8x48xf32> to vector<8x16xf32>
    %126 = vector.extract_strided_slice %111 {offsets = [0, 16], sizes = [8, 16], strides = [1, 1]} : vector<8x48xf32> to vector<8x16xf32>
    %127 = arith.addf %125, %126 : vector<8x16xf32>
    %128 = arith.negf %127 : vector<8x16xf32>
    %129 = math.exp %128 : vector<8x16xf32>
    %cst_44 = arith.constant 1.000000e+00 : f32
    %130 = vector.broadcast %cst_44 : f32 to vector<8x16xf32>
    %131 = arith.addf %130, %129 : vector<8x16xf32>
    %132 = arith.divf %130, %131 : vector<8x16xf32>
    %133 = vector.extract_strided_slice %115 {offsets = [0, 32], sizes = [8, 16], strides = [1, 1]} : vector<8x48xf32> to vector<8x16xf32>
    %134 = vector.extract_strided_slice %111 {offsets = [0, 32], sizes = [8, 16], strides = [1, 1]} : vector<8x48xf32> to vector<8x16xf32>
    %135 = vector.broadcast %116 : vector<1x16xf32> to vector<8x16xf32>
    %136 = arith.addf %134, %135 : vector<8x16xf32>
    %137 = arith.mulf %124, %136 : vector<8x16xf32>
    %138 = arith.addf %133, %137 : vector<8x16xf32>
    %139 = math.tanh %138 : vector<8x16xf32>
    %cst_45 = arith.constant 1.000000e+00 : f32
    %140 = vector.broadcast %cst_45 : f32 to vector<8x16xf32>
    %141 = arith.subf %140, %132 : vector<8x16xf32>
    %142 = arith.mulf %141, %139 : vector<8x16xf32>
    %143 = arith.mulf %132, %106 : vector<8x16xf32>
    %144 = arith.addf %142, %143 : vector<8x16xf32>
    %145 = arith.index_cast %110 : i32 to index
    %c0_46 = arith.constant 0 : index
    %c0_47 = arith.constant 0 : index
    %146 = vector.load %arg13[%145, %c0_46, %c0_47] : memref<8x8x48xf32, #tpu.memory_space<vmem>>, vector<1x8x48xf32>
    %147 = vector.shape_cast %146 : vector<1x8x48xf32> to vector<8x48xf32>
    %148 = vector.extract_strided_slice %13 {offsets = [0, 16], sizes = [1, 16], strides = [1, 1]} : vector<1x32xf32> to vector<1x16xf32>
    %149 = vector.extract_strided_slice %147 {offsets = [0, 0], sizes = [8, 16], strides = [1, 1]} : vector<8x48xf32> to vector<8x16xf32>
    %150 = vector.extract_strided_slice %112 {offsets = [0, 0], sizes = [8, 16], strides = [1, 1]} : vector<8x48xf32> to vector<8x16xf32>
    %151 = arith.addf %149, %150 : vector<8x16xf32>
    %152 = arith.negf %151 : vector<8x16xf32>
    %153 = math.exp %152 : vector<8x16xf32>
    %cst_48 = arith.constant 1.000000e+00 : f32
    %154 = vector.broadcast %cst_48 : f32 to vector<8x16xf32>
    %155 = arith.addf %154, %153 : vector<8x16xf32>
    %156 = arith.divf %154, %155 : vector<8x16xf32>
    %157 = vector.extract_strided_slice %147 {offsets = [0, 16], sizes = [8, 16], strides = [1, 1]} : vector<8x48xf32> to vector<8x16xf32>
    %158 = vector.extract_strided_slice %112 {offsets = [0, 16], sizes = [8, 16], strides = [1, 1]} : vector<8x48xf32> to vector<8x16xf32>
    %159 = arith.addf %157, %158 : vector<8x16xf32>
    %160 = arith.negf %159 : vector<8x16xf32>
    %161 = math.exp %160 : vector<8x16xf32>
    %cst_49 = arith.constant 1.000000e+00 : f32
    %162 = vector.broadcast %cst_49 : f32 to vector<8x16xf32>
    %163 = arith.addf %162, %161 : vector<8x16xf32>
    %164 = arith.divf %162, %163 : vector<8x16xf32>
    %165 = vector.extract_strided_slice %147 {offsets = [0, 32], sizes = [8, 16], strides = [1, 1]} : vector<8x48xf32> to vector<8x16xf32>
    %166 = vector.extract_strided_slice %112 {offsets = [0, 32], sizes = [8, 16], strides = [1, 1]} : vector<8x48xf32> to vector<8x16xf32>
    %167 = vector.broadcast %148 : vector<1x16xf32> to vector<8x16xf32>
    %168 = arith.addf %166, %167 : vector<8x16xf32>
    %169 = arith.mulf %156, %168 : vector<8x16xf32>
    %170 = arith.addf %165, %169 : vector<8x16xf32>
    %171 = math.tanh %170 : vector<8x16xf32>
    %cst_50 = arith.constant 1.000000e+00 : f32
    %172 = vector.broadcast %cst_50 : f32 to vector<8x16xf32>
    %173 = arith.subf %172, %164 : vector<8x16xf32>
    %174 = arith.mulf %173, %171 : vector<8x16xf32>
    %175 = arith.mulf %164, %109 : vector<8x16xf32>
    %176 = arith.addf %174, %175 : vector<8x16xf32>
    %177 = vector.broadcast %c1_i32 : i32 to vector<8x1xi32>
    %178 = arith.cmpi sgt, %12, %177 : vector<8x1xi32>
    %179 = vector.broadcast %110 : i32 to vector<8x1xi32>
    %180 = arith.cmpi sgt, %12, %179 : vector<8x1xi32>
    %cst_51 = arith.constant 0.000000e+00 : f32
    %181 = vector.shape_cast %178 : vector<8x1xi1> to vector<8x1xi1>
    %182 = vector.broadcast %181 : vector<8x1xi1> to vector<8x16xi1>
    %183 = vector.broadcast %cst_51 : f32 to vector<8x16xf32>
    %184 = arith.select %182, %144, %183 : vector<8x16xi1>, vector<8x16xf32>
    %185 = arith.index_cast %c1_i32 : i32 to index
    %c0_52 = arith.constant 0 : index
    %c0_53 = arith.constant 0 : index
    %186 = vector.load %arg14[%185, %c0_52, %c0_53] : memref<8x8x16xf32, #tpu.memory_space<vmem>>, vector<1x8x16xf32>
    %187 = vector.shape_cast %186 : vector<1x8x16xf32> to vector<8x16xf32>
    %188 = vector.shape_cast %184 : vector<8x16xf32> to vector<1x8x16xf32>
    tpu.vector_store %arg14[%185, %c0_52, %c0_53], %188 {strides = array<i32>} : memref<8x8x16xf32, #tpu.memory_space<vmem>>, vector<1x8x16xf32>,
    %cst_54 = arith.constant 0.000000e+00 : f32
    %189 = vector.shape_cast %180 : vector<8x1xi1> to vector<8x1xi1>
    %190 = vector.broadcast %189 : vector<8x1xi1> to vector<8x16xi1>
    %191 = vector.broadcast %cst_54 : f32 to vector<8x16xf32>
    %192 = arith.select %190, %176, %191 : vector<8x16xi1>, vector<8x16xf32>
    %193 = arith.index_cast %110 : i32 to index
    %c0_55 = arith.constant 0 : index
    %c0_56 = arith.constant 0 : index
    %194 = vector.load %arg15[%193, %c0_55, %c0_56] : memref<8x8x16xf32, #tpu.memory_space<vmem>>, vector<1x8x16xf32>
    %195 = vector.shape_cast %194 : vector<1x8x16xf32> to vector<8x16xf32>
    %196 = vector.shape_cast %192 : vector<8x16xf32> to vector<1x8x16xf32>
    tpu.vector_store %arg15[%193, %c0_55, %c0_56], %196 {strides = array<i32>} : memref<8x8x16xf32, #tpu.memory_space<vmem>>, vector<1x8x16xf32>,
    %197 = vector.shape_cast %178 : vector<8x1xi1> to vector<8x1xi1>
    %198 = vector.broadcast %197 : vector<8x1xi1> to vector<8x16xi1>
    %199 = arith.select %198, %144, %106 : vector<8x16xi1>, vector<8x16xf32>
    %200 = vector.shape_cast %180 : vector<8x1xi1> to vector<8x1xi1>
    %201 = vector.broadcast %200 : vector<8x1xi1> to vector<8x16xi1>
    %202 = arith.select %201, %176, %109 : vector<8x16xi1>, vector<8x16xf32>
    %c2_i32 = arith.constant 2 : i32
    %c7_i32_57 = arith.constant 7 : i32
    %203 = arith.subi %c7_i32_57, %c2_i32 : i32
    %cst_58 = arith.constant dense<0.000000e+00> : vector<8x48xf32>
    %204 = tpu.matmul %199, %14, %cst_58 {dimension_numbers = #tpu.dot_dimension_numbers<[1], [0], [0], [1], [0, 0, 1, 1], [], []>} : vector<8x16xf32>, vector<16x48xf32>, vector<8x48xf32> -> vector<8x48xf32>
    %cst_59 = arith.constant dense<0.000000e+00> : vector<8x48xf32>
    %205 = tpu.matmul %202, %15, %cst_59 {dimension_numbers = #tpu.dot_dimension_numbers<[1], [0], [0], [1], [0, 0, 1, 1], [], []>} : vector<8x16xf32>, vector<16x48xf32>, vector<8x48xf32> -> vector<8x48xf32>
    %206 = arith.index_cast %c2_i32 : i32 to index
    %c0_60 = arith.constant 0 : index
    %c0_61 = arith.constant 0 : index
    %207 = vector.load %arg12[%206, %c0_60, %c0_61] : memref<8x8x48xf32, #tpu.memory_space<vmem>>, vector<1x8x48xf32>
    %208 = vector.shape_cast %207 : vector<1x8x48xf32> to vector<8x48xf32>
    %209 = vector.extract_strided_slice %13 {offsets = [0, 0], sizes = [1, 16], strides = [1, 1]} : vector<1x32xf32> to vector<1x16xf32>
    %210 = vector.extract_strided_slice %208 {offsets = [0, 0], sizes = [8, 16], strides = [1, 1]} : vector<8x48xf32> to vector<8x16xf32>
    %211 = vector.extract_strided_slice %204 {offsets = [0, 0], sizes = [8, 16], strides = [1, 1]} : vector<8x48xf32> to vector<8x16xf32>
    %212 = arith.addf %210, %211 : vector<8x16xf32>
    %213 = arith.negf %212 : vector<8x16xf32>
    %214 = math.exp %213 : vector<8x16xf32>
    %cst_62 = arith.constant 1.000000e+00 : f32
    %215 = vector.broadcast %cst_62 : f32 to vector<8x16xf32>
    %216 = arith.addf %215, %214 : vector<8x16xf32>
    %217 = arith.divf %215, %216 : vector<8x16xf32>
    %218 = vector.extract_strided_slice %208 {offsets = [0, 16], sizes = [8, 16], strides = [1, 1]} : vector<8x48xf32> to vector<8x16xf32>
    %219 = vector.extract_strided_slice %204 {offsets = [0, 16], sizes = [8, 16], strides = [1, 1]} : vector<8x48xf32> to vector<8x16xf32>
    %220 = arith.addf %218, %219 : vector<8x16xf32>
    %221 = arith.negf %220 : vector<8x16xf32>
    %222 = math.exp %221 : vector<8x16xf32>
    %cst_63 = arith.constant 1.000000e+00 : f32
    %223 = vector.broadcast %cst_63 : f32 to vector<8x16xf32>
    %224 = arith.addf %223, %222 : vector<8x16xf32>
    %225 = arith.divf %223, %224 : vector<8x16xf32>
    %226 = vector.extract_strided_slice %208 {offsets = [0, 32], sizes = [8, 16], strides = [1, 1]} : vector<8x48xf32> to vector<8x16xf32>
    %227 = vector.extract_strided_slice %204 {offsets = [0, 32], sizes = [8, 16], strides = [1, 1]} : vector<8x48xf32> to vector<8x16xf32>
    %228 = vector.broadcast %209 : vector<1x16xf32> to vector<8x16xf32>
    %229 = arith.addf %227, %228 : vector<8x16xf32>
    %230 = arith.mulf %217, %229 : vector<8x16xf32>
    %231 = arith.addf %226, %230 : vector<8x16xf32>
    %232 = math.tanh %231 : vector<8x16xf32>
    %cst_64 = arith.constant 1.000000e+00 : f32
    %233 = vector.broadcast %cst_64 : f32 to vector<8x16xf32>
    %234 = arith.subf %233, %225 : vector<8x16xf32>
    %235 = arith.mulf %234, %232 : vector<8x16xf32>
    %236 = arith.mulf %225, %199 : vector<8x16xf32>
    %237 = arith.addf %235, %236 : vector<8x16xf32>
    %238 = arith.index_cast %203 : i32 to index
    %c0_65 = arith.constant 0 : index
    %c0_66 = arith.constant 0 : index
    %239 = vector.load %arg13[%238, %c0_65, %c0_66] : memref<8x8x48xf32, #tpu.memory_space<vmem>>, vector<1x8x48xf32>
    %240 = vector.shape_cast %239 : vector<1x8x48xf32> to vector<8x48xf32>
    %241 = vector.extract_strided_slice %13 {offsets = [0, 16], sizes = [1, 16], strides = [1, 1]} : vector<1x32xf32> to vector<1x16xf32>
    %242 = vector.extract_strided_slice %240 {offsets = [0, 0], sizes = [8, 16], strides = [1, 1]} : vector<8x48xf32> to vector<8x16xf32>
    %243 = vector.extract_strided_slice %205 {offsets = [0, 0], sizes = [8, 16], strides = [1, 1]} : vector<8x48xf32> to vector<8x16xf32>
    %244 = arith.addf %242, %243 : vector<8x16xf32>
    %245 = arith.negf %244 : vector<8x16xf32>
    %246 = math.exp %245 : vector<8x16xf32>
    %cst_67 = arith.constant 1.000000e+00 : f32
    %247 = vector.broadcast %cst_67 : f32 to vector<8x16xf32>
    %248 = arith.addf %247, %246 : vector<8x16xf32>
    %249 = arith.divf %247, %248 : vector<8x16xf32>
    %250 = vector.extract_strided_slice %240 {offsets = [0, 16], sizes = [8, 16], strides = [1, 1]} : vector<8x48xf32> to vector<8x16xf32>
    %251 = vector.extract_strided_slice %205 {offsets = [0, 16], sizes = [8, 16], strides = [1, 1]} : vector<8x48xf32> to vector<8x16xf32>
    %252 = arith.addf %250, %251 : vector<8x16xf32>
    %253 = arith.negf %252 : vector<8x16xf32>
    %254 = math.exp %253 : vector<8x16xf32>
    %cst_68 = arith.constant 1.000000e+00 : f32
    %255 = vector.broadcast %cst_68 : f32 to vector<8x16xf32>
    %256 = arith.addf %255, %254 : vector<8x16xf32>
    %257 = arith.divf %255, %256 : vector<8x16xf32>
    %258 = vector.extract_strided_slice %240 {offsets = [0, 32], sizes = [8, 16], strides = [1, 1]} : vector<8x48xf32> to vector<8x16xf32>
    %259 = vector.extract_strided_slice %205 {offsets = [0, 32], sizes = [8, 16], strides = [1, 1]} : vector<8x48xf32> to vector<8x16xf32>
    %260 = vector.broadcast %241 : vector<1x16xf32> to vector<8x16xf32>
    %261 = arith.addf %259, %260 : vector<8x16xf32>
    %262 = arith.mulf %249, %261 : vector<8x16xf32>
    %263 = arith.addf %258, %262 : vector<8x16xf32>
    %264 = math.tanh %263 : vector<8x16xf32>
    %cst_69 = arith.constant 1.000000e+00 : f32
    %265 = vector.broadcast %cst_69 : f32 to vector<8x16xf32>
    %266 = arith.subf %265, %257 : vector<8x16xf32>
    %267 = arith.mulf %266, %264 : vector<8x16xf32>
    %268 = arith.mulf %257, %202 : vector<8x16xf32>
    %269 = arith.addf %267, %268 : vector<8x16xf32>
    %270 = vector.broadcast %c2_i32 : i32 to vector<8x1xi32>
    %271 = arith.cmpi sgt, %12, %270 : vector<8x1xi32>
    %272 = vector.broadcast %203 : i32 to vector<8x1xi32>
    %273 = arith.cmpi sgt, %12, %272 : vector<8x1xi32>
    %cst_70 = arith.constant 0.000000e+00 : f32
    %274 = vector.shape_cast %271 : vector<8x1xi1> to vector<8x1xi1>
    %275 = vector.broadcast %274 : vector<8x1xi1> to vector<8x16xi1>
    %276 = vector.broadcast %cst_70 : f32 to vector<8x16xf32>
    %277 = arith.select %275, %237, %276 : vector<8x16xi1>, vector<8x16xf32>
    %278 = arith.index_cast %c2_i32 : i32 to index
    %c0_71 = arith.constant 0 : index
    %c0_72 = arith.constant 0 : index
    %279 = vector.load %arg14[%278, %c0_71, %c0_72] : memref<8x8x16xf32, #tpu.memory_space<vmem>>, vector<1x8x16xf32>
    %280 = vector.shape_cast %279 : vector<1x8x16xf32> to vector<8x16xf32>
    %281 = vector.shape_cast %277 : vector<8x16xf32> to vector<1x8x16xf32>
    tpu.vector_store %arg14[%278, %c0_71, %c0_72], %281 {strides = array<i32>} : memref<8x8x16xf32, #tpu.memory_space<vmem>>, vector<1x8x16xf32>,
    %cst_73 = arith.constant 0.000000e+00 : f32
    %282 = vector.shape_cast %273 : vector<8x1xi1> to vector<8x1xi1>
    %283 = vector.broadcast %282 : vector<8x1xi1> to vector<8x16xi1>
    %284 = vector.broadcast %cst_73 : f32 to vector<8x16xf32>
    %285 = arith.select %283, %269, %284 : vector<8x16xi1>, vector<8x16xf32>
    %286 = arith.index_cast %203 : i32 to index
    %c0_74 = arith.constant 0 : index
    %c0_75 = arith.constant 0 : index
    %287 = vector.load %arg15[%286, %c0_74, %c0_75] : memref<8x8x16xf32, #tpu.memory_space<vmem>>, vector<1x8x16xf32>
    %288 = vector.shape_cast %287 : vector<1x8x16xf32> to vector<8x16xf32>
    %289 = vector.shape_cast %285 : vector<8x16xf32> to vector<1x8x16xf32>
    tpu.vector_store %arg15[%286, %c0_74, %c0_75], %289 {strides = array<i32>} : memref<8x8x16xf32, #tpu.memory_space<vmem>>, vector<1x8x16xf32>,
    %290 = vector.shape_cast %271 : vector<8x1xi1> to vector<8x1xi1>
    %291 = vector.broadcast %290 : vector<8x1xi1> to vector<8x16xi1>
    %292 = arith.select %291, %237, %199 : vector<8x16xi1>, vector<8x16xf32>
    %293 = vector.shape_cast %273 : vector<8x1xi1> to vector<8x1xi1>
    %294 = vector.broadcast %293 : vector<8x1xi1> to vector<8x16xi1>
    %295 = arith.select %294, %269, %202 : vector<8x16xi1>, vector<8x16xf32>
    %c3_i32 = arith.constant 3 : i32
    %c7_i32_76 = arith.constant 7 : i32
    %296 = arith.subi %c7_i32_76, %c3_i32 : i32
    %cst_77 = arith.constant dense<0.000000e+00> : vector<8x48xf32>
    %297 = tpu.matmul %292, %14, %cst_77 {dimension_numbers = #tpu.dot_dimension_numbers<[1], [0], [0], [1], [0, 0, 1, 1], [], []>} : vector<8x16xf32>, vector<16x48xf32>, vector<8x48xf32> -> vector<8x48xf32>
    %cst_78 = arith.constant dense<0.000000e+00> : vector<8x48xf32>
    %298 = tpu.matmul %295, %15, %cst_78 {dimension_numbers = #tpu.dot_dimension_numbers<[1], [0], [0], [1], [0, 0, 1, 1], [], []>} : vector<8x16xf32>, vector<16x48xf32>, vector<8x48xf32> -> vector<8x48xf32>
    %299 = arith.index_cast %c3_i32 : i32 to index
    %c0_79 = arith.constant 0 : index
    %c0_80 = arith.constant 0 : index
    %300 = vector.load %arg12[%299, %c0_79, %c0_80] : memref<8x8x48xf32, #tpu.memory_space<vmem>>, vector<1x8x48xf32>
    %301 = vector.shape_cast %300 : vector<1x8x48xf32> to vector<8x48xf32>
    %302 = vector.extract_strided_slice %13 {offsets = [0, 0], sizes = [1, 16], strides = [1, 1]} : vector<1x32xf32> to vector<1x16xf32>
    %303 = vector.extract_strided_slice %301 {offsets = [0, 0], sizes = [8, 16], strides = [1, 1]} : vector<8x48xf32> to vector<8x16xf32>
    %304 = vector.extract_strided_slice %297 {offsets = [0, 0], sizes = [8, 16], strides = [1, 1]} : vector<8x48xf32> to vector<8x16xf32>
    %305 = arith.addf %303, %304 : vector<8x16xf32>
    %306 = arith.negf %305 : vector<8x16xf32>
    %307 = math.exp %306 : vector<8x16xf32>
    %cst_81 = arith.constant 1.000000e+00 : f32
    %308 = vector.broadcast %cst_81 : f32 to vector<8x16xf32>
    %309 = arith.addf %308, %307 : vector<8x16xf32>
    %310 = arith.divf %308, %309 : vector<8x16xf32>
    %311 = vector.extract_strided_slice %301 {offsets = [0, 16], sizes = [8, 16], strides = [1, 1]} : vector<8x48xf32> to vector<8x16xf32>
    %312 = vector.extract_strided_slice %297 {offsets = [0, 16], sizes = [8, 16], strides = [1, 1]} : vector<8x48xf32> to vector<8x16xf32>
    %313 = arith.addf %311, %312 : vector<8x16xf32>
    %314 = arith.negf %313 : vector<8x16xf32>
    %315 = math.exp %314 : vector<8x16xf32>
    %cst_82 = arith.constant 1.000000e+00 : f32
    %316 = vector.broadcast %cst_82 : f32 to vector<8x16xf32>
    %317 = arith.addf %316, %315 : vector<8x16xf32>
    %318 = arith.divf %316, %317 : vector<8x16xf32>
    %319 = vector.extract_strided_slice %301 {offsets = [0, 32], sizes = [8, 16], strides = [1, 1]} : vector<8x48xf32> to vector<8x16xf32>
    %320 = vector.extract_strided_slice %297 {offsets = [0, 32], sizes = [8, 16], strides = [1, 1]} : vector<8x48xf32> to vector<8x16xf32>
    %321 = vector.broadcast %302 : vector<1x16xf32> to vector<8x16xf32>
    %322 = arith.addf %320, %321 : vector<8x16xf32>
    %323 = arith.mulf %310, %322 : vector<8x16xf32>
    %324 = arith.addf %319, %323 : vector<8x16xf32>
    %325 = math.tanh %324 : vector<8x16xf32>
    %cst_83 = arith.constant 1.000000e+00 : f32
    %326 = vector.broadcast %cst_83 : f32 to vector<8x16xf32>
    %327 = arith.subf %326, %318 : vector<8x16xf32>
    %328 = arith.mulf %327, %325 : vector<8x16xf32>
    %329 = arith.mulf %318, %292 : vector<8x16xf32>
    %330 = arith.addf %328, %329 : vector<8x16xf32>
    %331 = arith.index_cast %296 : i32 to index
    %c0_84 = arith.constant 0 : index
    %c0_85 = arith.constant 0 : index
    %332 = vector.load %arg13[%331, %c0_84, %c0_85] : memref<8x8x48xf32, #tpu.memory_space<vmem>>, vector<1x8x48xf32>
    %333 = vector.shape_cast %332 : vector<1x8x48xf32> to vector<8x48xf32>
    %334 = vector.extract_strided_slice %13 {offsets = [0, 16], sizes = [1, 16], strides = [1, 1]} : vector<1x32xf32> to vector<1x16xf32>
    %335 = vector.extract_strided_slice %333 {offsets = [0, 0], sizes = [8, 16], strides = [1, 1]} : vector<8x48xf32> to vector<8x16xf32>
    %336 = vector.extract_strided_slice %298 {offsets = [0, 0], sizes = [8, 16], strides = [1, 1]} : vector<8x48xf32> to vector<8x16xf32>
    %337 = arith.addf %335, %336 : vector<8x16xf32>
    %338 = arith.negf %337 : vector<8x16xf32>
    %339 = math.exp %338 : vector<8x16xf32>
    %cst_86 = arith.constant 1.000000e+00 : f32
    %340 = vector.broadcast %cst_86 : f32 to vector<8x16xf32>
    %341 = arith.addf %340, %339 : vector<8x16xf32>
    %342 = arith.divf %340, %341 : vector<8x16xf32>
    %343 = vector.extract_strided_slice %333 {offsets = [0, 16], sizes = [8, 16], strides = [1, 1]} : vector<8x48xf32> to vector<8x16xf32>
    %344 = vector.extract_strided_slice %298 {offsets = [0, 16], sizes = [8, 16], strides = [1, 1]} : vector<8x48xf32> to vector<8x16xf32>
    %345 = arith.addf %343, %344 : vector<8x16xf32>
    %346 = arith.negf %345 : vector<8x16xf32>
    %347 = math.exp %346 : vector<8x16xf32>
    %cst_87 = arith.constant 1.000000e+00 : f32
    %348 = vector.broadcast %cst_87 : f32 to vector<8x16xf32>
    %349 = arith.addf %348, %347 : vector<8x16xf32>
    %350 = arith.divf %348, %349 : vector<8x16xf32>
    %351 = vector.extract_strided_slice %333 {offsets = [0, 32], sizes = [8, 16], strides = [1, 1]} : vector<8x48xf32> to vector<8x16xf32>
    %352 = vector.extract_strided_slice %298 {offsets = [0, 32], sizes = [8, 16], strides = [1, 1]} : vector<8x48xf32> to vector<8x16xf32>
    %353 = vector.broadcast %334 : vector<1x16xf32> to vector<8x16xf32>
    %354 = arith.addf %352, %353 : vector<8x16xf32>
    %355 = arith.mulf %342, %354 : vector<8x16xf32>
    %356 = arith.addf %351, %355 : vector<8x16xf32>
    %357 = math.tanh %356 : vector<8x16xf32>
    %cst_88 = arith.constant 1.000000e+00 : f32
    %358 = vector.broadcast %cst_88 : f32 to vector<8x16xf32>
    %359 = arith.subf %358, %350 : vector<8x16xf32>
    %360 = arith.mulf %359, %357 : vector<8x16xf32>
    %361 = arith.mulf %350, %295 : vector<8x16xf32>
    %362 = arith.addf %360, %361 : vector<8x16xf32>
    %363 = vector.broadcast %c3_i32 : i32 to vector<8x1xi32>
    %364 = arith.cmpi sgt, %12, %363 : vector<8x1xi32>
    %365 = vector.broadcast %296 : i32 to vector<8x1xi32>
    %366 = arith.cmpi sgt, %12, %365 : vector<8x1xi32>
    %cst_89 = arith.constant 0.000000e+00 : f32
    %367 = vector.shape_cast %364 : vector<8x1xi1> to vector<8x1xi1>
    %368 = vector.broadcast %367 : vector<8x1xi1> to vector<8x16xi1>
    %369 = vector.broadcast %cst_89 : f32 to vector<8x16xf32>
    %370 = arith.select %368, %330, %369 : vector<8x16xi1>, vector<8x16xf32>
    %371 = arith.index_cast %c3_i32 : i32 to index
    %c0_90 = arith.constant 0 : index
    %c0_91 = arith.constant 0 : index
    %372 = vector.load %arg14[%371, %c0_90, %c0_91] : memref<8x8x16xf32, #tpu.memory_space<vmem>>, vector<1x8x16xf32>
    %373 = vector.shape_cast %372 : vector<1x8x16xf32> to vector<8x16xf32>
    %374 = vector.shape_cast %370 : vector<8x16xf32> to vector<1x8x16xf32>
    tpu.vector_store %arg14[%371, %c0_90, %c0_91], %374 {strides = array<i32>} : memref<8x8x16xf32, #tpu.memory_space<vmem>>, vector<1x8x16xf32>,
    %cst_92 = arith.constant 0.000000e+00 : f32
    %375 = vector.shape_cast %366 : vector<8x1xi1> to vector<8x1xi1>
    %376 = vector.broadcast %375 : vector<8x1xi1> to vector<8x16xi1>
    %377 = vector.broadcast %cst_92 : f32 to vector<8x16xf32>
    %378 = arith.select %376, %362, %377 : vector<8x16xi1>, vector<8x16xf32>
    %379 = arith.index_cast %296 : i32 to index
    %c0_93 = arith.constant 0 : index
    %c0_94 = arith.constant 0 : index
    %380 = vector.load %arg15[%379, %c0_93, %c0_94] : memref<8x8x16xf32, #tpu.memory_space<vmem>>, vector<1x8x16xf32>
    %381 = vector.shape_cast %380 : vector<1x8x16xf32> to vector<8x16xf32>
    %382 = vector.shape_cast %378 : vector<8x16xf32> to vector<1x8x16xf32>
    tpu.vector_store %arg15[%379, %c0_93, %c0_94], %382 {strides = array<i32>} : memref<8x8x16xf32, #tpu.memory_space<vmem>>, vector<1x8x16xf32>,
    %383 = vector.shape_cast %364 : vector<8x1xi1> to vector<8x1xi1>
    %384 = vector.broadcast %383 : vector<8x1xi1> to vector<8x16xi1>
    %385 = arith.select %384, %330, %292 : vector<8x16xi1>, vector<8x16xf32>
    %386 = vector.shape_cast %366 : vector<8x1xi1> to vector<8x1xi1>
    %387 = vector.broadcast %386 : vector<8x1xi1> to vector<8x16xi1>
    %388 = arith.select %387, %362, %295 : vector<8x16xi1>, vector<8x16xf32>
    %c4_i32 = arith.constant 4 : i32
    %c7_i32_95 = arith.constant 7 : i32
    %389 = arith.subi %c7_i32_95, %c4_i32 : i32
    %cst_96 = arith.constant dense<0.000000e+00> : vector<8x48xf32>
    %390 = tpu.matmul %385, %14, %cst_96 {dimension_numbers = #tpu.dot_dimension_numbers<[1], [0], [0], [1], [0, 0, 1, 1], [], []>} : vector<8x16xf32>, vector<16x48xf32>, vector<8x48xf32> -> vector<8x48xf32>
    %cst_97 = arith.constant dense<0.000000e+00> : vector<8x48xf32>
    %391 = tpu.matmul %388, %15, %cst_97 {dimension_numbers = #tpu.dot_dimension_numbers<[1], [0], [0], [1], [0, 0, 1, 1], [], []>} : vector<8x16xf32>, vector<16x48xf32>, vector<8x48xf32> -> vector<8x48xf32>
    %392 = arith.index_cast %c4_i32 : i32 to index
    %c0_98 = arith.constant 0 : index
    %c0_99 = arith.constant 0 : index
    %393 = vector.load %arg12[%392, %c0_98, %c0_99] : memref<8x8x48xf32, #tpu.memory_space<vmem>>, vector<1x8x48xf32>
    %394 = vector.shape_cast %393 : vector<1x8x48xf32> to vector<8x48xf32>
    %395 = vector.extract_strided_slice %13 {offsets = [0, 0], sizes = [1, 16], strides = [1, 1]} : vector<1x32xf32> to vector<1x16xf32>
    %396 = vector.extract_strided_slice %394 {offsets = [0, 0], sizes = [8, 16], strides = [1, 1]} : vector<8x48xf32> to vector<8x16xf32>
    %397 = vector.extract_strided_slice %390 {offsets = [0, 0], sizes = [8, 16], strides = [1, 1]} : vector<8x48xf32> to vector<8x16xf32>
    %398 = arith.addf %396, %397 : vector<8x16xf32>
    %399 = arith.negf %398 : vector<8x16xf32>
    %400 = math.exp %399 : vector<8x16xf32>
    %cst_100 = arith.constant 1.000000e+00 : f32
    %401 = vector.broadcast %cst_100 : f32 to vector<8x16xf32>
    %402 = arith.addf %401, %400 : vector<8x16xf32>
    %403 = arith.divf %401, %402 : vector<8x16xf32>
    %404 = vector.extract_strided_slice %394 {offsets = [0, 16], sizes = [8, 16], strides = [1, 1]} : vector<8x48xf32> to vector<8x16xf32>
    %405 = vector.extract_strided_slice %390 {offsets = [0, 16], sizes = [8, 16], strides = [1, 1]} : vector<8x48xf32> to vector<8x16xf32>
    %406 = arith.addf %404, %405 : vector<8x16xf32>
    %407 = arith.negf %406 : vector<8x16xf32>
    %408 = math.exp %407 : vector<8x16xf32>
    %cst_101 = arith.constant 1.000000e+00 : f32
    %409 = vector.broadcast %cst_101 : f32 to vector<8x16xf32>
    %410 = arith.addf %409, %408 : vector<8x16xf32>
    %411 = arith.divf %409, %410 : vector<8x16xf32>
    %412 = vector.extract_strided_slice %394 {offsets = [0, 32], sizes = [8, 16], strides = [1, 1]} : vector<8x48xf32> to vector<8x16xf32>
    %413 = vector.extract_strided_slice %390 {offsets = [0, 32], sizes = [8, 16], strides = [1, 1]} : vector<8x48xf32> to vector<8x16xf32>
    %414 = vector.broadcast %395 : vector<1x16xf32> to vector<8x16xf32>
    %415 = arith.addf %413, %414 : vector<8x16xf32>
    %416 = arith.mulf %403, %415 : vector<8x16xf32>
    %417 = arith.addf %412, %416 : vector<8x16xf32>
    %418 = math.tanh %417 : vector<8x16xf32>
    %cst_102 = arith.constant 1.000000e+00 : f32
    %419 = vector.broadcast %cst_102 : f32 to vector<8x16xf32>
    %420 = arith.subf %419, %411 : vector<8x16xf32>
    %421 = arith.mulf %420, %418 : vector<8x16xf32>
    %422 = arith.mulf %411, %385 : vector<8x16xf32>
    %423 = arith.addf %421, %422 : vector<8x16xf32>
    %424 = arith.index_cast %389 : i32 to index
    %c0_103 = arith.constant 0 : index
    %c0_104 = arith.constant 0 : index
    %425 = vector.load %arg13[%424, %c0_103, %c0_104] : memref<8x8x48xf32, #tpu.memory_space<vmem>>, vector<1x8x48xf32>
    %426 = vector.shape_cast %425 : vector<1x8x48xf32> to vector<8x48xf32>
    %427 = vector.extract_strided_slice %13 {offsets = [0, 16], sizes = [1, 16], strides = [1, 1]} : vector<1x32xf32> to vector<1x16xf32>
    %428 = vector.extract_strided_slice %426 {offsets = [0, 0], sizes = [8, 16], strides = [1, 1]} : vector<8x48xf32> to vector<8x16xf32>
    %429 = vector.extract_strided_slice %391 {offsets = [0, 0], sizes = [8, 16], strides = [1, 1]} : vector<8x48xf32> to vector<8x16xf32>
    %430 = arith.addf %428, %429 : vector<8x16xf32>
    %431 = arith.negf %430 : vector<8x16xf32>
    %432 = math.exp %431 : vector<8x16xf32>
    %cst_105 = arith.constant 1.000000e+00 : f32
    %433 = vector.broadcast %cst_105 : f32 to vector<8x16xf32>
    %434 = arith.addf %433, %432 : vector<8x16xf32>
    %435 = arith.divf %433, %434 : vector<8x16xf32>
    %436 = vector.extract_strided_slice %426 {offsets = [0, 16], sizes = [8, 16], strides = [1, 1]} : vector<8x48xf32> to vector<8x16xf32>
    %437 = vector.extract_strided_slice %391 {offsets = [0, 16], sizes = [8, 16], strides = [1, 1]} : vector<8x48xf32> to vector<8x16xf32>
    %438 = arith.addf %436, %437 : vector<8x16xf32>
    %439 = arith.negf %438 : vector<8x16xf32>
    %440 = math.exp %439 : vector<8x16xf32>
    %cst_106 = arith.constant 1.000000e+00 : f32
    %441 = vector.broadcast %cst_106 : f32 to vector<8x16xf32>
    %442 = arith.addf %441, %440 : vector<8x16xf32>
    %443 = arith.divf %441, %442 : vector<8x16xf32>
    %444 = vector.extract_strided_slice %426 {offsets = [0, 32], sizes = [8, 16], strides = [1, 1]} : vector<8x48xf32> to vector<8x16xf32>
    %445 = vector.extract_strided_slice %391 {offsets = [0, 32], sizes = [8, 16], strides = [1, 1]} : vector<8x48xf32> to vector<8x16xf32>
    %446 = vector.broadcast %427 : vector<1x16xf32> to vector<8x16xf32>
    %447 = arith.addf %445, %446 : vector<8x16xf32>
    %448 = arith.mulf %435, %447 : vector<8x16xf32>
    %449 = arith.addf %444, %448 : vector<8x16xf32>
    %450 = math.tanh %449 : vector<8x16xf32>
    %cst_107 = arith.constant 1.000000e+00 : f32
    %451 = vector.broadcast %cst_107 : f32 to vector<8x16xf32>
    %452 = arith.subf %451, %443 : vector<8x16xf32>
    %453 = arith.mulf %452, %450 : vector<8x16xf32>
    %454 = arith.mulf %443, %388 : vector<8x16xf32>
    %455 = arith.addf %453, %454 : vector<8x16xf32>
    %456 = vector.broadcast %c4_i32 : i32 to vector<8x1xi32>
    %457 = arith.cmpi sgt, %12, %456 : vector<8x1xi32>
    %458 = vector.broadcast %389 : i32 to vector<8x1xi32>
    %459 = arith.cmpi sgt, %12, %458 : vector<8x1xi32>
    %cst_108 = arith.constant 0.000000e+00 : f32
    %460 = vector.shape_cast %457 : vector<8x1xi1> to vector<8x1xi1>
    %461 = vector.broadcast %460 : vector<8x1xi1> to vector<8x16xi1>
    %462 = vector.broadcast %cst_108 : f32 to vector<8x16xf32>
    %463 = arith.select %461, %423, %462 : vector<8x16xi1>, vector<8x16xf32>
    %464 = arith.index_cast %c4_i32 : i32 to index
    %c0_109 = arith.constant 0 : index
    %c0_110 = arith.constant 0 : index
    %465 = vector.load %arg14[%464, %c0_109, %c0_110] : memref<8x8x16xf32, #tpu.memory_space<vmem>>, vector<1x8x16xf32>
    %466 = vector.shape_cast %465 : vector<1x8x16xf32> to vector<8x16xf32>
    %467 = vector.shape_cast %463 : vector<8x16xf32> to vector<1x8x16xf32>
    tpu.vector_store %arg14[%464, %c0_109, %c0_110], %467 {strides = array<i32>} : memref<8x8x16xf32, #tpu.memory_space<vmem>>, vector<1x8x16xf32>,
    %cst_111 = arith.constant 0.000000e+00 : f32
    %468 = vector.shape_cast %459 : vector<8x1xi1> to vector<8x1xi1>
    %469 = vector.broadcast %468 : vector<8x1xi1> to vector<8x16xi1>
    %470 = vector.broadcast %cst_111 : f32 to vector<8x16xf32>
    %471 = arith.select %469, %455, %470 : vector<8x16xi1>, vector<8x16xf32>
    %472 = arith.index_cast %389 : i32 to index
    %c0_112 = arith.constant 0 : index
    %c0_113 = arith.constant 0 : index
    %473 = vector.load %arg15[%472, %c0_112, %c0_113] : memref<8x8x16xf32, #tpu.memory_space<vmem>>, vector<1x8x16xf32>
    %474 = vector.shape_cast %473 : vector<1x8x16xf32> to vector<8x16xf32>
    %475 = vector.shape_cast %471 : vector<8x16xf32> to vector<1x8x16xf32>
    tpu.vector_store %arg15[%472, %c0_112, %c0_113], %475 {strides = array<i32>} : memref<8x8x16xf32, #tpu.memory_space<vmem>>, vector<1x8x16xf32>,
    %476 = vector.shape_cast %457 : vector<8x1xi1> to vector<8x1xi1>
    %477 = vector.broadcast %476 : vector<8x1xi1> to vector<8x16xi1>
    %478 = arith.select %477, %423, %385 : vector<8x16xi1>, vector<8x16xf32>
    %479 = vector.shape_cast %459 : vector<8x1xi1> to vector<8x1xi1>
    %480 = vector.broadcast %479 : vector<8x1xi1> to vector<8x16xi1>
    %481 = arith.select %480, %455, %388 : vector<8x16xi1>, vector<8x16xf32>
    %c5_i32 = arith.constant 5 : i32
    %c7_i32_114 = arith.constant 7 : i32
    %482 = arith.subi %c7_i32_114, %c5_i32 : i32
    %cst_115 = arith.constant dense<0.000000e+00> : vector<8x48xf32>
    %483 = tpu.matmul %478, %14, %cst_115 {dimension_numbers = #tpu.dot_dimension_numbers<[1], [0], [0], [1], [0, 0, 1, 1], [], []>} : vector<8x16xf32>, vector<16x48xf32>, vector<8x48xf32> -> vector<8x48xf32>
    %cst_116 = arith.constant dense<0.000000e+00> : vector<8x48xf32>
    %484 = tpu.matmul %481, %15, %cst_116 {dimension_numbers = #tpu.dot_dimension_numbers<[1], [0], [0], [1], [0, 0, 1, 1], [], []>} : vector<8x16xf32>, vector<16x48xf32>, vector<8x48xf32> -> vector<8x48xf32>
    %485 = arith.index_cast %c5_i32 : i32 to index
    %c0_117 = arith.constant 0 : index
    %c0_118 = arith.constant 0 : index
    %486 = vector.load %arg12[%485, %c0_117, %c0_118] : memref<8x8x48xf32, #tpu.memory_space<vmem>>, vector<1x8x48xf32>
    %487 = vector.shape_cast %486 : vector<1x8x48xf32> to vector<8x48xf32>
    %488 = vector.extract_strided_slice %13 {offsets = [0, 0], sizes = [1, 16], strides = [1, 1]} : vector<1x32xf32> to vector<1x16xf32>
    %489 = vector.extract_strided_slice %487 {offsets = [0, 0], sizes = [8, 16], strides = [1, 1]} : vector<8x48xf32> to vector<8x16xf32>
    %490 = vector.extract_strided_slice %483 {offsets = [0, 0], sizes = [8, 16], strides = [1, 1]} : vector<8x48xf32> to vector<8x16xf32>
    %491 = arith.addf %489, %490 : vector<8x16xf32>
    %492 = arith.negf %491 : vector<8x16xf32>
    %493 = math.exp %492 : vector<8x16xf32>
    %cst_119 = arith.constant 1.000000e+00 : f32
    %494 = vector.broadcast %cst_119 : f32 to vector<8x16xf32>
    %495 = arith.addf %494, %493 : vector<8x16xf32>
    %496 = arith.divf %494, %495 : vector<8x16xf32>
    %497 = vector.extract_strided_slice %487 {offsets = [0, 16], sizes = [8, 16], strides = [1, 1]} : vector<8x48xf32> to vector<8x16xf32>
    %498 = vector.extract_strided_slice %483 {offsets = [0, 16], sizes = [8, 16], strides = [1, 1]} : vector<8x48xf32> to vector<8x16xf32>
    %499 = arith.addf %497, %498 : vector<8x16xf32>
    %500 = arith.negf %499 : vector<8x16xf32>
    %501 = math.exp %500 : vector<8x16xf32>
    %cst_120 = arith.constant 1.000000e+00 : f32
    %502 = vector.broadcast %cst_120 : f32 to vector<8x16xf32>
    %503 = arith.addf %502, %501 : vector<8x16xf32>
    %504 = arith.divf %502, %503 : vector<8x16xf32>
    %505 = vector.extract_strided_slice %487 {offsets = [0, 32], sizes = [8, 16], strides = [1, 1]} : vector<8x48xf32> to vector<8x16xf32>
    %506 = vector.extract_strided_slice %483 {offsets = [0, 32], sizes = [8, 16], strides = [1, 1]} : vector<8x48xf32> to vector<8x16xf32>
    %507 = vector.broadcast %488 : vector<1x16xf32> to vector<8x16xf32>
    %508 = arith.addf %506, %507 : vector<8x16xf32>
    %509 = arith.mulf %496, %508 : vector<8x16xf32>
    %510 = arith.addf %505, %509 : vector<8x16xf32>
    %511 = math.tanh %510 : vector<8x16xf32>
    %cst_121 = arith.constant 1.000000e+00 : f32
    %512 = vector.broadcast %cst_121 : f32 to vector<8x16xf32>
    %513 = arith.subf %512, %504 : vector<8x16xf32>
    %514 = arith.mulf %513, %511 : vector<8x16xf32>
    %515 = arith.mulf %504, %478 : vector<8x16xf32>
    %516 = arith.addf %514, %515 : vector<8x16xf32>
    %517 = arith.index_cast %482 : i32 to index
    %c0_122 = arith.constant 0 : index
    %c0_123 = arith.constant 0 : index
    %518 = vector.load %arg13[%517, %c0_122, %c0_123] : memref<8x8x48xf32, #tpu.memory_space<vmem>>, vector<1x8x48xf32>
    %519 = vector.shape_cast %518 : vector<1x8x48xf32> to vector<8x48xf32>
    %520 = vector.extract_strided_slice %13 {offsets = [0, 16], sizes = [1, 16], strides = [1, 1]} : vector<1x32xf32> to vector<1x16xf32>
    %521 = vector.extract_strided_slice %519 {offsets = [0, 0], sizes = [8, 16], strides = [1, 1]} : vector<8x48xf32> to vector<8x16xf32>
    %522 = vector.extract_strided_slice %484 {offsets = [0, 0], sizes = [8, 16], strides = [1, 1]} : vector<8x48xf32> to vector<8x16xf32>
    %523 = arith.addf %521, %522 : vector<8x16xf32>
    %524 = arith.negf %523 : vector<8x16xf32>
    %525 = math.exp %524 : vector<8x16xf32>
    %cst_124 = arith.constant 1.000000e+00 : f32
    %526 = vector.broadcast %cst_124 : f32 to vector<8x16xf32>
    %527 = arith.addf %526, %525 : vector<8x16xf32>
    %528 = arith.divf %526, %527 : vector<8x16xf32>
    %529 = vector.extract_strided_slice %519 {offsets = [0, 16], sizes = [8, 16], strides = [1, 1]} : vector<8x48xf32> to vector<8x16xf32>
    %530 = vector.extract_strided_slice %484 {offsets = [0, 16], sizes = [8, 16], strides = [1, 1]} : vector<8x48xf32> to vector<8x16xf32>
    %531 = arith.addf %529, %530 : vector<8x16xf32>
    %532 = arith.negf %531 : vector<8x16xf32>
    %533 = math.exp %532 : vector<8x16xf32>
    %cst_125 = arith.constant 1.000000e+00 : f32
    %534 = vector.broadcast %cst_125 : f32 to vector<8x16xf32>
    %535 = arith.addf %534, %533 : vector<8x16xf32>
    %536 = arith.divf %534, %535 : vector<8x16xf32>
    %537 = vector.extract_strided_slice %519 {offsets = [0, 32], sizes = [8, 16], strides = [1, 1]} : vector<8x48xf32> to vector<8x16xf32>
    %538 = vector.extract_strided_slice %484 {offsets = [0, 32], sizes = [8, 16], strides = [1, 1]} : vector<8x48xf32> to vector<8x16xf32>
    %539 = vector.broadcast %520 : vector<1x16xf32> to vector<8x16xf32>
    %540 = arith.addf %538, %539 : vector<8x16xf32>
    %541 = arith.mulf %528, %540 : vector<8x16xf32>
    %542 = arith.addf %537, %541 : vector<8x16xf32>
    %543 = math.tanh %542 : vector<8x16xf32>
    %cst_126 = arith.constant 1.000000e+00 : f32
    %544 = vector.broadcast %cst_126 : f32 to vector<8x16xf32>
    %545 = arith.subf %544, %536 : vector<8x16xf32>
    %546 = arith.mulf %545, %543 : vector<8x16xf32>
    %547 = arith.mulf %536, %481 : vector<8x16xf32>
    %548 = arith.addf %546, %547 : vector<8x16xf32>
    %549 = vector.broadcast %c5_i32 : i32 to vector<8x1xi32>
    %550 = arith.cmpi sgt, %12, %549 : vector<8x1xi32>
    %551 = vector.broadcast %482 : i32 to vector<8x1xi32>
    %552 = arith.cmpi sgt, %12, %551 : vector<8x1xi32>
    %cst_127 = arith.constant 0.000000e+00 : f32
    %553 = vector.shape_cast %550 : vector<8x1xi1> to vector<8x1xi1>
    %554 = vector.broadcast %553 : vector<8x1xi1> to vector<8x16xi1>
    %555 = vector.broadcast %cst_127 : f32 to vector<8x16xf32>
    %556 = arith.select %554, %516, %555 : vector<8x16xi1>, vector<8x16xf32>
    %557 = arith.index_cast %c5_i32 : i32 to index
    %c0_128 = arith.constant 0 : index
    %c0_129 = arith.constant 0 : index
    %558 = vector.load %arg14[%557, %c0_128, %c0_129] : memref<8x8x16xf32, #tpu.memory_space<vmem>>, vector<1x8x16xf32>
    %559 = vector.shape_cast %558 : vector<1x8x16xf32> to vector<8x16xf32>
    %560 = vector.shape_cast %556 : vector<8x16xf32> to vector<1x8x16xf32>
    tpu.vector_store %arg14[%557, %c0_128, %c0_129], %560 {strides = array<i32>} : memref<8x8x16xf32, #tpu.memory_space<vmem>>, vector<1x8x16xf32>,
    %cst_130 = arith.constant 0.000000e+00 : f32
    %561 = vector.shape_cast %552 : vector<8x1xi1> to vector<8x1xi1>
    %562 = vector.broadcast %561 : vector<8x1xi1> to vector<8x16xi1>
    %563 = vector.broadcast %cst_130 : f32 to vector<8x16xf32>
    %564 = arith.select %562, %548, %563 : vector<8x16xi1>, vector<8x16xf32>
    %565 = arith.index_cast %482 : i32 to index
    %c0_131 = arith.constant 0 : index
    %c0_132 = arith.constant 0 : index
    %566 = vector.load %arg15[%565, %c0_131, %c0_132] : memref<8x8x16xf32, #tpu.memory_space<vmem>>, vector<1x8x16xf32>
    %567 = vector.shape_cast %566 : vector<1x8x16xf32> to vector<8x16xf32>
    %568 = vector.shape_cast %564 : vector<8x16xf32> to vector<1x8x16xf32>
    tpu.vector_store %arg15[%565, %c0_131, %c0_132], %568 {strides = array<i32>} : memref<8x8x16xf32, #tpu.memory_space<vmem>>, vector<1x8x16xf32>,
    %569 = vector.shape_cast %550 : vector<8x1xi1> to vector<8x1xi1>
    %570 = vector.broadcast %569 : vector<8x1xi1> to vector<8x16xi1>
    %571 = arith.select %570, %516, %478 : vector<8x16xi1>, vector<8x16xf32>
    %572 = vector.shape_cast %552 : vector<8x1xi1> to vector<8x1xi1>
    %573 = vector.broadcast %572 : vector<8x1xi1> to vector<8x16xi1>
    %574 = arith.select %573, %548, %481 : vector<8x16xi1>, vector<8x16xf32>
    %c6_i32 = arith.constant 6 : i32
    %c7_i32_133 = arith.constant 7 : i32
    %575 = arith.subi %c7_i32_133, %c6_i32 : i32
    %cst_134 = arith.constant dense<0.000000e+00> : vector<8x48xf32>
    %576 = tpu.matmul %571, %14, %cst_134 {dimension_numbers = #tpu.dot_dimension_numbers<[1], [0], [0], [1], [0, 0, 1, 1], [], []>} : vector<8x16xf32>, vector<16x48xf32>, vector<8x48xf32> -> vector<8x48xf32>
    %cst_135 = arith.constant dense<0.000000e+00> : vector<8x48xf32>
    %577 = tpu.matmul %574, %15, %cst_135 {dimension_numbers = #tpu.dot_dimension_numbers<[1], [0], [0], [1], [0, 0, 1, 1], [], []>} : vector<8x16xf32>, vector<16x48xf32>, vector<8x48xf32> -> vector<8x48xf32>
    %578 = arith.index_cast %c6_i32 : i32 to index
    %c0_136 = arith.constant 0 : index
    %c0_137 = arith.constant 0 : index
    %579 = vector.load %arg12[%578, %c0_136, %c0_137] : memref<8x8x48xf32, #tpu.memory_space<vmem>>, vector<1x8x48xf32>
    %580 = vector.shape_cast %579 : vector<1x8x48xf32> to vector<8x48xf32>
    %581 = vector.extract_strided_slice %13 {offsets = [0, 0], sizes = [1, 16], strides = [1, 1]} : vector<1x32xf32> to vector<1x16xf32>
    %582 = vector.extract_strided_slice %580 {offsets = [0, 0], sizes = [8, 16], strides = [1, 1]} : vector<8x48xf32> to vector<8x16xf32>
    %583 = vector.extract_strided_slice %576 {offsets = [0, 0], sizes = [8, 16], strides = [1, 1]} : vector<8x48xf32> to vector<8x16xf32>
    %584 = arith.addf %582, %583 : vector<8x16xf32>
    %585 = arith.negf %584 : vector<8x16xf32>
    %586 = math.exp %585 : vector<8x16xf32>
    %cst_138 = arith.constant 1.000000e+00 : f32
    %587 = vector.broadcast %cst_138 : f32 to vector<8x16xf32>
    %588 = arith.addf %587, %586 : vector<8x16xf32>
    %589 = arith.divf %587, %588 : vector<8x16xf32>
    %590 = vector.extract_strided_slice %580 {offsets = [0, 16], sizes = [8, 16], strides = [1, 1]} : vector<8x48xf32> to vector<8x16xf32>
    %591 = vector.extract_strided_slice %576 {offsets = [0, 16], sizes = [8, 16], strides = [1, 1]} : vector<8x48xf32> to vector<8x16xf32>
    %592 = arith.addf %590, %591 : vector<8x16xf32>
    %593 = arith.negf %592 : vector<8x16xf32>
    %594 = math.exp %593 : vector<8x16xf32>
    %cst_139 = arith.constant 1.000000e+00 : f32
    %595 = vector.broadcast %cst_139 : f32 to vector<8x16xf32>
    %596 = arith.addf %595, %594 : vector<8x16xf32>
    %597 = arith.divf %595, %596 : vector<8x16xf32>
    %598 = vector.extract_strided_slice %580 {offsets = [0, 32], sizes = [8, 16], strides = [1, 1]} : vector<8x48xf32> to vector<8x16xf32>
    %599 = vector.extract_strided_slice %576 {offsets = [0, 32], sizes = [8, 16], strides = [1, 1]} : vector<8x48xf32> to vector<8x16xf32>
    %600 = vector.broadcast %581 : vector<1x16xf32> to vector<8x16xf32>
    %601 = arith.addf %599, %600 : vector<8x16xf32>
    %602 = arith.mulf %589, %601 : vector<8x16xf32>
    %603 = arith.addf %598, %602 : vector<8x16xf32>
    %604 = math.tanh %603 : vector<8x16xf32>
    %cst_140 = arith.constant 1.000000e+00 : f32
    %605 = vector.broadcast %cst_140 : f32 to vector<8x16xf32>
    %606 = arith.subf %605, %597 : vector<8x16xf32>
    %607 = arith.mulf %606, %604 : vector<8x16xf32>
    %608 = arith.mulf %597, %571 : vector<8x16xf32>
    %609 = arith.addf %607, %608 : vector<8x16xf32>
    %610 = arith.index_cast %575 : i32 to index
    %c0_141 = arith.constant 0 : index
    %c0_142 = arith.constant 0 : index
    %611 = vector.load %arg13[%610, %c0_141, %c0_142] : memref<8x8x48xf32, #tpu.memory_space<vmem>>, vector<1x8x48xf32>
    %612 = vector.shape_cast %611 : vector<1x8x48xf32> to vector<8x48xf32>
    %613 = vector.extract_strided_slice %13 {offsets = [0, 16], sizes = [1, 16], strides = [1, 1]} : vector<1x32xf32> to vector<1x16xf32>
    %614 = vector.extract_strided_slice %612 {offsets = [0, 0], sizes = [8, 16], strides = [1, 1]} : vector<8x48xf32> to vector<8x16xf32>
    %615 = vector.extract_strided_slice %577 {offsets = [0, 0], sizes = [8, 16], strides = [1, 1]} : vector<8x48xf32> to vector<8x16xf32>
    %616 = arith.addf %614, %615 : vector<8x16xf32>
    %617 = arith.negf %616 : vector<8x16xf32>
    %618 = math.exp %617 : vector<8x16xf32>
    %cst_143 = arith.constant 1.000000e+00 : f32
    %619 = vector.broadcast %cst_143 : f32 to vector<8x16xf32>
    %620 = arith.addf %619, %618 : vector<8x16xf32>
    %621 = arith.divf %619, %620 : vector<8x16xf32>
    %622 = vector.extract_strided_slice %612 {offsets = [0, 16], sizes = [8, 16], strides = [1, 1]} : vector<8x48xf32> to vector<8x16xf32>
    %623 = vector.extract_strided_slice %577 {offsets = [0, 16], sizes = [8, 16], strides = [1, 1]} : vector<8x48xf32> to vector<8x16xf32>
    %624 = arith.addf %622, %623 : vector<8x16xf32>
    %625 = arith.negf %624 : vector<8x16xf32>
    %626 = math.exp %625 : vector<8x16xf32>
    %cst_144 = arith.constant 1.000000e+00 : f32
    %627 = vector.broadcast %cst_144 : f32 to vector<8x16xf32>
    %628 = arith.addf %627, %626 : vector<8x16xf32>
    %629 = arith.divf %627, %628 : vector<8x16xf32>
    %630 = vector.extract_strided_slice %612 {offsets = [0, 32], sizes = [8, 16], strides = [1, 1]} : vector<8x48xf32> to vector<8x16xf32>
    %631 = vector.extract_strided_slice %577 {offsets = [0, 32], sizes = [8, 16], strides = [1, 1]} : vector<8x48xf32> to vector<8x16xf32>
    %632 = vector.broadcast %613 : vector<1x16xf32> to vector<8x16xf32>
    %633 = arith.addf %631, %632 : vector<8x16xf32>
    %634 = arith.mulf %621, %633 : vector<8x16xf32>
    %635 = arith.addf %630, %634 : vector<8x16xf32>
    %636 = math.tanh %635 : vector<8x16xf32>
    %cst_145 = arith.constant 1.000000e+00 : f32
    %637 = vector.broadcast %cst_145 : f32 to vector<8x16xf32>
    %638 = arith.subf %637, %629 : vector<8x16xf32>
    %639 = arith.mulf %638, %636 : vector<8x16xf32>
    %640 = arith.mulf %629, %574 : vector<8x16xf32>
    %641 = arith.addf %639, %640 : vector<8x16xf32>
    %642 = vector.broadcast %c6_i32 : i32 to vector<8x1xi32>
    %643 = arith.cmpi sgt, %12, %642 : vector<8x1xi32>
    %644 = vector.broadcast %575 : i32 to vector<8x1xi32>
    %645 = arith.cmpi sgt, %12, %644 : vector<8x1xi32>
    %cst_146 = arith.constant 0.000000e+00 : f32
    %646 = vector.shape_cast %643 : vector<8x1xi1> to vector<8x1xi1>
    %647 = vector.broadcast %646 : vector<8x1xi1> to vector<8x16xi1>
    %648 = vector.broadcast %cst_146 : f32 to vector<8x16xf32>
    %649 = arith.select %647, %609, %648 : vector<8x16xi1>, vector<8x16xf32>
    %650 = arith.index_cast %c6_i32 : i32 to index
    %c0_147 = arith.constant 0 : index
    %c0_148 = arith.constant 0 : index
    %651 = vector.load %arg14[%650, %c0_147, %c0_148] : memref<8x8x16xf32, #tpu.memory_space<vmem>>, vector<1x8x16xf32>
    %652 = vector.shape_cast %651 : vector<1x8x16xf32> to vector<8x16xf32>
    %653 = vector.shape_cast %649 : vector<8x16xf32> to vector<1x8x16xf32>
    tpu.vector_store %arg14[%650, %c0_147, %c0_148], %653 {strides = array<i32>} : memref<8x8x16xf32, #tpu.memory_space<vmem>>, vector<1x8x16xf32>,
    %cst_149 = arith.constant 0.000000e+00 : f32
    %654 = vector.shape_cast %645 : vector<8x1xi1> to vector<8x1xi1>
    %655 = vector.broadcast %654 : vector<8x1xi1> to vector<8x16xi1>
    %656 = vector.broadcast %cst_149 : f32 to vector<8x16xf32>
    %657 = arith.select %655, %641, %656 : vector<8x16xi1>, vector<8x16xf32>
    %658 = arith.index_cast %575 : i32 to index
    %c0_150 = arith.constant 0 : index
    %c0_151 = arith.constant 0 : index
    %659 = vector.load %arg15[%658, %c0_150, %c0_151] : memref<8x8x16xf32, #tpu.memory_space<vmem>>, vector<1x8x16xf32>
    %660 = vector.shape_cast %659 : vector<1x8x16xf32> to vector<8x16xf32>
    %661 = vector.shape_cast %657 : vector<8x16xf32> to vector<1x8x16xf32>
    tpu.vector_store %arg15[%658, %c0_150, %c0_151], %661 {strides = array<i32>} : memref<8x8x16xf32, #tpu.memory_space<vmem>>, vector<1x8x16xf32>,
    %662 = vector.shape_cast %643 : vector<8x1xi1> to vector<8x1xi1>
    %663 = vector.broadcast %662 : vector<8x1xi1> to vector<8x16xi1>
    %664 = arith.select %663, %609, %571 : vector<8x16xi1>, vector<8x16xf32>
    %665 = vector.shape_cast %645 : vector<8x1xi1> to vector<8x1xi1>
    %666 = vector.broadcast %665 : vector<8x1xi1> to vector<8x16xi1>
    %667 = arith.select %666, %641, %574 : vector<8x16xi1>, vector<8x16xf32>
    %c7_i32_152 = arith.constant 7 : i32
    %c7_i32_153 = arith.constant 7 : i32
    %668 = arith.subi %c7_i32_153, %c7_i32_152 : i32
    %cst_154 = arith.constant dense<0.000000e+00> : vector<8x48xf32>
    %669 = tpu.matmul %664, %14, %cst_154 {dimension_numbers = #tpu.dot_dimension_numbers<[1], [0], [0], [1], [0, 0, 1, 1], [], []>} : vector<8x16xf32>, vector<16x48xf32>, vector<8x48xf32> -> vector<8x48xf32>
    %cst_155 = arith.constant dense<0.000000e+00> : vector<8x48xf32>
    %670 = tpu.matmul %667, %15, %cst_155 {dimension_numbers = #tpu.dot_dimension_numbers<[1], [0], [0], [1], [0, 0, 1, 1], [], []>} : vector<8x16xf32>, vector<16x48xf32>, vector<8x48xf32> -> vector<8x48xf32>
    %671 = arith.index_cast %c7_i32_152 : i32 to index
    %c0_156 = arith.constant 0 : index
    %c0_157 = arith.constant 0 : index
    %672 = vector.load %arg12[%671, %c0_156, %c0_157] : memref<8x8x48xf32, #tpu.memory_space<vmem>>, vector<1x8x48xf32>
    %673 = vector.shape_cast %672 : vector<1x8x48xf32> to vector<8x48xf32>
    %674 = vector.extract_strided_slice %13 {offsets = [0, 0], sizes = [1, 16], strides = [1, 1]} : vector<1x32xf32> to vector<1x16xf32>
    %675 = vector.extract_strided_slice %673 {offsets = [0, 0], sizes = [8, 16], strides = [1, 1]} : vector<8x48xf32> to vector<8x16xf32>
    %676 = vector.extract_strided_slice %669 {offsets = [0, 0], sizes = [8, 16], strides = [1, 1]} : vector<8x48xf32> to vector<8x16xf32>
    %677 = arith.addf %675, %676 : vector<8x16xf32>
    %678 = arith.negf %677 : vector<8x16xf32>
    %679 = math.exp %678 : vector<8x16xf32>
    %cst_158 = arith.constant 1.000000e+00 : f32
    %680 = vector.broadcast %cst_158 : f32 to vector<8x16xf32>
    %681 = arith.addf %680, %679 : vector<8x16xf32>
    %682 = arith.divf %680, %681 : vector<8x16xf32>
    %683 = vector.extract_strided_slice %673 {offsets = [0, 16], sizes = [8, 16], strides = [1, 1]} : vector<8x48xf32> to vector<8x16xf32>
    %684 = vector.extract_strided_slice %669 {offsets = [0, 16], sizes = [8, 16], strides = [1, 1]} : vector<8x48xf32> to vector<8x16xf32>
    %685 = arith.addf %683, %684 : vector<8x16xf32>
    %686 = arith.negf %685 : vector<8x16xf32>
    %687 = math.exp %686 : vector<8x16xf32>
    %cst_159 = arith.constant 1.000000e+00 : f32
    %688 = vector.broadcast %cst_159 : f32 to vector<8x16xf32>
    %689 = arith.addf %688, %687 : vector<8x16xf32>
    %690 = arith.divf %688, %689 : vector<8x16xf32>
    %691 = vector.extract_strided_slice %673 {offsets = [0, 32], sizes = [8, 16], strides = [1, 1]} : vector<8x48xf32> to vector<8x16xf32>
    %692 = vector.extract_strided_slice %669 {offsets = [0, 32], sizes = [8, 16], strides = [1, 1]} : vector<8x48xf32> to vector<8x16xf32>
    %693 = vector.broadcast %674 : vector<1x16xf32> to vector<8x16xf32>
    %694 = arith.addf %692, %693 : vector<8x16xf32>
    %695 = arith.mulf %682, %694 : vector<8x16xf32>
    %696 = arith.addf %691, %695 : vector<8x16xf32>
    %697 = math.tanh %696 : vector<8x16xf32>
    %cst_160 = arith.constant 1.000000e+00 : f32
    %698 = vector.broadcast %cst_160 : f32 to vector<8x16xf32>
    %699 = arith.subf %698, %690 : vector<8x16xf32>
    %700 = arith.mulf %699, %697 : vector<8x16xf32>
    %701 = arith.mulf %690, %664 : vector<8x16xf32>
    %702 = arith.addf %700, %701 : vector<8x16xf32>
    %703 = arith.index_cast %668 : i32 to index
    %c0_161 = arith.constant 0 : index
    %c0_162 = arith.constant 0 : index
    %704 = vector.load %arg13[%703, %c0_161, %c0_162] : memref<8x8x48xf32, #tpu.memory_space<vmem>>, vector<1x8x48xf32>
    %705 = vector.shape_cast %704 : vector<1x8x48xf32> to vector<8x48xf32>
    %706 = vector.extract_strided_slice %13 {offsets = [0, 16], sizes = [1, 16], strides = [1, 1]} : vector<1x32xf32> to vector<1x16xf32>
    %707 = vector.extract_strided_slice %705 {offsets = [0, 0], sizes = [8, 16], strides = [1, 1]} : vector<8x48xf32> to vector<8x16xf32>
    %708 = vector.extract_strided_slice %670 {offsets = [0, 0], sizes = [8, 16], strides = [1, 1]} : vector<8x48xf32> to vector<8x16xf32>
    %709 = arith.addf %707, %708 : vector<8x16xf32>
    %710 = arith.negf %709 : vector<8x16xf32>
    %711 = math.exp %710 : vector<8x16xf32>
    %cst_163 = arith.constant 1.000000e+00 : f32
    %712 = vector.broadcast %cst_163 : f32 to vector<8x16xf32>
    %713 = arith.addf %712, %711 : vector<8x16xf32>
    %714 = arith.divf %712, %713 : vector<8x16xf32>
    %715 = vector.extract_strided_slice %705 {offsets = [0, 16], sizes = [8, 16], strides = [1, 1]} : vector<8x48xf32> to vector<8x16xf32>
    %716 = vector.extract_strided_slice %670 {offsets = [0, 16], sizes = [8, 16], strides = [1, 1]} : vector<8x48xf32> to vector<8x16xf32>
    %717 = arith.addf %715, %716 : vector<8x16xf32>
    %718 = arith.negf %717 : vector<8x16xf32>
    %719 = math.exp %718 : vector<8x16xf32>
    %cst_164 = arith.constant 1.000000e+00 : f32
    %720 = vector.broadcast %cst_164 : f32 to vector<8x16xf32>
    %721 = arith.addf %720, %719 : vector<8x16xf32>
    %722 = arith.divf %720, %721 : vector<8x16xf32>
    %723 = vector.extract_strided_slice %705 {offsets = [0, 32], sizes = [8, 16], strides = [1, 1]} : vector<8x48xf32> to vector<8x16xf32>
    %724 = vector.extract_strided_slice %670 {offsets = [0, 32], sizes = [8, 16], strides = [1, 1]} : vector<8x48xf32> to vector<8x16xf32>
    %725 = vector.broadcast %706 : vector<1x16xf32> to vector<8x16xf32>
    %726 = arith.addf %724, %725 : vector<8x16xf32>
    %727 = arith.mulf %714, %726 : vector<8x16xf32>
    %728 = arith.addf %723, %727 : vector<8x16xf32>
    %729 = math.tanh %728 : vector<8x16xf32>
    %cst_165 = arith.constant 1.000000e+00 : f32
    %730 = vector.broadcast %cst_165 : f32 to vector<8x16xf32>
    %731 = arith.subf %730, %722 : vector<8x16xf32>
    %732 = arith.mulf %731, %729 : vector<8x16xf32>
    %733 = arith.mulf %722, %667 : vector<8x16xf32>
    %734 = arith.addf %732, %733 : vector<8x16xf32>
    %735 = vector.broadcast %c7_i32_152 : i32 to vector<8x1xi32>
    %736 = arith.cmpi sgt, %12, %735 : vector<8x1xi32>
    %737 = vector.broadcast %668 : i32 to vector<8x1xi32>
    %738 = arith.cmpi sgt, %12, %737 : vector<8x1xi32>
    %cst_166 = arith.constant 0.000000e+00 : f32
    %739 = vector.shape_cast %736 : vector<8x1xi1> to vector<8x1xi1>
    %740 = vector.broadcast %739 : vector<8x1xi1> to vector<8x16xi1>
    %741 = vector.broadcast %cst_166 : f32 to vector<8x16xf32>
    %742 = arith.select %740, %702, %741 : vector<8x16xi1>, vector<8x16xf32>
    %743 = arith.index_cast %c7_i32_152 : i32 to index
    %c0_167 = arith.constant 0 : index
    %c0_168 = arith.constant 0 : index
    %744 = vector.load %arg14[%743, %c0_167, %c0_168] : memref<8x8x16xf32, #tpu.memory_space<vmem>>, vector<1x8x16xf32>
    %745 = vector.shape_cast %744 : vector<1x8x16xf32> to vector<8x16xf32>
    %746 = vector.shape_cast %742 : vector<8x16xf32> to vector<1x8x16xf32>
    tpu.vector_store %arg14[%743, %c0_167, %c0_168], %746 {strides = array<i32>} : memref<8x8x16xf32, #tpu.memory_space<vmem>>, vector<1x8x16xf32>,
    %cst_169 = arith.constant 0.000000e+00 : f32
    %747 = vector.shape_cast %738 : vector<8x1xi1> to vector<8x1xi1>
    %748 = vector.broadcast %747 : vector<8x1xi1> to vector<8x16xi1>
    %749 = vector.broadcast %cst_169 : f32 to vector<8x16xf32>
    %750 = arith.select %748, %734, %749 : vector<8x16xi1>, vector<8x16xf32>
    %751 = arith.index_cast %668 : i32 to index
    %c0_170 = arith.constant 0 : index
    %c0_171 = arith.constant 0 : index
    %752 = vector.load %arg15[%751, %c0_170, %c0_171] : memref<8x8x16xf32, #tpu.memory_space<vmem>>, vector<1x8x16xf32>
    %753 = vector.shape_cast %752 : vector<1x8x16xf32> to vector<8x16xf32>
    %754 = vector.shape_cast %750 : vector<8x16xf32> to vector<1x8x16xf32>
    tpu.vector_store %arg15[%751, %c0_170, %c0_171], %754 {strides = array<i32>} : memref<8x8x16xf32, #tpu.memory_space<vmem>>, vector<1x8x16xf32>,
    %755 = vector.shape_cast %736 : vector<8x1xi1> to vector<8x1xi1>
    %756 = vector.broadcast %755 : vector<8x1xi1> to vector<8x16xi1>
    %757 = arith.select %756, %702, %664 : vector<8x16xi1>, vector<8x16xf32>
    %758 = vector.shape_cast %738 : vector<8x1xi1> to vector<8x1xi1>
    %759 = vector.broadcast %758 : vector<8x1xi1> to vector<8x16xi1>
    %760 = arith.select %759, %734, %667 : vector<8x16xi1>, vector<8x16xf32>
    %c8_i32 = arith.constant 8 : i32
    %c0_172 = arith.constant 0 : index
    %c0_173 = arith.constant 0 : index
    %c0_174 = arith.constant 0 : index
    %761 = vector.load %arg14[%c0_172, %c0_173, %c0_174] : memref<8x8x16xf32, #tpu.memory_space<vmem>>, vector<8x8x16xf32>
    %c0_175 = arith.constant 0 : index
    %c0_176 = arith.constant 0 : index
    %c0_177 = arith.constant 0 : index
    %762 = vector.load %arg15[%c0_175, %c0_176, %c0_177] : memref<8x8x16xf32, #tpu.memory_space<vmem>>, vector<8x8x16xf32>
    %763 = vector.shape_cast %761 : vector<8x8x16xf32> to vector<64x16xf32>
    %764 = vector.shape_cast %762 : vector<8x8x16xf32> to vector<64x16xf32>
    %c0_178 = arith.constant 0 : index
    %c0_179 = arith.constant 0 : index
    %765 = vector.load %arg8[%c0_178, %c0_179] : memref<32x32xf32, #tpu.memory_space<vmem>>, vector<32x32xf32>
    %766 = vector.extract_strided_slice %765 {offsets = [0, 0], sizes = [16, 32], strides = [1, 1]} : vector<32x32xf32> to vector<16x32xf32>
    %cst_180 = arith.constant dense<0.000000e+00> : vector<64x32xf32>
    %767 = tpu.matmul %763, %766, %cst_180 {dimension_numbers = #tpu.dot_dimension_numbers<[1], [0], [0], [1], [0, 0, 1, 1], [], []>} : vector<64x16xf32>, vector<16x32xf32>, vector<64x32xf32> -> vector<64x32xf32>
    %768 = vector.extract_strided_slice %765 {offsets = [16, 0], sizes = [16, 32], strides = [1, 1]} : vector<32x32xf32> to vector<16x32xf32>
    %cst_181 = arith.constant dense<0.000000e+00> : vector<64x32xf32>
    %769 = tpu.matmul %764, %768, %cst_181 {dimension_numbers = #tpu.dot_dimension_numbers<[1], [0], [0], [1], [0, 0, 1, 1], [], []>} : vector<64x16xf32>, vector<16x32xf32>, vector<64x32xf32> -> vector<64x32xf32>
    %770 = arith.addf %767, %769 : vector<64x32xf32>
    %c0_182 = arith.constant 0 : index
    %c0_183 = arith.constant 0 : index
    %771 = vector.load %arg9[%c0_182, %c0_183] : memref<1x32xf32, #tpu.memory_space<vmem>>, vector<1x32xf32>
    %772 = vector.broadcast %771 : vector<1x32xf32> to vector<64x32xf32>
    %773 = arith.addf %770, %772 : vector<64x32xf32>
    %774 = math.tanh %773 : vector<64x32xf32>
    %c0_184 = arith.constant 0 : index
    %c0_185 = arith.constant 0 : index
    %775 = vector.load %arg10[%c0_184, %c0_185] : memref<32x32xf32, #tpu.memory_space<vmem>>, vector<32x32xf32>
    %cst_186 = arith.constant dense<0.000000e+00> : vector<64x32xf32>
    %776 = tpu.matmul %774, %775, %cst_186 {dimension_numbers = #tpu.dot_dimension_numbers<[1], [0], [0], [1], [0, 0, 1, 1], [], []>} : vector<64x32xf32>, vector<32x32xf32>, vector<64x32xf32> -> vector<64x32xf32>
    %777 = vector.shape_cast %776 : vector<64x32xf32> to vector<8x8x32xf32>
    %c0_187 = arith.constant 0 : index
    %c0_188 = arith.constant 0 : index
    %c0_189 = arith.constant 0 : index
    %778 = vector.load %arg2[%c0_187, %c0_188, %c0_189] : memref<8x8x1xf32, #tpu.memory_space<vmem>>, vector<8x8x1xf32>
    %779 = vector.broadcast %778 : vector<8x8x1xf32> to vector<8x8x32xf32>
    %780 = arith.addf %777, %779 : vector<8x8x32xf32>
    %cst_190 = arith.constant dense<0xFF800000> : vector<8x32xf32>
    %781 = vector.multi_reduction <maximumf>, %780, %cst_190 [0] : vector<8x8x32xf32> to vector<8x32xf32>
    %782 = vector.shape_cast %781 : vector<8x32xf32> to vector<1x8x32xf32>
    %783 = vector.broadcast %782 : vector<1x8x32xf32> to vector<8x8x32xf32>
    %784 = arith.subf %780, %783 : vector<8x8x32xf32>
    %785 = math.exp %784 : vector<8x8x32xf32>
    %cst_191 = arith.constant dense<0.000000e+00> : vector<8x32xf32>
    %786 = vector.multi_reduction <add>, %785, %cst_191 [0] : vector<8x8x32xf32> to vector<8x32xf32>
    %787 = vector.shape_cast %786 : vector<8x32xf32> to vector<1x8x32xf32>
    %788 = vector.broadcast %787 : vector<1x8x32xf32> to vector<8x8x32xf32>
    %789 = arith.divf %785, %788 : vector<8x8x32xf32>
    %790 = vector.extract_strided_slice %789 {offsets = [0, 0, 0], sizes = [8, 8, 16], strides = [1, 1, 1]} : vector<8x8x32xf32> to vector<8x8x16xf32>
    %791 = arith.mulf %790, %761 : vector<8x8x16xf32>
    %cst_192 = arith.constant dense<0.000000e+00> : vector<8x16xf32>
    %792 = vector.multi_reduction <add>, %791, %cst_192 [0] : vector<8x8x16xf32> to vector<8x16xf32>
    %793 = vector.extract_strided_slice %789 {offsets = [0, 0, 16], sizes = [8, 8, 16], strides = [1, 1, 1]} : vector<8x8x32xf32> to vector<8x8x16xf32>
    %794 = arith.mulf %793, %762 : vector<8x8x16xf32>
    %cst_193 = arith.constant dense<0.000000e+00> : vector<8x16xf32>
    %795 = vector.multi_reduction <add>, %794, %cst_193 [0] : vector<8x8x16xf32> to vector<8x16xf32>
    %c0_194 = arith.constant 0 : index
    %c0_195 = arith.constant 0 : index
    %796 = vector.load %arg11[%c0_194, %c0_195] : memref<8x32xf32, #tpu.memory_space<vmem>>, vector<8x16xf32>
    tpu.vector_store %arg11[%c0_194, %c0_195], %792 {strides = array<i32>} : memref<8x32xf32, #tpu.memory_space<vmem>>, vector<8x16xf32>,
    %c0_196 = arith.constant 0 : index
    %c16 = arith.constant 16 : index
    %797 = vector.load %arg11[%c0_196, %c16] : memref<8x32xf32, #tpu.memory_space<vmem>>, vector<8x16xf32>
    tpu.vector_store %arg11[%c0_196, %c16], %795 {strides = array<i32>} : memref<8x32xf32, #tpu.memory_space<vmem>>, vector<8x16xf32>,
    return
  }
}

</mosaic_0001>

<llo_original>
// kernel: _han_apply.3
$region0: #{_han_apply.3}
  #allocation0 [shape = 'u32[]', space=smem, size = 0x4, offset = 0x4, fixed_abs, tag = 'smem constant byte address 0x4 - core index']
  #allocation1 [shape = 'u32[144,128]{1,0:T(1,128)}', space=vmem, size = 0x12000, scoped, tag = 'internal scratch']
  #allocation2 [shape = 'f32[3,8,48]{2,1,0:T(8,128)}', space=vmem, size = 0x3000, scoped, tag = 'scratch operand']
  #allocation3 [shape = 'f32[3,8,48]{2,1,0:T(8,128)}', space=vmem, size = 0x3000, scoped, tag = 'scratch operand']
  #allocation4 [shape = 'f32[3,8,16]{2,1,0:T(8,128)}', space=vmem, size = 0x3000, scoped, tag = 'scratch operand']
  #allocation5 [shape = 'f32[3,8,16]{2,1,0:T(8,128)}', space=vmem, size = 0x3000, scoped, tag = 'scratch operand']
  %s0 = inlined_call_operand.vmem [shape: f32[24,32], index: 0, kind: input, shape index: {}]
  %s1 = inlined_call_operand.vmem [shape: s32[8,1], index: 1, kind: input, shape index: {}]
  %s2 = inlined_call_operand.vmem [shape: f32[3,8,1], index: 2, kind: input, shape index: {}]
  %s3 = inlined_call_operand.vmem [shape: f32[32,96], index: 3, kind: input, shape index: {}]
  %s4 = inlined_call_operand.vmem [shape: f32[1,96], index: 4, kind: input, shape index: {}]
  %s5 = inlined_call_operand.vmem [shape: f32[16,48], index: 5, kind: input, shape index: {}]
  %s6 = inlined_call_operand.vmem [shape: f32[16,48], index: 6, kind: input, shape index: {}]
  %s7 = inlined_call_operand.vmem [shape: f32[1,32], index: 7, kind: input, shape index: {}]
  %s8 = inlined_call_operand.vmem [shape: f32[32,32], index: 8, kind: input, shape index: {}]
  %s9 = inlined_call_operand.vmem [shape: f32[1,32], index: 9, kind: input, shape index: {}]
  %s10 = inlined_call_operand.vmem [shape: f32[32,32], index: 10, kind: input, shape index: {}]
  %s11 = inlined_call_operand.vmem [shape: f32[32,4], index: 11, kind: input, shape index: {}]
  %s12 = inlined_call_operand.vmem [shape: f32[1,4], index: 12, kind: input, shape index: {}]
  %s13 = inlined_call_operand.vmem [shape: f32[8,4], index: 13, kind: output, shape index: {}]
  %s14 = sld [smem:[#allocation0]]
  $region62: #{_han_apply.3} parent=0
    _
  %s16 = ssub.s32 1, %s14
  %s17 = scalar_select 0, %s16, %s14
  // Predicated region
  $region2: #{_han_apply.3} parent=0 // pred_check
    _
  $region3: #{_han_apply.3} parent=0 // pred_check_branch
    %19 = sbr.rel (0) target = $region5
  $region4: #{_han_apply.3} parent=0 // pred_region
    _
  $region5: #{_han_apply.3} parent=0 // pred_fallthru
    _
  // Predicated region
  $region6: #{_han_apply.3} parent=0 // pred_check
    _
  $region7: #{_han_apply.3} parent=0 // pred_check_branch
    %21 = sbr.rel (0) target = $region9
  $region8: #{_han_apply.3} parent=0 // pred_region
    _
  $region9: #{_han_apply.3} parent=0 // pred_fallthru
    _
  // Predicated region
  $region10: #{_han_apply.3} parent=0 // pred_check
    _
  $region11: #{_han_apply.3} parent=0 // pred_check_branch
    %23 = sbr.rel (0) target = $region13
  $region12: #{_han_apply.3} parent=0 // pred_region
    _
  $region13: #{_han_apply.3} parent=0 // pred_fallthru
    _
  // Predicated region
  $region14: #{_han_apply.3} parent=0 // pred_check
    _
  $region15: #{_han_apply.3} parent=0 // pred_check_branch
    %25 = sbr.rel (0) target = $region17
  $region16: #{_han_apply.3} parent=0 // pred_region
    _
  $region17: #{_han_apply.3} parent=0 // pred_fallthru
    _
  // Predicated region
  $region18: #{_han_apply.3} parent=0 // pred_check
    _
  $region19: #{_han_apply.3} parent=0 // pred_check_branch
    %27 = sbr.rel (0) target = $region21
  $region20: #{_han_apply.3} parent=0 // pred_region
    _
  $region21: #{_han_apply.3} parent=0 // pred_fallthru
    _
  // Predicated region
  $region22: #{_han_apply.3} parent=0 // pred_check
    _
  $region23: #{_han_apply.3} parent=0 // pred_check_branch
    %29 = sbr.rel (0) target = $region25
  $region24: #{_han_apply.3} parent=0 // pred_region
    _
  $region25: #{_han_apply.3} parent=0 // pred_fallthru
    _
  // Predicated region
  $region26: #{_han_apply.3} parent=0 // pred_check
    _
  $region27: #{_han_apply.3} parent=0 // pred_check_branch
    %31 = sbr.rel (0) target = $region29
  $region28: #{_han_apply.3} parent=0 // pred_region
    _
  $region29: #{_han_apply.3} parent=0 // pred_fallthru
    _
  // Predicated region
  $region30: #{_han_apply.3} parent=0 // pred_check
    _
  $region31: #{_han_apply.3} parent=0 // pred_check_branch
    %33 = sbr.rel (0) target = $region33
  $region32: #{_han_apply.3} parent=0 // pred_region
    _
  $region33: #{_han_apply.3} parent=0 // pred_fallthru
    _
  // Predicated region
  $region34: #{_han_apply.3} parent=0 // pred_check
    _
  $region35: #{_han_apply.3} parent=0 // pred_check_branch
    %35 = sbr.rel (0) target = $region37
  $region36: #{_han_apply.3} parent=0 // pred_region
    _
  $region37: #{_han_apply.3} parent=0 // pred_fallthru
    _
  // Predicated region
  $region38: #{_han_apply.3} parent=0 // pred_check
    _
  $region39: #{_han_apply.3} parent=0 // pred_check_branch
    %37 = sbr.rel (0) target = $region41
  $region40: #{_han_apply.3} parent=0 // pred_region
    _
  $region41: #{_han_apply.3} parent=0 // pred_fallthru
    _
  // Predicated region
  $region42: #{_han_apply.3} parent=0 // pred_check
    _
  $region43: #{_han_apply.3} parent=0 // pred_check_branch
    %39 = sbr.rel (0) target = $region45
  $region44: #{_han_apply.3} parent=0 // pred_region
    _
  $region45: #{_han_apply.3} parent=0 // pred_fallthru
    _
  // Predicated region
  $region46: #{_han_apply.3} parent=0 // pred_check
    _
  $region47: #{_han_apply.3} parent=0 // pred_check_branch
    %41 = sbr.rel (0) target = $region49
  $region48: #{_han_apply.3} parent=0 // pred_region
    _
  $region49: #{_han_apply.3} parent=0 // pred_fallthru
    _
  // Predicated region
  $region50: #{_han_apply.3} parent=0 // pred_check
    _
  $region51: #{_han_apply.3} parent=0 // pred_check_branch
    %43 = sbr.rel (0) target = $region53
  $region52: #{_han_apply.3} parent=0 // pred_region
    _
  $region53: #{_han_apply.3} parent=0 // pred_fallthru
    _
  %v44 = vld [vmem:[%s0] sm:$0xff]
  %v45 = vld [vmem:[%s0 + $0x8] sm:$0xff]
  %v46 = vld [vmem:[%s0 + $0x10] sm:$0xff]
  %v47 = vld [vmem:[%s3] sm:$0xff]
  %v48 = vld [vmem:[%s3 + $0x8] sm:$0xff]
  %v49 = vld [vmem:[%s3 + $0x10] sm:$0xff]
  %v50 = vld [vmem:[%s3 + $0x18] sm:$0xff]
  %v51 = vld [vmem:[%s4] sm:$0x1]
  %v53 = vlaneseq
  %v54 = vshrl.u32 %v53, 7
  %v55 = vsub.s32 0, %v54
  %v56 = vrot.slane %v51, %v55
  %vm58 = vcmask 261120
  %v60 = vsel %vm58, %v44, 0
  %v63 = vsel %vm58, %v45, 0
  %v66 = vsel %vm58, %v46, 0
  %68 = vmatprep.subr.mxu0 0.0
  %69 = vmatpush1.msra.mxu0 %v47
  %70 = vmatprep.subr.mxu0 0.0
  %71 = vmatpush1.msra.mxu0 %v48
  %72 = vmatprep.subr.mxu0 0.0
  %73 = vmatpush1.msra.mxu0 %v49
  %74 = vmatprep.subr.mxu0 0.0
  %75 = vmatpush1.msra.mxu0 %v50
  %76 = vmatprep.subr.mxu0 0.0
  %77 = vmatpush1.msra.mxu0 0.0
  %78 = vmatprep.subr.mxu0 0.0
  %79 = vmatpush1.msra.mxu0 0.0
  %80 = vmatprep.subr.mxu0 0.0
  %81 = vmatpush1.msra.mxu0 0.0
  %82 = vmatprep.subr.mxu0 0.0
  %83 = vmatpush1.msra.mxu0 0.0
  %84 = vmatprep.subr.mxu0 0.0
  %85 = vmatpush1.msra.mxu0 0.0
  %86 = vmatprep.subr.mxu0 0.0
  %87 = vmatpush1.msra.mxu0 0.0
  %88 = vmatprep.subr.mxu0 0.0
  %89 = vmatpush1.msra.mxu0 0.0
  %90 = vmatprep.subr.mxu0 0.0
  %91 = vmatpush1.msra.mxu0 0.0
  %92 = vmatprep.subr.mxu0 0.0
  %93 = vmatpush1.msra.mxu0 0.0
  %94 = vmatprep.subr.mxu0 0.0
  %95 = vmatpush1.msra.mxu0 0.0
  %96 = vmatprep.subr.mxu0 0.0
  %97 = vmatpush1.msra.mxu0 0.0
  %98 = vmatprep.subr.mxu0 0.0
  %99 = vmatpush1.msra.mxu0 0.0
  %100 = vmatprep.subr.mxu0 0.0
  %101 = vmatpush1.msra.mxu0 0.0
  %102 = vmatprep.subr.mxu0 0.0
  %103 = vmatpush1.msra.mxu0 0.0
  %104 = vmatprep.subr.mxu0 0.0
  %105 = vmatpush1.msra.mxu0 0.0
  %106 = vmatprep.subr.mxu0 0.0
  %107 = vmatpush1.msra.mxu0 0.0
  %108 = vmatprep.subr.mxu0 0.0
  %109 = vmatpush1.msra.mxu0 0.0
  %110 = vmatprep.subr.mxu0 0.0
  %111 = vmatpush1.msra.mxu0 0.0
  %112 = vmatprep.subr.mxu0 0.0
  %113 = vmatpush1.msra.mxu0 0.0
  %114 = vmatprep.subr.mxu0 0.0
  %115 = vmatpush1.msra.mxu0 0.0
  %116 = vmatprep.subr.mxu0 0.0
  %117 = vmatpush1.msra.mxu0 0.0
  %118 = vmatprep.subr.mxu0 0.0
  %119 = vmatpush1.msra.mxu0 0.0
  %120 = vmatprep.subr.mxu0 0.0
  %121 = vmatpush1.msra.mxu0 0.0
  %122 = vmatprep.subr.mxu0 0.0
  %123 = vmatpush1.msra.mxu0 0.0
  %124 = vmatprep.subr.mxu0 0.0
  %125 = vmatpush1.msra.mxu0 0.0
  %126 = vmatprep.subr.mxu0 0.0
  %127 = vmatpush1.msra.mxu0 0.0
  %128 = vmatprep.subr.mxu0 0.0
  %129 = vmatpush1.msra.mxu0 0.0
  %130 = vmatprep.subr.mxu0 0.0
  %131 = vmatpush1.msra.mxu0 0.0
  %132 = vmatprep.mubr.f32.mxu0 0.0
  %133 = vmatmul.mubr.f32.gmra.mrb[0].mxu0 %v60
  %v134 = vpop.f32.mrb[0].mxu0
  %v135 = vadd.f32 %v56, %v134
  %v136 = vpop.f32.mrb[0].mxu0
  %137 = vmatprep.mubr.f32.mxu0 0.0
  %138 = vmatmul.mubr.f32.gmra.mrb[0].mxu0 %v63
  %v139 = vpop.f32.mrb[0].mxu0
  %v140 = vadd.f32 %v56, %v139
  %v141 = vpop.f32.mrb[0].mxu0
  %142 = vmatprep.mubr.f32.mxu0 0.0
  %143 = vmatmul.mubr.f32.gmra.mrb[0].mxu0 %v66
  %v144 = vpop.f32.mrb[0].mxu0
  %v145 = vadd.f32 %v56, %v144
  %v146 = vpop.f32.mrb[0].mxu0
  %147 = vdwg.mxu0
  %vm148 = vcmask 392192
  %149 = vst.msk [vmem:[#allocation2] sm:$0xff] %vm148, %v135
  %150 = vst.msk [vmem:[#allocation2 + $0x8] sm:$0xff] %vm148, %v140
  %151 = vst.msk [vmem:[#allocation2 + $0x10] sm:$0xff] %vm148, %v145
  %155 = vrot.lane.b32.xlu0 %v135, 80
  %v156 = vpop.permute.xlu0 %155
  %157 = vrot.lane.b32.xlu0 %v140, 80
  %v158 = vpop.permute.xlu0 %157
  %159 = vrot.lane.b32.xlu0 %v145, 80
  %v160 = vpop.permute.xlu0 %159
  %164 = vst.msk [vmem:[#allocation3] sm:$0xff] %vm148, %v156
  %165 = vst.msk [vmem:[#allocation3 + $0x8] sm:$0xff] %vm148, %v158
  %166 = vst.msk [vmem:[#allocation3 + $0x10] sm:$0xff] %vm148, %v160
  %v167 = vld [vmem:[%s1] sm:$0xff]
  %v168 = vld [vmem:[%s7] sm:$0x1]
  %v169 = vld [vmem:[%s5] sm:$0xff]
  %v170 = vld [vmem:[%s5 + $0x8] sm:$0xff]
  %v171 = vld [vmem:[%s6] sm:$0xff]
  %v172 = vld [vmem:[%s6 + $0x8] sm:$0xff]
  %vm173 = vcmask 130048
  %v175 = vsel %vm173, 0.0, 0
  %177 = vmatprep.subr.mxu0 0.0
  %178 = vmatpush1.msra.mxu0 %v169
  %179 = vmatprep.subr.mxu0 0.0
  %180 = vmatpush1.msra.mxu0 %v170
  %181 = vmatprep.subr.mxu0 0.0
  %182 = vmatpush1.msra.mxu0 0.0
  %183 = vmatprep.subr.mxu0 0.0
  %184 = vmatpush1.msra.mxu0 0.0
  %185 = vmatprep.subr.mxu0 0.0
  %186 = vmatpush1.msra.mxu0 0.0
  %187 = vmatprep.subr.mxu0 0.0
  %188 = vmatpush1.msra.mxu0 0.0
  %189 = vmatprep.subr.mxu0 0.0
  %190 = vmatpush1.msra.mxu0 0.0
  %191 = vmatprep.subr.mxu0 0.0
  %192 = vmatpush1.msra.mxu0 0.0
  %193 = vmatprep.subr.mxu0 0.0
  %194 = vmatpush1.msra.mxu0 0.0
  %195 = vmatprep.subr.mxu0 0.0
  %196 = vmatpush1.msra.mxu0 0.0
  %197 = vmatprep.subr.mxu0 0.0
  %198 = vmatpush1.msra.mxu0 0.0
  %199 = vmatprep.subr.mxu0 0.0
  %200 = vmatpush1.msra.mxu0 0.0
  %201 = vmatprep.subr.mxu0 0.0
  %202 = vmatpush1.msra.mxu0 0.0
  %203 = vmatprep.subr.mxu0 0.0
  %204 = vmatpush1.msra.mxu0 0.0
  %205 = vmatprep.subr.mxu0 0.0
  %206 = vmatpush1.msra.mxu0 0.0
  %207 = vmatprep.subr.mxu0 0.0
  %208 = vmatpush1.msra.mxu0 0.0
  %209 = vmatprep.subr.mxu0 0.0
  %210 = vmatpush1.msra.mxu0 0.0
  %211 = vmatprep.subr.mxu0 0.0
  %212 = vmatpush1.msra.mxu0 0.0
  %213 = vmatprep.subr.mxu0 0.0
  %214 = vmatpush1.msra.mxu0 0.0
  %215 = vmatprep.subr.mxu0 0.0
  %216 = vmatpush1.msra.mxu0 0.0
  %217 = vmatprep.subr.mxu0 0.0
  %218 = vmatpush1.msra.mxu0 0.0
  %219 = vmatprep.subr.mxu0 0.0
  %220 = vmatpush1.msra.mxu0 0.0
  %221 = vmatprep.subr.mxu0 0.0
  %222 = vmatpush1.msra.mxu0 0.0
  %223 = vmatprep.subr.mxu0 0.0
  %224 = vmatpush1.msra.mxu0 0.0
  %225 = vmatprep.subr.mxu0 0.0
  %226 = vmatpush1.msra.mxu0 0.0
  %227 = vmatprep.subr.mxu0 0.0
  %228 = vmatpush1.msra.mxu0 0.0
  %229 = vmatprep.subr.mxu0 0.0
  %230 = vmatpush1.msra.mxu0 0.0
  %231 = vmatprep.subr.mxu0 0.0
  %232 = vmatpush1.msra.mxu0 0.0
  %233 = vmatprep.subr.mxu0 0.0
  %234 = vmatpush1.msra.mxu0 0.0
  %235 = vmatprep.subr.mxu0 0.0
  %236 = vmatpush1.msra.mxu0 0.0
  %237 = vmatprep.subr.mxu0 0.0
  %238 = vmatpush1.msra.mxu0 0.0
  %239 = vmatprep.subr.mxu0 0.0
  %240 = vmatpush1.msra.mxu0 0.0
  %241 = vmatprep.mubr.f32.mxu0 0.0
  %242 = vmatmul.mubr.f32.gmra.mrb[0].mxu0 %v175
  %v243 = vpop.f32.mrb[0].mxu0
  %v244 = vadd.f32 0.0, %v243
  %v245 = vpop.f32.mrb[0].mxu0
  %246 = vdwg.mxu0
  %247 = vmatprep.subr.mxu0 0.0
  %248 = vmatpush1.msra.mxu0 %v171
  %249 = vmatprep.subr.mxu0 0.0
  %250 = vmatpush1.msra.mxu0 %v172
  %251 = vmatprep.subr.mxu0 0.0
  %252 = vmatpush1.msra.mxu0 0.0
  %253 = vmatprep.subr.mxu0 0.0
  %254 = vmatpush1.msra.mxu0 0.0
  %255 = vmatprep.subr.mxu0 0.0
  %256 = vmatpush1.msra.mxu0 0.0
  %257 = vmatprep.subr.mxu0 0.0
  %258 = vmatpush1.msra.mxu0 0.0
  %259 = vmatprep.subr.mxu0 0.0
  %260 = vmatpush1.msra.mxu0 0.0
  %261 = vmatprep.subr.mxu0 0.0
  %262 = vmatpush1.msra.mxu0 0.0
  %263 = vmatprep.subr.mxu0 0.0
  %264 = vmatpush1.msra.mxu0 0.0
  %265 = vmatprep.subr.mxu0 0.0
  %266 = vmatpush1.msra.mxu0 0.0
  %267 = vmatprep.subr.mxu0 0.0
  %268 = vmatpush1.msra.mxu0 0.0
  %269 = vmatprep.subr.mxu0 0.0
  %270 = vmatpush1.msra.mxu0 0.0
  %271 = vmatprep.subr.mxu0 0.0
  %272 = vmatpush1.msra.mxu0 0.0
  %273 = vmatprep.subr.mxu0 0.0
  %274 = vmatpush1.msra.mxu0 0.0
  %275 = vmatprep.subr.mxu0 0.0
  %276 = vmatpush1.msra.mxu0 0.0
  %277 = vmatprep.subr.mxu0 0.0
  %278 = vmatpush1.msra.mxu0 0.0
  %279 = vmatprep.subr.mxu0 0.0
  %280 = vmatpush1.msra.mxu0 0.0
  %281 = vmatprep.subr.mxu0 0.0
  %282 = vmatpush1.msra.mxu0 0.0
  %283 = vmatprep.subr.mxu0 0.0
  %284 = vmatpush1.msra.mxu0 0.0
  %285 = vmatprep.subr.mxu0 0.0
  %286 = vmatpush1.msra.mxu0 0.0
  %287 = vmatprep.subr.mxu0 0.0
  %288 = vmatpush1.msra.mxu0 0.0
  %289 = vmatprep.subr.mxu0 0.0
  %290 = vmatpush1.msra.mxu0 0.0
  %291 = vmatprep.subr.mxu0 0.0
  %292 = vmatpush1.msra.mxu0 0.0
  %293 = vmatprep.subr.mxu0 0.0
  %294 = vmatpush1.msra.mxu0 0.0
  %295 = vmatprep.subr.mxu0 0.0
  %296 = vmatpush1.msra.mxu0 0.0
  %297 = vmatprep.subr.mxu0 0.0
  %298 = vmatpush1.msra.mxu0 0.0
  %299 = vmatprep.subr.mxu0 0.0
  %300 = vmatpush1.msra.mxu0 0.0
  %301 = vmatprep.subr.mxu0 0.0
  %302 = vmatpush1.msra.mxu0 0.0
  %303 = vmatprep.subr.mxu0 0.0
  %304 = vmatpush1.msra.mxu0 0.0
  %305 = vmatprep.subr.mxu0 0.0
  %306 = vmatpush1.msra.mxu0 0.0
  %307 = vmatprep.subr.mxu0 0.0
  %308 = vmatpush1.msra.mxu0 0.0
  %309 = vmatprep.subr.mxu0 0.0
  %310 = vmatpush1.msra.mxu0 0.0
  %311 = vmatprep.mubr.f32.mxu0 0.0
  %312 = vmatmul.mubr.f32.gmra.mrb[0].mxu0 %v175
  %v313 = vpop.f32.mrb[0].mxu0
  %v314 = vadd.f32 0.0, %v313
  %v315 = vpop.f32.mrb[0].mxu0
  %316 = vdwg.mxu0
  %v317 = vld [vmem:[#allocation2] sm:$0xff]
  %v318 = vadd.f32 %v317, %v244
  %v319 = vxor.u32 %v318, 2147483648
  %v320 = vmul.f32 %v319, 1.442695
  %v321 = vpow.pop %v320
  %v322 = vadd.f32 %v321, 1.0
  %v323 = vrcp.pop %v322
  %v324 = vmul.f32 1.0, %v323
  %v326 = vlaneseq
  %v327 = vshrl.u32 %v326, 7
  %v328 = vsub.s32 0, %v327
  %v329 = vrot.slane %v168, %v328
  %330 = vrot.lane.b32.xlu0 %v329, 32
  %v331 = vpop.permute.xlu0 %330
  %v333 = vadd.f32 %v244, %v331
  %335 = vrot.lane.b32.xlu0 %v333, 96
  %v336 = vpop.permute.xlu0 %335
  %v338 = vmul.f32 %v324, %v336
  %340 = vrot.lane.b32.xlu0 %v338, 32
  %v341 = vpop.permute.xlu0 %340
  %v343 = vadd.f32 %v317, %v341
  %v344 = vtanh.pop %v343
  %v345 = vsub.f32 1.0, %v324
  %347 = vrot.lane.b32.xlu0 %v344, 112
  %v348 = vpop.permute.xlu0 %347
  %v350 = vmul.f32 %v345, %v348
  %v351 = vmul.f32 %v324, 0.0
  %v352 = vadd.f32 %v350, %v351
  %s353 = scalar_lea.vmem [#allocation3], 16
  %v354 = vld [vmem:[%s353] sm:$0xff]
  %v355 = vadd.f32 %v354, %v314
  %v356 = vxor.u32 %v355, 2147483648
  %v357 = vmul.f32 %v356, 1.442695
  %v358 = vpow.pop %v357
  %v359 = vadd.f32 %v358, 1.0
  %v360 = vrcp.pop %v359
  %v361 = vmul.f32 1.0, %v360
  %362 = vrot.lane.b32.xlu0 %v329, 16
  %v363 = vpop.permute.xlu0 %362
  %v365 = vadd.f32 %v314, %v363
  %367 = vrot.lane.b32.xlu0 %v365, 96
  %v368 = vpop.permute.xlu0 %367
  %v370 = vmul.f32 %v361, %v368
  %372 = vrot.lane.b32.xlu0 %v370, 32
  %v373 = vpop.permute.xlu0 %372
  %v375 = vadd.f32 %v354, %v373
  %v376 = vtanh.pop %v375
  %v377 = vsub.f32 1.0, %v361
  %379 = vrot.lane.b32.xlu0 %v376, 112
  %v380 = vpop.permute.xlu0 %379
  %v382 = vmul.f32 %v377, %v380
  %v383 = vmul.f32 %v361, 0.0
  %v384 = vadd.f32 %v382, %v383
  %vm385 = vcmp.gt.s32.totalorder %v167, 0
  %vm386 = vcmp.gt.s32.totalorder %v167, 2
  %v387 = vsel %vm385, 1, 0
  %388 = vset.pattern.permute.xlu0 0
  %389 = vperm.xlu0 %388, %v387
  %v390 = vpop.permute.xlu0 %389
  %vm391 = vcmp.eq.s32.totalorder %v390, 1
  %v392 = vsel %vm391, %v352, 0.0
  %394 = vrot.lane.b32.xlu0 %v392, 112
  %v395 = vpop.permute.xlu0 %394
  %397 = vst.msk [vmem:[#allocation4] sm:$0xff] %vm173, %v395
  %v398 = vsel %vm386, 1, 0
  %399 = vset.pattern.permute.xlu0 0
  %400 = vperm.xlu0 %399, %v398
  %v401 = vpop.permute.xlu0 %400
  %vm402 = vcmp.eq.s32.totalorder %v401, 1
  %v403 = vsel %vm402, %v384, 0.0
  %405 = vrot.lane.b32.xlu0 %v403, 112
  %v406 = vpop.permute.xlu0 %405
  %s408 = scalar_lea.vmem [#allocation5], 16
  %409 = vst.msk [vmem:[%s408] sm:$0xff] %vm173, %v406
  %v410 = vsel %vm173, %v395, 0
  %412 = vmatprep.subr.mxu0 0.0
  %413 = vmatpush1.msra.mxu0 %v169
  %414 = vmatprep.subr.mxu0 0.0
  %415 = vmatpush1.msra.mxu0 %v170
  %416 = vmatprep.subr.mxu0 0.0
  %417 = vmatpush1.msra.mxu0 0.0
  %418 = vmatprep.subr.mxu0 0.0
  %419 = vmatpush1.msra.mxu0 0.0
  %420 = vmatprep.subr.mxu0 0.0
  %421 = vmatpush1.msra.mxu0 0.0
  %422 = vmatprep.subr.mxu0 0.0
  %423 = vmatpush1.msra.mxu0 0.0
  %424 = vmatprep.subr.mxu0 0.0
  %425 = vmatpush1.msra.mxu0 0.0
  %426 = vmatprep.subr.mxu0 0.0
  %427 = vmatpush1.msra.mxu0 0.0
  %428 = vmatprep.subr.mxu0 0.0
  %429 = vmatpush1.msra.mxu0 0.0
  %430 = vmatprep.subr.mxu0 0.0
  %431 = vmatpush1.msra.mxu0 0.0
  %432 = vmatprep.subr.mxu0 0.0
  %433 = vmatpush1.msra.mxu0 0.0
  %434 = vmatprep.subr.mxu0 0.0
  %435 = vmatpush1.msra.mxu0 0.0
  %436 = vmatprep.subr.mxu0 0.0
  %437 = vmatpush1.msra.mxu0 0.0
  %438 = vmatprep.subr.mxu0 0.0
  %439 = vmatpush1.msra.mxu0 0.0
  %440 = vmatprep.subr.mxu0 0.0
  %441 = vmatpush1.msra.mxu0 0.0
  %442 = vmatprep.subr.mxu0 0.0
  %443 = vmatpush1.msra.mxu0 0.0
  %444 = vmatprep.subr.mxu0 0.0
  %445 = vmatpush1.msra.mxu0 0.0
  %446 = vmatprep.subr.mxu0 0.0
  %447 = vmatpush1.msra.mxu0 0.0
  %448 = vmatprep.subr.mxu0 0.0
  %449 = vmatpush1.msra.mxu0 0.0
  %450 = vmatprep.subr.mxu0 0.0
  %451 = vmatpush1.msra.mxu0 0.0
  %452 = vmatprep.subr.mxu0 0.0
  %453 = vmatpush1.msra.mxu0 0.0
  %454 = vmatprep.subr.mxu0 0.0
  %455 = vmatpush1.msra.mxu0 0.0
  %456 = vmatprep.subr.mxu0 0.0
  %457 = vmatpush1.msra.mxu0 0.0
  %458 = vmatprep.subr.mxu0 0.0
  %459 = vmatpush1.msra.mxu0 0.0
  %460 = vmatprep.subr.mxu0 0.0
  %461 = vmatpush1.msra.mxu0 0.0
  %462 = vmatprep.subr.mxu0 0.0
  %463 = vmatpush1.msra.mxu0 0.0
  %464 = vmatprep.subr.mxu0 0.0
  %465 = vmatpush1.msra.mxu0 0.0
  %466 = vmatprep.subr.mxu0 0.0
  %467 = vmatpush1.msra.mxu0 0.0
  %468 = vmatprep.subr.mxu0 0.0
  %469 = vmatpush1.msra.mxu0 0.0
  %470 = vmatprep.subr.mxu0 0.0
  %471 = vmatpush1.msra.mxu0 0.0
  %472 = vmatprep.subr.mxu0 0.0
  %473 = vmatpush1.msra.mxu0 0.0
  %474 = vmatprep.subr.mxu0 0.0
  %475 = vmatpush1.msra.mxu0 0.0
  %476 = vmatprep.mubr.f32.mxu0 0.0
  %477 = vmatmul.mubr.f32.gmra.mrb[0].mxu0 %v410
  %v478 = vpop.f32.mrb[0].mxu0
  %v479 = vadd.f32 0.0, %v478
  %v480 = vpop.f32.mrb[0].mxu0
  %481 = vdwg.mxu0
  %v482 = vsel %vm173, %v406, 0
  %484 = vmatprep.subr.mxu0 0.0
  %485 = vmatpush1.msra.mxu0 %v171
  %486 = vmatprep.subr.mxu0 0.0
  %487 = vmatpush1.msra.mxu0 %v172
  %488 = vmatprep.subr.mxu0 0.0
  %489 = vmatpush1.msra.mxu0 0.0
  %490 = vmatprep.subr.mxu0 0.0
  %491 = vmatpush1.msra.mxu0 0.0
  %492 = vmatprep.subr.mxu0 0.0
  %493 = vmatpush1.msra.mxu0 0.0
  %494 = vmatprep.subr.mxu0 0.0
  %495 = vmatpush1.msra.mxu0 0.0
  %496 = vmatprep.subr.mxu0 0.0
  %497 = vmatpush1.msra.mxu0 0.0
  %498 = vmatprep.subr.mxu0 0.0
  %499 = vmatpush1.msra.mxu0 0.0
  %500 = vmatprep.subr.mxu0 0.0
  %501 = vmatpush1.msra.mxu0 0.0
  %502 = vmatprep.subr.mxu0 0.0
  %503 = vmatpush1.msra.mxu0 0.0
  %504 = vmatprep.subr.mxu0 0.0
  %505 = vmatpush1.msra.mxu0 0.0
  %506 = vmatprep.subr.mxu0 0.0
  %507 = vmatpush1.msra.mxu0 0.0
  %508 = vmatprep.subr.mxu0 0.0
  %509 = vmatpush1.msra.mxu0 0.0
  %510 = vmatprep.subr.mxu0 0.0
  %511 = vmatpush1.msra.mxu0 0.0
  %512 = vmatprep.subr.mxu0 0.0
  %513 = vmatpush1.msra.mxu0 0.0
  %514 = vmatprep.subr.mxu0 0.0
  %515 = vmatpush1.msra.mxu0 0.0
  %516 = vmatprep.subr.mxu0 0.0
  %517 = vmatpush1.msra.mxu0 0.0
  %518 = vmatprep.subr.mxu0 0.0
  %519 = vmatpush1.msra.mxu0 0.0
  %520 = vmatprep.subr.mxu0 0.0
  %521 = vmatpush1.msra.mxu0 0.0
  %522 = vmatprep.subr.mxu0 0.0
  %523 = vmatpush1.msra.mxu0 0.0
  %524 = vmatprep.subr.mxu0 0.0
  %525 = vmatpush1.msra.mxu0 0.0
  %526 = vmatprep.subr.mxu0 0.0
  %527 = vmatpush1.msra.mxu0 0.0
  %528 = vmatprep.subr.mxu0 0.0
  %529 = vmatpush1.msra.mxu0 0.0
  %530 = vmatprep.subr.mxu0 0.0
  %531 = vmatpush1.msra.mxu0 0.0
  %532 = vmatprep.subr.mxu0 0.0
  %533 = vmatpush1.msra.mxu0 0.0
  %534 = vmatprep.subr.mxu0 0.0
  %535 = vmatpush1.msra.mxu0 0.0
  %536 = vmatprep.subr.mxu0 0.0
  %537 = vmatpush1.msra.mxu0 0.0
  %538 = vmatprep.subr.mxu0 0.0
  %539 = vmatpush1.msra.mxu0 0.0
  %540 = vmatprep.subr.mxu0 0.0
  %541 = vmatpush1.msra.mxu0 0.0
  %542 = vmatprep.subr.mxu0 0.0
  %543 = vmatpush1.msra.mxu0 0.0
  %544 = vmatprep.subr.mxu0 0.0
  %545 = vmatpush1.msra.mxu0 0.0
  %546 = vmatprep.subr.mxu0 0.0
  %547 = vmatpush1.msra.mxu0 0.0
  %548 = vmatprep.mubr.f32.mxu0 0.0
  %549 = vmatmul.mubr.f32.gmra.mrb[0].mxu0 %v482
  %v550 = vpop.f32.mrb[0].mxu0
  %v551 = vadd.f32 0.0, %v550
  %v552 = vpop.f32.mrb[0].mxu0
  %553 = vdwg.mxu0
  %s554 = scalar_lea.vmem [#allocation2], 8
  %v555 = vld [vmem:[%s554] sm:$0xff]
  %v556 = vadd.f32 %v555, %v479
  %v557 = vxor.u32 %v556, 2147483648
  %v558 = vmul.f32 %v557, 1.442695
  %v559 = vpow.pop %v558
  %v560 = vadd.f32 %v559, 1.0
  %v561 = vrcp.pop %v560
  %v562 = vmul.f32 1.0, %v561
  %v563 = vadd.f32 %v479, %v331
  %565 = vrot.lane.b32.xlu0 %v563, 96
  %v566 = vpop.permute.xlu0 %565
  %v568 = vmul.f32 %v562, %v566
  %570 = vrot.lane.b32.xlu0 %v568, 32
  %v571 = vpop.permute.xlu0 %570
  %v573 = vadd.f32 %v555, %v571
  %v574 = vtanh.pop %v573
  %v575 = vsub.f32 1.0, %v562
  %577 = vrot.lane.b32.xlu0 %v574, 112
  %v578 = vpop.permute.xlu0 %577
  %v580 = vmul.f32 %v575, %v578
  %v581 = vmul.f32 %v562, %v392
  %v582 = vadd.f32 %v580, %v581
  %s583 = scalar_lea.vmem [#allocation3], 8
  %v584 = vld [vmem:[%s583] sm:$0xff]
  %v585 = vadd.f32 %v584, %v551
  %v586 = vxor.u32 %v585, 2147483648
  %v587 = vmul.f32 %v586, 1.442695
  %v588 = vpow.pop %v587
  %v589 = vadd.f32 %v588, 1.0
  %v590 = vrcp.pop %v589
  %v591 = vmul.f32 1.0, %v590
  %v592 = vadd.f32 %v551, %v363
  %594 = vrot.lane.b32.xlu0 %v592, 96
  %v595 = vpop.permute.xlu0 %594
  %v597 = vmul.f32 %v591, %v595
  %599 = vrot.lane.b32.xlu0 %v597, 32
  %v600 = vpop.permute.xlu0 %599
  %v602 = vadd.f32 %v584, %v600
  %v603 = vtanh.pop %v602
  %v604 = vsub.f32 1.0, %v591
  %606 = vrot.lane.b32.xlu0 %v603, 112
  %v607 = vpop.permute.xlu0 %606
  %v609 = vmul.f32 %v604, %v607
  %v610 = vmul.f32 %v591, %v403
  %v611 = vadd.f32 %v609, %v610
  %vm612 = vcmp.gt.s32.totalorder %v167, 1
  %v613 = vsel %vm612, 1, 0
  %614 = vset.pattern.permute.xlu0 0
  %615 = vperm.xlu0 %614, %v613
  %v616 = vpop.permute.xlu0 %615
  %vm617 = vcmp.eq.s32.totalorder %v616, 1
  %v618 = vsel %vm617, %v582, 0.0
  %620 = vrot.lane.b32.xlu0 %v618, 112
  %v621 = vpop.permute.xlu0 %620
  %s623 = scalar_lea.vmem [#allocation4], 8
  %624 = vst.msk [vmem:[%s623] sm:$0xff] %vm173, %v621
  %v625 = vsel %vm617, %v611, 0.0
  %627 = vrot.lane.b32.xlu0 %v625, 112
  %v628 = vpop.permute.xlu0 %627
  %s630 = scalar_lea.vmem [#allocation5], 8
  %631 = vst.msk [vmem:[%s630] sm:$0xff] %vm173, %v628
  %v632 = vsel %vm617, %v582, %v392
  %v633 = vsel %vm617, %v611, %v403
  %635 = vrot.lane.b32.xlu0 %v632, 112
  %v636 = vpop.permute.xlu0 %635
  %v637 = vsel %vm173, %v636, 0
  %639 = vmatprep.subr.mxu0 0.0
  %640 = vmatpush1.msra.mxu0 %v169
  %641 = vmatprep.subr.mxu0 0.0
  %642 = vmatpush1.msra.mxu0 %v170
  %643 = vmatprep.subr.mxu0 0.0
  %644 = vmatpush1.msra.mxu0 0.0
  %645 = vmatprep.subr.mxu0 0.0
  %646 = vmatpush1.msra.mxu0 0.0
  %647 = vmatprep.subr.mxu0 0.0
  %648 = vmatpush1.msra.mxu0 0.0
  %649 = vmatprep.subr.mxu0 0.0
  %650 = vmatpush1.msra.mxu0 0.0
  %651 = vmatprep.subr.mxu0 0.0
  %652 = vmatpush1.msra.mxu0 0.0
  %653 = vmatprep.subr.mxu0 0.0
  %654 = vmatpush1.msra.mxu0 0.0
  %655 = vmatprep.subr.mxu0 0.0
  %656 = vmatpush1.msra.mxu0 0.0
  %657 = vmatprep.subr.mxu0 0.0
  %658 = vmatpush1.msra.mxu0 0.0
  %659 = vmatprep.subr.mxu0 0.0
  %660 = vmatpush1.msra.mxu0 0.0
  %661 = vmatprep.subr.mxu0 0.0
  %662 = vmatpush1.msra.mxu0 0.0
  %663 = vmatprep.subr.mxu0 0.0
  %664 = vmatpush1.msra.mxu0 0.0
  %665 = vmatprep.subr.mxu0 0.0
  %666 = vmatpush1.msra.mxu0 0.0
  %667 = vmatprep.subr.mxu0 0.0
  %668 = vmatpush1.msra.mxu0 0.0
  %669 = vmatprep.subr.mxu0 0.0
  %670 = vmatpush1.msra.mxu0 0.0
  %671 = vmatprep.subr.mxu0 0.0
  %672 = vmatpush1.msra.mxu0 0.0
  %673 = vmatprep.subr.mxu0 0.0
  %674 = vmatpush1.msra.mxu0 0.0
  %675 = vmatprep.subr.mxu0 0.0
  %676 = vmatpush1.msra.mxu0 0.0
  %677 = vmatprep.subr.mxu0 0.0
  %678 = vmatpush1.msra.mxu0 0.0
  %679 = vmatprep.subr.mxu0 0.0
  %680 = vmatpush1.msra.mxu0 0.0
  %681 = vmatprep.subr.mxu0 0.0
  %682 = vmatpush1.msra.mxu0 0.0
  %683 = vmatprep.subr.mxu0 0.0
  %684 = vmatpush1.msra.mxu0 0.0
  %685 = vmatprep.subr.mxu0 0.0
  %686 = vmatpush1.msra.mxu0 0.0
  %687 = vmatprep.subr.mxu0 0.0
  %688 = vmatpush1.msra.mxu0 0.0
  %689 = vmatprep.subr.mxu0 0.0
  %690 = vmatpush1.msra.mxu0 0.0
  %691 = vmatprep.subr.mxu0 0.0
  %692 = vmatpush1.msra.mxu0 0.0
  %693 = vmatprep.subr.mxu0 0.0
  %694 = vmatpush1.msra.mxu0 0.0
  %695 = vmatprep.subr.mxu0 0.0
  %696 = vmatpush1.msra.mxu0 0.0
  %697 = vmatprep.subr.mxu0 0.0
  %698 = vmatpush1.msra.mxu0 0.0
  %699 = vmatprep.subr.mxu0 0.0
  %700 = vmatpush1.msra.mxu0 0.0
  %701 = vmatprep.subr.mxu0 0.0
  %702 = vmatpush1.msra.mxu0 0.0
  %703 = vmatprep.mubr.f32.mxu0 0.0
  %704 = vmatmul.mubr.f32.gmra.mrb[0].mxu0 %v637
  %v705 = vpop.f32.mrb[0].mxu0
  %v706 = vadd.f32 0.0, %v705
  %v707 = vpop.f32.mrb[0].mxu0
  %708 = vdwg.mxu0
  %710 = vrot.lane.b32.xlu0 %v633, 112
  %v711 = vpop.permute.xlu0 %710
  %v712 = vsel %vm173, %v711, 0
  %714 = vmatprep.subr.mxu0 0.0
  %715 = vmatpush1.msra.mxu0 %v171
  %716 = vmatprep.subr.mxu0 0.0
  %717 = vmatpush1.msra.mxu0 %v172
  %718 = vmatprep.subr.mxu0 0.0
  %719 = vmatpush1.msra.mxu0 0.0
  %720 = vmatprep.subr.mxu0 0.0
  %721 = vmatpush1.msra.mxu0 0.0
  %722 = vmatprep.subr.mxu0 0.0
  %723 = vmatpush1.msra.mxu0 0.0
  %724 = vmatprep.subr.mxu0 0.0
  %725 = vmatpush1.msra.mxu0 0.0
  %726 = vmatprep.subr.mxu0 0.0
  %727 = vmatpush1.msra.mxu0 0.0
  %728 = vmatprep.subr.mxu0 0.0
  %729 = vmatpush1.msra.mxu0 0.0
  %730 = vmatprep.subr.mxu0 0.0
  %731 = vmatpush1.msra.mxu0 0.0
  %732 = vmatprep.subr.mxu0 0.0
  %733 = vmatpush1.msra.mxu0 0.0
  %734 = vmatprep.subr.mxu0 0.0
  %735 = vmatpush1.msra.mxu0 0.0
  %736 = vmatprep.subr.mxu0 0.0
  %737 = vmatpush1.msra.mxu0 0.0
  %738 = vmatprep.subr.mxu0 0.0
  %739 = vmatpush1.msra.mxu0 0.0
  %740 = vmatprep.subr.mxu0 0.0
  %741 = vmatpush1.msra.mxu0 0.0
  %742 = vmatprep.subr.mxu0 0.0
  %743 = vmatpush1.msra.mxu0 0.0
  %744 = vmatprep.subr.mxu0 0.0
  %745 = vmatpush1.msra.mxu0 0.0
  %746 = vmatprep.subr.mxu0 0.0
  %747 = vmatpush1.msra.mxu0 0.0
  %748 = vmatprep.subr.mxu0 0.0
  %749 = vmatpush1.msra.mxu0 0.0
  %750 = vmatprep.subr.mxu0 0.0
  %751 = vmatpush1.msra.mxu0 0.0
  %752 = vmatprep.subr.mxu0 0.0
  %753 = vmatpush1.msra.mxu0 0.0
  %754 = vmatprep.subr.mxu0 0.0
  %755 = vmatpush1.msra.mxu0 0.0
  %756 = vmatprep.subr.mxu0 0.0
  %757 = vmatpush1.msra.mxu0 0.0
  %758 = vmatprep.subr.mxu0 0.0
  %759 = vmatpush1.msra.mxu0 0.0
  %760 = vmatprep.subr.mxu0 0.0
  %761 = vmatpush1.msra.mxu0 0.0
  %762 = vmatprep.subr.mxu0 0.0
  %763 = vmatpush1.msra.mxu0 0.0
  %764 = vmatprep.subr.mxu0 0.0
  %765 = vmatpush1.msra.mxu0 0.0
  %766 = vmatprep.subr.mxu0 0.0
  %767 = vmatpush1.msra.mxu0 0.0
  %768 = vmatprep.subr.mxu0 0.0
  %769 = vmatpush1.msra.mxu0 0.0
  %770 = vmatprep.subr.mxu0 0.0
  %771 = vmatpush1.msra.mxu0 0.0
  %772 = vmatprep.subr.mxu0 0.0
  %773 = vmatpush1.msra.mxu0 0.0
  %774 = vmatprep.subr.mxu0 0.0
  %775 = vmatpush1.msra.mxu0 0.0
  %776 = vmatprep.subr.mxu0 0.0
  %777 = vmatpush1.msra.mxu0 0.0
  %778 = vmatprep.mubr.f32.mxu0 0.0
  %779 = vmatmul.mubr.f32.gmra.mrb[0].mxu0 %v712
  %v780 = vpop.f32.mrb[0].mxu0
  %v781 = vadd.f32 0.0, %v780
  %v782 = vpop.f32.mrb[0].mxu0
  %783 = vdwg.mxu0
  %s784 = scalar_lea.vmem [#allocation2], 16
  %v785 = vld [vmem:[%s784] sm:$0xff]
  %v786 = vadd.f32 %v785, %v706
  %v787 = vxor.u32 %v786, 2147483648
  %v788 = vmul.f32 %v787, 1.442695
  %v789 = vpow.pop %v788
  %v790 = vadd.f32 %v789, 1.0
  %v791 = vrcp.pop %v790
  %v792 = vmul.f32 1.0, %v791
  %v793 = vadd.f32 %v706, %v331
  %795 = vrot.lane.b32.xlu0 %v793, 96
  %v796 = vpop.permute.xlu0 %795
  %v798 = vmul.f32 %v792, %v796
  %800 = vrot.lane.b32.xlu0 %v798, 32
  %v801 = vpop.permute.xlu0 %800
  %v803 = vadd.f32 %v785, %v801
  %v804 = vtanh.pop %v803
  %v805 = vsub.f32 1.0, %v792
  %807 = vrot.lane.b32.xlu0 %v804, 112
  %v808 = vpop.permute.xlu0 %807
  %v810 = vmul.f32 %v805, %v808
  %v811 = vmul.f32 %v792, %v632
  %v812 = vadd.f32 %v810, %v811
  %v813 = vld [vmem:[#allocation3] sm:$0xff]
  %v814 = vadd.f32 %v813, %v781
  %v815 = vxor.u32 %v814, 2147483648
  %v816 = vmul.f32 %v815, 1.442695
  %v817 = vpow.pop %v816
  %v818 = vadd.f32 %v817, 1.0
  %v819 = vrcp.pop %v818
  %v820 = vmul.f32 1.0, %v819
  %v821 = vadd.f32 %v781, %v363
  %823 = vrot.lane.b32.xlu0 %v821, 96
  %v824 = vpop.permute.xlu0 %823
  %v826 = vmul.f32 %v820, %v824
  %828 = vrot.lane.b32.xlu0 %v826, 32
  %v829 = vpop.permute.xlu0 %828
  %v831 = vadd.f32 %v813, %v829
  %v832 = vtanh.pop %v831
  %v833 = vsub.f32 1.0, %v820
  %835 = vrot.lane.b32.xlu0 %v832, 112
  %v836 = vpop.permute.xlu0 %835
  %v838 = vmul.f32 %v833, %v836
  %v839 = vmul.f32 %v820, %v633
  %v840 = vadd.f32 %v838, %v839
  %v841 = vsel %vm402, %v812, 0.0
  %843 = vrot.lane.b32.xlu0 %v841, 112
  %v844 = vpop.permute.xlu0 %843
  %s846 = scalar_lea.vmem [#allocation4], 16
  %847 = vst.msk [vmem:[%s846] sm:$0xff] %vm173, %v844
  %v848 = vsel %vm391, %v840, 0.0
  %850 = vrot.lane.b32.xlu0 %v848, 112
  %v851 = vpop.permute.xlu0 %850
  %853 = vst.msk [vmem:[#allocation5] sm:$0xff] %vm173, %v851
  %v854 = vld [vmem:[#allocation4] sm:$0xff]
  %v855 = vld [vmem:[#allocation4 + $0x8] sm:$0xff]
  %v856 = vld [vmem:[#allocation4 + $0x10] sm:$0xff]
  %v857 = vld [vmem:[#allocation5] sm:$0xff]
  %v858 = vld [vmem:[#allocation5 + $0x8] sm:$0xff]
  %v859 = vld [vmem:[#allocation5 + $0x10] sm:$0xff]
  %v860 = vld [vmem:[%s8] sm:$0xff]
  %v861 = vld [vmem:[%s8 + $0x8] sm:$0xff]
  %v862 = vld [vmem:[%s8 + $0x10] sm:$0xff]
  %v863 = vld [vmem:[%s8 + $0x18] sm:$0xff]
  %v865 = vsel %vm173, %v857, 0
  %v868 = vsel %vm173, %v858, 0
  %v871 = vsel %vm173, %v859, 0
  %873 = vmatprep.subr.mxu0 0.0
  %874 = vmatpush1.msra.mxu0 %v862
  %875 = vmatprep.subr.mxu0 0.0
  %876 = vmatpush1.msra.mxu0 %v863
  %877 = vmatprep.subr.mxu0 0.0
  %878 = vmatpush1.msra.mxu0 0.0
  %879 = vmatprep.subr.mxu0 0.0
  %880 = vmatpush1.msra.mxu0 0.0
  %881 = vmatprep.subr.mxu0 0.0
  %882 = vmatpush1.msra.mxu0 0.0
  %883 = vmatprep.subr.mxu0 0.0
  %884 = vmatpush1.msra.mxu0 0.0
  %885 = vmatprep.subr.mxu0 0.0
  %886 = vmatpush1.msra.mxu0 0.0
  %887 = vmatprep.subr.mxu0 0.0
  %888 = vmatpush1.msra.mxu0 0.0
  %889 = vmatprep.subr.mxu0 0.0
  %890 = vmatpush1.msra.mxu0 0.0
  %891 = vmatprep.subr.mxu0 0.0
  %892 = vmatpush1.msra.mxu0 0.0
  %893 = vmatprep.subr.mxu0 0.0
  %894 = vmatpush1.msra.mxu0 0.0
  %895 = vmatprep.subr.mxu0 0.0
  %896 = vmatpush1.msra.mxu0 0.0
  %897 = vmatprep.subr.mxu0 0.0
  %898 = vmatpush1.msra.mxu0 0.0
  %899 = vmatprep.subr.mxu0 0.0
  %900 = vmatpush1.msra.mxu0 0.0
  %901 = vmatprep.subr.mxu0 0.0
  %902 = vmatpush1.msra.mxu0 0.0
  %903 = vmatprep.subr.mxu0 0.0
  %904 = vmatpush1.msra.mxu0 0.0
  %905 = vmatprep.subr.mxu0 0.0
  %906 = vmatpush1.msra.mxu0 0.0
  %907 = vmatprep.subr.mxu0 0.0
  %908 = vmatpush1.msra.mxu0 0.0
  %909 = vmatprep.subr.mxu0 0.0
  %910 = vmatpush1.msra.mxu0 0.0
  %911 = vmatprep.subr.mxu0 0.0
  %912 = vmatpush1.msra.mxu0 0.0
  %913 = vmatprep.subr.mxu0 0.0
  %914 = vmatpush1.msra.mxu0 0.0
  %915 = vmatprep.subr.mxu0 0.0
  %916 = vmatpush1.msra.mxu0 0.0
  %917 = vmatprep.subr.mxu0 0.0
  %918 = vmatpush1.msra.mxu0 0.0
  %919 = vmatprep.subr.mxu0 0.0
  %920 = vmatpush1.msra.mxu0 0.0
  %921 = vmatprep.subr.mxu0 0.0
  %922 = vmatpush1.msra.mxu0 0.0
  %923 = vmatprep.subr.mxu0 0.0
  %924 = vmatpush1.msra.mxu0 0.0
  %925 = vmatprep.subr.mxu0 0.0
  %926 = vmatpush1.msra.mxu0 0.0
  %927 = vmatprep.subr.mxu0 0.0
  %928 = vmatpush1.msra.mxu0 0.0
  %929 = vmatprep.subr.mxu0 0.0
  %930 = vmatpush1.msra.mxu0 0.0
  %931 = vmatprep.subr.mxu0 0.0
  %932 = vmatpush1.msra.mxu0 0.0
  %933 = vmatprep.subr.mxu0 0.0
  %934 = vmatpush1.msra.mxu0 0.0
  %935 = vmatprep.subr.mxu0 0.0
  %936 = vmatpush1.msra.mxu0 0.0
  %937 = vmatprep.mubr.f32.mxu0 0.0
  %938 = vmatmul.mubr.f32.gmra.mrb[0].mxu0 %v865
  %v939 = vpop.f32.mrb[0].mxu0
  %v940 = vadd.f32 0.0, %v939
  %v941 = vpop.f32.mrb[0].mxu0
  %942 = vmatprep.mubr.f32.mxu0 0.0
  %943 = vmatmul.mubr.f32.gmra.mrb[0].mxu0 %v868
  %v944 = vpop.f32.mrb[0].mxu0
  %v945 = vadd.f32 0.0, %v944
  %v946 = vpop.f32.mrb[0].mxu0
  %947 = vmatprep.mubr.f32.mxu0 0.0
  %948 = vmatmul.mubr.f32.gmra.mrb[0].mxu0 %v871
  %v949 = vpop.f32.mrb[0].mxu0
  %v950 = vadd.f32 0.0, %v949
  %v951 = vpop.f32.mrb[0].mxu0
  %952 = vdwg.mxu0
  %v954 = vsel %vm173, %v854, 0
  %v957 = vsel %vm173, %v855, 0
  %v960 = vsel %vm173, %v856, 0
  %962 = vmatprep.subr.mxu0 0.0
  %963 = vmatpush1.msra.mxu0 %v860
  %964 = vmatprep.subr.mxu0 0.0
  %965 = vmatpush1.msra.mxu0 %v861
  %966 = vmatprep.subr.mxu0 0.0
  %967 = vmatpush1.msra.mxu0 0.0
  %968 = vmatprep.subr.mxu0 0.0
  %969 = vmatpush1.msra.mxu0 0.0
  %970 = vmatprep.subr.mxu0 0.0
  %971 = vmatpush1.msra.mxu0 0.0
  %972 = vmatprep.subr.mxu0 0.0
  %973 = vmatpush1.msra.mxu0 0.0
  %974 = vmatprep.subr.mxu0 0.0
  %975 = vmatpush1.msra.mxu0 0.0
  %976 = vmatprep.subr.mxu0 0.0
  %977 = vmatpush1.msra.mxu0 0.0
  %978 = vmatprep.subr.mxu0 0.0
  %979 = vmatpush1.msra.mxu0 0.0
  %980 = vmatprep.subr.mxu0 0.0
  %981 = vmatpush1.msra.mxu0 0.0
  %982 = vmatprep.subr.mxu0 0.0
  %983 = vmatpush1.msra.mxu0 0.0
  %984 = vmatprep.subr.mxu0 0.0
  %985 = vmatpush1.msra.mxu0 0.0
  %986 = vmatprep.subr.mxu0 0.0
  %987 = vmatpush1.msra.mxu0 0.0
  %988 = vmatprep.subr.mxu0 0.0
  %989 = vmatpush1.msra.mxu0 0.0
  %990 = vmatprep.subr.mxu0 0.0
  %991 = vmatpush1.msra.mxu0 0.0
  %992 = vmatprep.subr.mxu0 0.0
  %993 = vmatpush1.msra.mxu0 0.0
  %994 = vmatprep.subr.mxu0 0.0
  %995 = vmatpush1.msra.mxu0 0.0
  %996 = vmatprep.subr.mxu0 0.0
  %997 = vmatpush1.msra.mxu0 0.0
  %998 = vmatprep.subr.mxu0 0.0
  %999 = vmatpush1.msra.mxu0 0.0
  %1000 = vmatprep.subr.mxu0 0.0
  %1001 = vmatpush1.msra.mxu0 0.0
  %1002 = vmatprep.subr.mxu0 0.0
  %1003 = vmatpush1.msra.mxu0 0.0
  %1004 = vmatprep.subr.mxu0 0.0
  %1005 = vmatpush1.msra.mxu0 0.0
  %1006 = vmatprep.subr.mxu0 0.0
  %1007 = vmatpush1.msra.mxu0 0.0
  %1008 = vmatprep.subr.mxu0 0.0
  %1009 = vmatpush1.msra.mxu0 0.0
  %1010 = vmatprep.subr.mxu0 0.0
  %1011 = vmatpush1.msra.mxu0 0.0
  %1012 = vmatprep.subr.mxu0 0.0
  %1013 = vmatpush1.msra.mxu0 0.0
  %1014 = vmatprep.subr.mxu0 0.0
  %1015 = vmatpush1.msra.mxu0 0.0
  %1016 = vmatprep.subr.mxu0 0.0
  %1017 = vmatpush1.msra.mxu0 0.0
  %1018 = vmatprep.subr.mxu0 0.0
  %1019 = vmatpush1.msra.mxu0 0.0
  %1020 = vmatprep.subr.mxu0 0.0
  %1021 = vmatpush1.msra.mxu0 0.0
  %1022 = vmatprep.subr.mxu0 0.0
  %1023 = vmatpush1.msra.mxu0 0.0
  %1024 = vmatprep.subr.mxu0 0.0
  %1025 = vmatpush1.msra.mxu0 0.0
  %1026 = vmatprep.mubr.f32.mxu0 0.0
  %1027 = vmatmul.mubr.f32.gmra.mrb[0].mxu0 %v954
  %v1028 = vpop.f32.mrb[0].mxu0
  %v1029 = vadd.f32 %v940, %v1028
  %v1030 = vpop.f32.mrb[0].mxu0
  %1031 = vmatprep.mubr.f32.mxu0 0.0
  %1032 = vmatmul.mubr.f32.gmra.mrb[0].mxu0 %v957
  %v1033 = vpop.f32.mrb[0].mxu0
  %v1034 = vadd.f32 %v945, %v1033
  %v1035 = vpop.f32.mrb[0].mxu0
  %1036 = vmatprep.mubr.f32.mxu0 0.0
  %1037 = vmatmul.mubr.f32.gmra.mrb[0].mxu0 %v960
  %v1038 = vpop.f32.mrb[0].mxu0
  %v1039 = vadd.f32 %v950, %v1038
  %v1040 = vpop.f32.mrb[0].mxu0
  %1041 = vdwg.mxu0
  %v1042 = vld [vmem:[%s9] sm:$0x1]
  %v1044 = vlaneseq
  %v1045 = vshrl.u32 %v1044, 7
  %v1046 = vsub.s32 0, %v1045
  %v1047 = vrot.slane %v1042, %v1046
  %v1049 = vadd.f32 %v1029, %v1047
  %v1050 = vadd.f32 %v1034, %v1047
  %v1051 = vadd.f32 %v1039, %v1047
  %v1052 = vtanh.pop %v1049
  %v1053 = vtanh.pop %v1050
  %v1054 = vtanh.pop %v1051
  %v1055 = vld [vmem:[%s10] sm:$0xff]
  %v1056 = vld [vmem:[%s10 + $0x8] sm:$0xff]
  %v1057 = vld [vmem:[%s10 + $0x10] sm:$0xff]
  %v1058 = vld [vmem:[%s10 + $0x18] sm:$0xff]
  %v1060 = vsel %vm58, %v1052, 0
  %v1063 = vsel %vm58, %v1053, 0
  %v1066 = vsel %vm58, %v1054, 0
  %1068 = vmatprep.subr.mxu0 0.0
  %1069 = vmatpush1.msra.mxu0 %v1055
  %1070 = vmatprep.subr.mxu0 0.0
  %1071 = vmatpush1.msra.mxu0 %v1056
  %1072 = vmatprep.subr.mxu0 0.0
  %1073 = vmatpush1.msra.mxu0 %v1057
  %1074 = vmatprep.subr.mxu0 0.0
  %1075 = vmatpush1.msra.mxu0 %v1058
  %1076 = vmatprep.subr.mxu0 0.0
  %1077 = vmatpush1.msra.mxu0 0.0
  %1078 = vmatprep.subr.mxu0 0.0
  %1079 = vmatpush1.msra.mxu0 0.0
  %1080 = vmatprep.subr.mxu0 0.0
  %1081 = vmatpush1.msra.mxu0 0.0
  %1082 = vmatprep.subr.mxu0 0.0
  %1083 = vmatpush1.msra.mxu0 0.0
  %1084 = vmatprep.subr.mxu0 0.0
  %1085 = vmatpush1.msra.mxu0 0.0
  %1086 = vmatprep.subr.mxu0 0.0
  %1087 = vmatpush1.msra.mxu0 0.0
  %1088 = vmatprep.subr.mxu0 0.0
  %1089 = vmatpush1.msra.mxu0 0.0
  %1090 = vmatprep.subr.mxu0 0.0
  %1091 = vmatpush1.msra.mxu0 0.0
  %1092 = vmatprep.subr.mxu0 0.0
  %1093 = vmatpush1.msra.mxu0 0.0
  %1094 = vmatprep.subr.mxu0 0.0
  %1095 = vmatpush1.msra.mxu0 0.0
  %1096 = vmatprep.subr.mxu0 0.0
  %1097 = vmatpush1.msra.mxu0 0.0
  %1098 = vmatprep.subr.mxu0 0.0
  %1099 = vmatpush1.msra.mxu0 0.0
  %1100 = vmatprep.subr.mxu0 0.0
  %1101 = vmatpush1.msra.mxu0 0.0
  %1102 = vmatprep.subr.mxu0 0.0
  %1103 = vmatpush1.msra.mxu0 0.0
  %1104 = vmatprep.subr.mxu0 0.0
  %1105 = vmatpush1.msra.mxu0 0.0
  %1106 = vmatprep.subr.mxu0 0.0
  %1107 = vmatpush1.msra.mxu0 0.0
  %1108 = vmatprep.subr.mxu0 0.0
  %1109 = vmatpush1.msra.mxu0 0.0
  %1110 = vmatprep.subr.mxu0 0.0
  %1111 = vmatpush1.msra.mxu0 0.0
  %1112 = vmatprep.subr.mxu0 0.0
  %1113 = vmatpush1.msra.mxu0 0.0
  %1114 = vmatprep.subr.mxu0 0.0
  %1115 = vmatpush1.msra.mxu0 0.0
  %1116 = vmatprep.subr.mxu0 0.0
  %1117 = vmatpush1.msra.mxu0 0.0
  %1118 = vmatprep.subr.mxu0 0.0
  %1119 = vmatpush1.msra.mxu0 0.0
  %1120 = vmatprep.subr.mxu0 0.0
  %1121 = vmatpush1.msra.mxu0 0.0
  %1122 = vmatprep.subr.mxu0 0.0
  %1123 = vmatpush1.msra.mxu0 0.0
  %1124 = vmatprep.subr.mxu0 0.0
  %1125 = vmatpush1.msra.mxu0 0.0
  %1126 = vmatprep.subr.mxu0 0.0
  %1127 = vmatpush1.msra.mxu0 0.0
  %1128 = vmatprep.subr.mxu0 0.0
  %1129 = vmatpush1.msra.mxu0 0.0
  %1130 = vmatprep.subr.mxu0 0.0
  %1131 = vmatpush1.msra.mxu0 0.0
  %1132 = vmatprep.mubr.f32.mxu0 0.0
  %1133 = vmatmul.mubr.f32.gmra.mrb[0].mxu0 %v1060
  %v1134 = vpop.f32.mrb[0].mxu0
  %v1135 = vadd.f32 0.0, %v1134
  %v1136 = vpop.f32.mrb[0].mxu0
  %1137 = vmatprep.mubr.f32.mxu0 0.0
  %1138 = vmatmul.mubr.f32.gmra.mrb[0].mxu0 %v1063
  %v1139 = vpop.f32.mrb[0].mxu0
  %v1140 = vadd.f32 0.0, %v1139
  %v1141 = vpop.f32.mrb[0].mxu0
  %1142 = vmatprep.mubr.f32.mxu0 0.0
  %1143 = vmatmul.mubr.f32.gmra.mrb[0].mxu0 %v1066
  %v1144 = vpop.f32.mrb[0].mxu0
  %v1145 = vadd.f32 0.0, %v1144
  %v1146 = vpop.f32.mrb[0].mxu0
  %1147 = vdwg.mxu0
  %v1148 = vld [vmem:[%s2] sm:$0xff]
  %v1149 = vld [vmem:[%s2 + $0x8] sm:$0xff]
  %v1150 = vld [vmem:[%s2 + $0x10] sm:$0xff]
  %1152 = vset.pattern.permute.xlu0 0
  %1153 = vperm.xlu0 %1152, %v1148
  %v1154 = vpop.permute.xlu0 %1153
  %1157 = vset.pattern.permute.xlu0 0
  %1158 = vperm.xlu0 %1157, %v1149
  %v1159 = vpop.permute.xlu0 %1158
  %1162 = vset.pattern.permute.xlu0 0
  %1163 = vperm.xlu0 %1162, %v1150
  %v1164 = vpop.permute.xlu0 %1163
  %v1166 = vadd.f32 %v1135, %v1154
  %v1167 = vadd.f32 %v1140, %v1159
  %v1168 = vadd.f32 %v1145, %v1164
  %v1169 = vsel %vm58, %v1166, -inf
  %v1170 = vsel %vm58, %v1167, -inf
  %v1171 = vsel %vm58, %v1168, -inf
  %v1172 = vmax.f32 %v1169, %v1170
  %v1173 = vmax.f32 %v1172, %v1171
  %v1174 = vsub.f32 %v1166, %v1173
  %v1175 = vsub.f32 %v1167, %v1173
  %v1176 = vsub.f32 %v1168, %v1173
  %v1177 = vmul.f32 %v1174, 1.442695
  %v1178 = vpow.pop %v1177
  %v1179 = vmul.f32 %v1175, 1.442695
  %v1180 = vpow.pop %v1179
  %v1181 = vmul.f32 %v1176, 1.442695
  %v1182 = vpow.pop %v1181
  %v1183 = vsel %vm58, %v1178, 0.0
  %v1184 = vsel %vm58, %v1180, 0.0
  %v1185 = vadd.f32 %v1183, %v1184
  %v1186 = vsel %vm58, %v1182, 0.0
  %v1187 = vadd.f32 %v1185, %v1186
  %v1188 = vrcp.pop %v1187
  %v1189 = vmul.f32 %v1178, %v1188
  %v1190 = vmul.f32 %v1180, %v1188
  %v1191 = vmul.f32 %v1182, %v1188
  %v1192 = vmul.f32 %v1189, %v854
  %v1193 = vmul.f32 %v1190, %v855
  %v1194 = vmul.f32 %v1191, %v856
  %v1195 = vsel %vm173, %v1192, 0.0
  %v1196 = vsel %vm173, %v1193, 0.0
  %v1197 = vadd.f32 %v1195, %v1196
  %v1198 = vsel %vm173, %v1194, 0.0
  %v1199 = vadd.f32 %v1197, %v1198
  %1200 = vrot.lane.b32.xlu0 %v857, 16
  %v1201 = vpop.permute.xlu0 %1200
  %1202 = vrot.lane.b32.xlu0 %v858, 16
  %v1203 = vpop.permute.xlu0 %1202
  %1204 = vrot.lane.b32.xlu0 %v859, 16
  %v1205 = vpop.permute.xlu0 %1204
  %v1209 = vmul.f32 %v1189, %v1201
  %v1210 = vmul.f32 %v1190, %v1203
  %v1211 = vmul.f32 %v1191, %v1205
  %vm1212 = vcmask 261248
  %v1213 = vsel %vm1212, %v1209, 0.0
  %v1214 = vsel %vm1212, %v1210, 0.0
  %v1215 = vadd.f32 %v1213, %v1214
  %v1216 = vsel %vm1212, %v1211, 0.0
  %v1217 = vadd.f32 %v1215, %v1216
  %v1218 = vld [vmem:[%s11] sm:$0xff]
  %v1219 = vld [vmem:[%s11 + $0x8] sm:$0xff]
  %v1220 = vld [vmem:[%s11 + $0x10] sm:$0xff]
  %v1221 = vld [vmem:[%s11 + $0x18] sm:$0xff]
  %1223 = vrot.lane.b32.xlu0 %v1217, 112
  %v1224 = vpop.permute.xlu0 %1223
  %v1225 = vsel %vm173, %v1224, 0
  %1227 = vmatprep.subr.mxu0 0.0
  %1228 = vmatpush1.msra.mxu0 %v1220
  %1229 = vmatprep.subr.mxu0 0.0
  %1230 = vmatpush1.msra.mxu0 %v1221
  %1231 = vmatprep.subr.mxu0 0.0
  %1232 = vmatpush1.msra.mxu0 0.0
  %1233 = vmatprep.subr.mxu0 0.0
  %1234 = vmatpush1.msra.mxu0 0.0
  %1235 = vmatprep.subr.mxu0 0.0
  %1236 = vmatpush1.msra.mxu0 0.0
  %1237 = vmatprep.subr.mxu0 0.0
  %1238 = vmatpush1.msra.mxu0 0.0
  %1239 = vmatprep.subr.mxu0 0.0
  %1240 = vmatpush1.msra.mxu0 0.0
  %1241 = vmatprep.subr.mxu0 0.0
  %1242 = vmatpush1.msra.mxu0 0.0
  %1243 = vmatprep.subr.mxu0 0.0
  %1244 = vmatpush1.msra.mxu0 0.0
  %1245 = vmatprep.subr.mxu0 0.0
  %1246 = vmatpush1.msra.mxu0 0.0
  %1247 = vmatprep.subr.mxu0 0.0
  %1248 = vmatpush1.msra.mxu0 0.0
  %1249 = vmatprep.subr.mxu0 0.0
  %1250 = vmatpush1.msra.mxu0 0.0
  %1251 = vmatprep.subr.mxu0 0.0
  %1252 = vmatpush1.msra.mxu0 0.0
  %1253 = vmatprep.subr.mxu0 0.0
  %1254 = vmatpush1.msra.mxu0 0.0
  %1255 = vmatprep.subr.mxu0 0.0
  %1256 = vmatpush1.msra.mxu0 0.0
  %1257 = vmatprep.subr.mxu0 0.0
  %1258 = vmatpush1.msra.mxu0 0.0
  %1259 = vmatprep.subr.mxu0 0.0
  %1260 = vmatpush1.msra.mxu0 0.0
  %1261 = vmatprep.subr.mxu0 0.0
  %1262 = vmatpush1.msra.mxu0 0.0
  %1263 = vmatprep.subr.mxu0 0.0
  %1264 = vmatpush1.msra.mxu0 0.0
  %1265 = vmatprep.subr.mxu0 0.0
  %1266 = vmatpush1.msra.mxu0 0.0
  %1267 = vmatprep.subr.mxu0 0.0
  %1268 = vmatpush1.msra.mxu0 0.0
  %1269 = vmatprep.subr.mxu0 0.0
  %1270 = vmatpush1.msra.mxu0 0.0
  %1271 = vmatprep.subr.mxu0 0.0
  %1272 = vmatpush1.msra.mxu0 0.0
  %1273 = vmatprep.subr.mxu0 0.0
  %1274 = vmatpush1.msra.mxu0 0.0
  %1275 = vmatprep.subr.mxu0 0.0
  %1276 = vmatpush1.msra.mxu0 0.0
  %1277 = vmatprep.subr.mxu0 0.0
  %1278 = vmatpush1.msra.mxu0 0.0
  %1279 = vmatprep.subr.mxu0 0.0
  %1280 = vmatpush1.msra.mxu0 0.0
  %1281 = vmatprep.subr.mxu0 0.0
  %1282 = vmatpush1.msra.mxu0 0.0
  %1283 = vmatprep.subr.mxu0 0.0
  %1284 = vmatpush1.msra.mxu0 0.0
  %1285 = vmatprep.subr.mxu0 0.0
  %1286 = vmatpush1.msra.mxu0 0.0
  %1287 = vmatprep.subr.mxu0 0.0
  %1288 = vmatpush1.msra.mxu0 0.0
  %1289 = vmatprep.subr.mxu0 0.0
  %1290 = vmatpush1.msra.mxu0 0.0
  %1291 = vmatprep.mubr.f32.mxu0 0.0
  %1292 = vmatmul.mubr.f32.gmra.mrb[0].mxu0 %v1225
  %v1293 = vpop.f32.mrb[0].mxu0
  %v1294 = vadd.f32 0.0, %v1293
  %v1295 = vpop.f32.mrb[0].mxu0
  %1296 = vdwg.mxu0
  %v1298 = vsel %vm173, %v1199, 0
  %1300 = vmatprep.subr.mxu0 0.0
  %1301 = vmatpush1.msra.mxu0 %v1218
  %1302 = vmatprep.subr.mxu0 0.0
  %1303 = vmatpush1.msra.mxu0 %v1219
  %1304 = vmatprep.subr.mxu0 0.0
  %1305 = vmatpush1.msra.mxu0 0.0
  %1306 = vmatprep.subr.mxu0 0.0
  %1307 = vmatpush1.msra.mxu0 0.0
  %1308 = vmatprep.subr.mxu0 0.0
  %1309 = vmatpush1.msra.mxu0 0.0
  %1310 = vmatprep.subr.mxu0 0.0
  %1311 = vmatpush1.msra.mxu0 0.0
  %1312 = vmatprep.subr.mxu0 0.0
  %1313 = vmatpush1.msra.mxu0 0.0
  %1314 = vmatprep.subr.mxu0 0.0
  %1315 = vmatpush1.msra.mxu0 0.0
  %1316 = vmatprep.subr.mxu0 0.0
  %1317 = vmatpush1.msra.mxu0 0.0
  %1318 = vmatprep.subr.mxu0 0.0
  %1319 = vmatpush1.msra.mxu0 0.0
  %1320 = vmatprep.subr.mxu0 0.0
  %1321 = vmatpush1.msra.mxu0 0.0
  %1322 = vmatprep.subr.mxu0 0.0
  %1323 = vmatpush1.msra.mxu0 0.0
  %1324 = vmatprep.subr.mxu0 0.0
  %1325 = vmatpush1.msra.mxu0 0.0
  %1326 = vmatprep.subr.mxu0 0.0
  %1327 = vmatpush1.msra.mxu0 0.0
  %1328 = vmatprep.subr.mxu0 0.0
  %1329 = vmatpush1.msra.mxu0 0.0
  %1330 = vmatprep.subr.mxu0 0.0
  %1331 = vmatpush1.msra.mxu0 0.0
  %1332 = vmatprep.subr.mxu0 0.0
  %1333 = vmatpush1.msra.mxu0 0.0
  %1334 = vmatprep.subr.mxu0 0.0
  %1335 = vmatpush1.msra.mxu0 0.0
  %1336 = vmatprep.subr.mxu0 0.0
  %1337 = vmatpush1.msra.mxu0 0.0
  %1338 = vmatprep.subr.mxu0 0.0
  %1339 = vmatpush1.msra.mxu0 0.0
  %1340 = vmatprep.subr.mxu0 0.0
  %1341 = vmatpush1.msra.mxu0 0.0
  %1342 = vmatprep.subr.mxu0 0.0
  %1343 = vmatpush1.msra.mxu0 0.0
  %1344 = vmatprep.subr.mxu0 0.0
  %1345 = vmatpush1.msra.mxu0 0.0
  %1346 = vmatprep.subr.mxu0 0.0
  %1347 = vmatpush1.msra.mxu0 0.0
  %1348 = vmatprep.subr.mxu0 0.0
  %1349 = vmatpush1.msra.mxu0 0.0
  %1350 = vmatprep.subr.mxu0 0.0
  %1351 = vmatpush1.msra.mxu0 0.0
  %1352 = vmatprep.subr.mxu0 0.0
  %1353 = vmatpush1.msra.mxu0 0.0
  %1354 = vmatprep.subr.mxu0 0.0
  %1355 = vmatpush1.msra.mxu0 0.0
  %1356 = vmatprep.subr.mxu0 0.0
  %1357 = vmatpush1.msra.mxu0 0.0
  %1358 = vmatprep.subr.mxu0 0.0
  %1359 = vmatpush1.msra.mxu0 0.0
  %1360 = vmatprep.subr.mxu0 0.0
  %1361 = vmatpush1.msra.mxu0 0.0
  %1362 = vmatprep.subr.mxu0 0.0
  %1363 = vmatpush1.msra.mxu0 0.0
  %1364 = vmatprep.mubr.f32.mxu0 0.0
  %1365 = vmatmul.mubr.f32.gmra.mrb[0].mxu0 %v1298
  %v1366 = vpop.f32.mrb[0].mxu0
  %v1367 = vadd.f32 %v1294, %v1366
  %v1368 = vpop.f32.mrb[0].mxu0
  %1369 = vdwg.mxu0
  %v1370 = vld [vmem:[%s12] sm:$0x1]
  %v1372 = vlaneseq
  %v1373 = vshrl.u32 %v1372, 7
  %v1374 = vsub.s32 0, %v1373
  %v1375 = vrot.slane %v1370, %v1374
  %v1377 = vadd.f32 %v1367, %v1375
  %vm1378 = vcmask 31744
  %v1379 = vsel %vm1378, %v1377, -inf
  %1380 = vmax.xlane.f32.xlu0 %v1379
  %v1381 = vpop.xlane.xlu0 %1380
  %v1382 = vsub.f32 %v1377, %v1381
  %v1383 = vmul.f32 %v1382, 1.442695
  %v1384 = vpow.pop %v1383
  %v1385 = vsel %vm1378, %v1384, 0.0
  %1386 = vadd.xlane.f32.xlu0 %v1385
  %v1387 = vpop.xlane.xlu0 %1386
  %v1388 = vrcp.pop %v1387
  %v1389 = vmul.f32 %v1384, %v1388
  %1390 = vst.msk [vmem:[%s13] sm:$0xff] %vm1378, %v1389
  // Predicated region
  $region54: #{_han_apply.3} parent=0 // pred_check
    _
  $region55: #{_han_apply.3} parent=0 // pred_check_branch
    %1392 = sbr.rel (0) target = $region57
  $region56: #{_han_apply.3} parent=0 // pred_region
    _
  $region57: #{_han_apply.3} parent=0 // pred_fallthru
    _
  // Predicated region
  $region58: #{_han_apply.3} parent=0 // pred_check
    _
  $region59: #{_han_apply.3} parent=0 // pred_check_branch
    %1394 = sbr.rel (0) target = $region61
  $region60: #{_han_apply.3} parent=0 // pred_region
    _
  $region61: #{_han_apply.3} parent=0 // pred_fallthru
    _

// kernel: _han_apply.2
$region0: #{_han_apply.2}
  #allocation0 [shape = 'u32[]', space=smem, size = 0x4, offset = 0x4, fixed_abs, tag = 'smem constant byte address 0x4 - core index']
  #allocation1 [shape = 'u32[144,128]{1,0:T(1,128)}', space=vmem, size = 0x12000, scoped, tag = 'internal scratch']
  #allocation2 [shape = 'f32[8,8,48]{2,1,0:T(8,128)}', space=vmem, size = 0x8000, scoped, tag = 'scratch operand']
  #allocation3 [shape = 'f32[8,8,48]{2,1,0:T(8,128)}', space=vmem, size = 0x8000, scoped, tag = 'scratch operand']
  #allocation4 [shape = 'f32[8,8,16]{2,1,0:T(8,128)}', space=vmem, size = 0x8000, scoped, tag = 'scratch operand']
  #allocation5 [shape = 'f32[8,8,16]{2,1,0:T(8,128)}', space=vmem, size = 0x8000, scoped, tag = 'scratch operand']
  %s0 = inlined_call_operand.vmem [shape: f32[64,16], index: 0, kind: input, shape index: {}]
  %s1 = inlined_call_operand.vmem [shape: s32[8,1], index: 1, kind: input, shape index: {}]
  %s2 = inlined_call_operand.vmem [shape: f32[8,8,1], index: 2, kind: input, shape index: {}]
  %s3 = inlined_call_operand.vmem [shape: f32[16,96], index: 3, kind: input, shape index: {}]
  %s4 = inlined_call_operand.vmem [shape: f32[1,96], index: 4, kind: input, shape index: {}]
  %s5 = inlined_call_operand.vmem [shape: f32[16,48], index: 5, kind: input, shape index: {}]
  %s6 = inlined_call_operand.vmem [shape: f32[16,48], index: 6, kind: input, shape index: {}]
  %s7 = inlined_call_operand.vmem [shape: f32[1,32], index: 7, kind: input, shape index: {}]
  %s8 = inlined_call_operand.vmem [shape: f32[32,32], index: 8, kind: input, shape index: {}]
  %s9 = inlined_call_operand.vmem [shape: f32[1,32], index: 9, kind: input, shape index: {}]
  %s10 = inlined_call_operand.vmem [shape: f32[32,32], index: 10, kind: input, shape index: {}]
  %s11 = inlined_call_operand.vmem [shape: f32[8,32], index: 11, kind: output, shape index: {}]
  %s12 = sld [smem:[#allocation0]]
  $region54: #{_han_apply.2} parent=0
    _
  %s14 = ssub.s32 1, %s12
  %s15 = scalar_select 0, %s14, %s12
  // Predicated region
  $region2: #{_han_apply.2} parent=0 // pred_check
    _
  $region3: #{_han_apply.2} parent=0 // pred_check_branch
    %17 = sbr.rel (0) target = $region5
  $region4: #{_han_apply.2} parent=0 // pred_region
    _
  $region5: #{_han_apply.2} parent=0 // pred_fallthru
    _
  // Predicated region
  $region6: #{_han_apply.2} parent=0 // pred_check
    _
  $region7: #{_han_apply.2} parent=0 // pred_check_branch
    %19 = sbr.rel (0) target = $region9
  $region8: #{_han_apply.2} parent=0 // pred_region
    _
  $region9: #{_han_apply.2} parent=0 // pred_fallthru
    _
  // Predicated region
  $region10: #{_han_apply.2} parent=0 // pred_check
    _
  $region11: #{_han_apply.2} parent=0 // pred_check_branch
    %21 = sbr.rel (0) target = $region13
  $region12: #{_han_apply.2} parent=0 // pred_region
    _
  $region13: #{_han_apply.2} parent=0 // pred_fallthru
    _
  // Predicated region
  $region14: #{_han_apply.2} parent=0 // pred_check
    _
  $region15: #{_han_apply.2} parent=0 // pred_check_branch
    %23 = sbr.rel (0) target = $region17
  $region16: #{_han_apply.2} parent=0 // pred_region
    _
  $region17: #{_han_apply.2} parent=0 // pred_fallthru
    _
  // Predicated region
  $region18: #{_han_apply.2} parent=0 // pred_check
    _
  $region19: #{_han_apply.2} parent=0 // pred_check_branch
    %25 = sbr.rel (0) target = $region21
  $region20: #{_han_apply.2} parent=0 // pred_region
    _
  $region21: #{_han_apply.2} parent=0 // pred_fallthru
    _
  // Predicated region
  $region22: #{_han_apply.2} parent=0 // pred_check
    _
  $region23: #{_han_apply.2} parent=0 // pred_check_branch
    %27 = sbr.rel (0) target = $region25
  $region24: #{_han_apply.2} parent=0 // pred_region
    _
  $region25: #{_han_apply.2} parent=0 // pred_fallthru
    _
  // Predicated region
  $region26: #{_han_apply.2} parent=0 // pred_check
    _
  $region27: #{_han_apply.2} parent=0 // pred_check_branch
    %29 = sbr.rel (0) target = $region29
  $region28: #{_han_apply.2} parent=0 // pred_region
    _
  $region29: #{_han_apply.2} parent=0 // pred_fallthru
    _
  // Predicated region
  $region30: #{_han_apply.2} parent=0 // pred_check
    _
  $region31: #{_han_apply.2} parent=0 // pred_check_branch
    %31 = sbr.rel (0) target = $region33
  $region32: #{_han_apply.2} parent=0 // pred_region
    _
  $region33: #{_han_apply.2} parent=0 // pred_fallthru
    _
  // Predicated region
  $region34: #{_han_apply.2} parent=0 // pred_check
    _
  $region35: #{_han_apply.2} parent=0 // pred_check_branch
    %33 = sbr.rel (0) target = $region37
  $region36: #{_han_apply.2} parent=0 // pred_region
    _
  $region37: #{_han_apply.2} parent=0 // pred_fallthru
    _
  // Predicated region
  $region38: #{_han_apply.2} parent=0 // pred_check
    _
  $region39: #{_han_apply.2} parent=0 // pred_check_branch
    %35 = sbr.rel (0) target = $region41
  $region40: #{_han_apply.2} parent=0 // pred_region
    _
  $region41: #{_han_apply.2} parent=0 // pred_fallthru
    _
  // Predicated region
  $region42: #{_han_apply.2} parent=0 // pred_check
    _
  $region43: #{_han_apply.2} parent=0 // pred_check_branch
    %37 = sbr.rel (0) target = $region45
  $region44: #{_han_apply.2} parent=0 // pred_region
    _
  $region45: #{_han_apply.2} parent=0 // pred_fallthru
    _
  %v38 = vld [vmem:[%s0] sm:$0xff]
  %v39 = vld [vmem:[%s0 + $0x8] sm:$0xff]
  %v40 = vld [vmem:[%s0 + $0x10] sm:$0xff]
  %v41 = vld [vmem:[%s0 + $0x18] sm:$0xff]
  %v42 = vld [vmem:[%s0 + $0x20] sm:$0xff]
  %v43 = vld [vmem:[%s0 + $0x28] sm:$0xff]
  %v44 = vld [vmem:[%s0 + $0x30] sm:$0xff]
  %v45 = vld [vmem:[%s0 + $0x38] sm:$0xff]
  %v46 = vld [vmem:[%s3] sm:$0xff]
  %v47 = vld [vmem:[%s3 + $0x8] sm:$0xff]
  %v48 = vld [vmem:[%s4] sm:$0x1]
  %v50 = vlaneseq
  %v51 = vshrl.u32 %v50, 7
  %v52 = vsub.s32 0, %v51
  %v53 = vrot.slane %v48, %v52
  %vm55 = vcmask 130048
  %v57 = vsel %vm55, %v38, 0
  %v60 = vsel %vm55, %v39, 0
  %v63 = vsel %vm55, %v40, 0
  %v66 = vsel %vm55, %v41, 0
  %v69 = vsel %vm55, %v42, 0
  %v72 = vsel %vm55, %v43, 0
  %v75 = vsel %vm55, %v44, 0
  %v78 = vsel %vm55, %v45, 0
  %80 = vmatprep.subr.mxu0 0.0
  %81 = vmatpush1.msra.mxu0 %v46
  %82 = vmatprep.subr.mxu0 0.0
  %83 = vmatpush1.msra.mxu0 %v47
  %84 = vmatprep.subr.mxu0 0.0
  %85 = vmatpush1.msra.mxu0 0.0
  %86 = vmatprep.subr.mxu0 0.0
  %87 = vmatpush1.msra.mxu0 0.0
  %88 = vmatprep.subr.mxu0 0.0
  %89 = vmatpush1.msra.mxu0 0.0
  %90 = vmatprep.subr.mxu0 0.0
  %91 = vmatpush1.msra.mxu0 0.0
  %92 = vmatprep.subr.mxu0 0.0
  %93 = vmatpush1.msra.mxu0 0.0
  %94 = vmatprep.subr.mxu0 0.0
  %95 = vmatpush1.msra.mxu0 0.0
  %96 = vmatprep.subr.mxu0 0.0
  %97 = vmatpush1.msra.mxu0 0.0
  %98 = vmatprep.subr.mxu0 0.0
  %99 = vmatpush1.msra.mxu0 0.0
  %100 = vmatprep.subr.mxu0 0.0
  %101 = vmatpush1.msra.mxu0 0.0
  %102 = vmatprep.subr.mxu0 0.0
  %103 = vmatpush1.msra.mxu0 0.0
  %104 = vmatprep.subr.mxu0 0.0
  %105 = vmatpush1.msra.mxu0 0.0
  %106 = vmatprep.subr.mxu0 0.0
  %107 = vmatpush1.msra.mxu0 0.0
  %108 = vmatprep.subr.mxu0 0.0
  %109 = vmatpush1.msra.mxu0 0.0
  %110 = vmatprep.subr.mxu0 0.0
  %111 = vmatpush1.msra.mxu0 0.0
  %112 = vmatprep.subr.mxu0 0.0
  %113 = vmatpush1.msra.mxu0 0.0
  %114 = vmatprep.subr.mxu0 0.0
  %115 = vmatpush1.msra.mxu0 0.0
  %116 = vmatprep.subr.mxu0 0.0
  %117 = vmatpush1.msra.mxu0 0.0
  %118 = vmatprep.subr.mxu0 0.0
  %119 = vmatpush1.msra.mxu0 0.0
  %120 = vmatprep.subr.mxu0 0.0
  %121 = vmatpush1.msra.mxu0 0.0
  %122 = vmatprep.subr.mxu0 0.0
  %123 = vmatpush1.msra.mxu0 0.0
  %124 = vmatprep.subr.mxu0 0.0
  %125 = vmatpush1.msra.mxu0 0.0
  %126 = vmatprep.subr.mxu0 0.0
  %127 = vmatpush1.msra.mxu0 0.0
  %128 = vmatprep.subr.mxu0 0.0
  %129 = vmatpush1.msra.mxu0 0.0
  %130 = vmatprep.subr.mxu0 0.0
  %131 = vmatpush1.msra.mxu0 0.0
  %132 = vmatprep.subr.mxu0 0.0
  %133 = vmatpush1.msra.mxu0 0.0
  %134 = vmatprep.subr.mxu0 0.0
  %135 = vmatpush1.msra.mxu0 0.0
  %136 = vmatprep.subr.mxu0 0.0
  %137 = vmatpush1.msra.mxu0 0.0
  %138 = vmatprep.subr.mxu0 0.0
  %139 = vmatpush1.msra.mxu0 0.0
  %140 = vmatprep.subr.mxu0 0.0
  %141 = vmatpush1.msra.mxu0 0.0
  %142 = vmatprep.subr.mxu0 0.0
  %143 = vmatpush1.msra.mxu0 0.0
  %144 = vmatprep.mubr.f32.mxu0 0.0
  %145 = vmatmul.mubr.f32.gmra.mrb[0].mxu0 %v57
  %v146 = vpop.f32.mrb[0].mxu0
  %v147 = vadd.f32 %v53, %v146
  %v148 = vpop.f32.mrb[0].mxu0
  %149 = vmatprep.mubr.f32.mxu0 0.0
  %150 = vmatmul.mubr.f32.gmra.mrb[0].mxu0 %v60
  %v151 = vpop.f32.mrb[0].mxu0
  %v152 = vadd.f32 %v53, %v151
  %v153 = vpop.f32.mrb[0].mxu0
  %154 = vmatprep.mubr.f32.mxu0 0.0
  %155 = vmatmul.mubr.f32.gmra.mrb[0].mxu0 %v63
  %v156 = vpop.f32.mrb[0].mxu0
  %v157 = vadd.f32 %v53, %v156
  %v158 = vpop.f32.mrb[0].mxu0
  %159 = vmatprep.mubr.f32.mxu0 0.0
  %160 = vmatmul.mubr.f32.gmra.mrb[0].mxu0 %v66
  %v161 = vpop.f32.mrb[0].mxu0
  %v162 = vadd.f32 %v53, %v161
  %v163 = vpop.f32.mrb[0].mxu0
  %164 = vmatprep.mubr.f32.mxu0 0.0
  %165 = vmatmul.mubr.f32.gmra.mrb[0].mxu0 %v69
  %v166 = vpop.f32.mrb[0].mxu0
  %v167 = vadd.f32 %v53, %v166
  %v168 = vpop.f32.mrb[0].mxu0
  %169 = vmatprep.mubr.f32.mxu0 0.0
  %170 = vmatmul.mubr.f32.gmra.mrb[0].mxu0 %v72
  %v171 = vpop.f32.mrb[0].mxu0
  %v172 = vadd.f32 %v53, %v171
  %v173 = vpop.f32.mrb[0].mxu0
  %174 = vmatprep.mubr.f32.mxu0 0.0
  %175 = vmatmul.mubr.f32.gmra.mrb[0].mxu0 %v75
  %v176 = vpop.f32.mrb[0].mxu0
  %v177 = vadd.f32 %v53, %v176
  %v178 = vpop.f32.mrb[0].mxu0
  %179 = vmatprep.mubr.f32.mxu0 0.0
  %180 = vmatmul.mubr.f32.gmra.mrb[0].mxu0 %v78
  %v181 = vpop.f32.mrb[0].mxu0
  %v182 = vadd.f32 %v53, %v181
  %v183 = vpop.f32.mrb[0].mxu0
  %184 = vdwg.mxu0
  %vm185 = vcmask 392192
  %186 = vst.msk [vmem:[#allocation2] sm:$0xff] %vm185, %v147
  %187 = vst.msk [vmem:[#allocation2 + $0x8] sm:$0xff] %vm185, %v152
  %188 = vst.msk [vmem:[#allocation2 + $0x10] sm:$0xff] %vm185, %v157
  %189 = vst.msk [vmem:[#allocation2 + $0x18] sm:$0xff] %vm185, %v162
  %190 = vst.msk [vmem:[#allocation2 + $0x20] sm:$0xff] %vm185, %v167
  %191 = vst.msk [vmem:[#allocation2 + $0x28] sm:$0xff] %vm185, %v172
  %192 = vst.msk [vmem:[#allocation2 + $0x30] sm:$0xff] %vm185, %v177
  %193 = vst.msk [vmem:[#allocation2 + $0x38] sm:$0xff] %vm185, %v182
  %202 = vrot.lane.b32.xlu0 %v147, 80
  %v203 = vpop.permute.xlu0 %202
  %204 = vrot.lane.b32.xlu0 %v152, 80
  %v205 = vpop.permute.xlu0 %204
  %206 = vrot.lane.b32.xlu0 %v157, 80
  %v207 = vpop.permute.xlu0 %206
  %208 = vrot.lane.b32.xlu0 %v162, 80
  %v209 = vpop.permute.xlu0 %208
  %210 = vrot.lane.b32.xlu0 %v167, 80
  %v211 = vpop.permute.xlu0 %210
  %212 = vrot.lane.b32.xlu0 %v172, 80
  %v213 = vpop.permute.xlu0 %212
  %214 = vrot.lane.b32.xlu0 %v177, 80
  %v215 = vpop.permute.xlu0 %214
  %216 = vrot.lane.b32.xlu0 %v182, 80
  %v217 = vpop.permute.xlu0 %216
  %226 = vst.msk [vmem:[#allocation3] sm:$0xff] %vm185, %v203
  %227 = vst.msk [vmem:[#allocation3 + $0x8] sm:$0xff] %vm185, %v205
  %228 = vst.msk [vmem:[#allocation3 + $0x10] sm:$0xff] %vm185, %v207
  %229 = vst.msk [vmem:[#allocation3 + $0x18] sm:$0xff] %vm185, %v209
  %230 = vst.msk [vmem:[#allocation3 + $0x20] sm:$0xff] %vm185, %v211
  %231 = vst.msk [vmem:[#allocation3 + $0x28] sm:$0xff] %vm185, %v213
  %232 = vst.msk [vmem:[#allocation3 + $0x30] sm:$0xff] %vm185, %v215
  %233 = vst.msk [vmem:[#allocation3 + $0x38] sm:$0xff] %vm185, %v217
  %v234 = vld [vmem:[%s1] sm:$0xff]
  %v235 = vld [vmem:[%s7] sm:$0x1]
  %v236 = vld [vmem:[%s5] sm:$0xff]
  %v237 = vld [vmem:[%s5 + $0x8] sm:$0xff]
  %v238 = vld [vmem:[%s6] sm:$0xff]
  %v239 = vld [vmem:[%s6 + $0x8] sm:$0xff]
  %v241 = vsel %vm55, 0.0, 0
  %243 = vmatprep.subr.mxu0 0.0
  %244 = vmatpush1.msra.mxu0 %v236
  %245 = vmatprep.subr.mxu0 0.0
  %246 = vmatpush1.msra.mxu0 %v237
  %247 = vmatprep.subr.mxu0 0.0
  %248 = vmatpush1.msra.mxu0 0.0
  %249 = vmatprep.subr.mxu0 0.0
  %250 = vmatpush1.msra.mxu0 0.0
  %251 = vmatprep.subr.mxu0 0.0
  %252 = vmatpush1.msra.mxu0 0.0
  %253 = vmatprep.subr.mxu0 0.0
  %254 = vmatpush1.msra.mxu0 0.0
  %255 = vmatprep.subr.mxu0 0.0
  %256 = vmatpush1.msra.mxu0 0.0
  %257 = vmatprep.subr.mxu0 0.0
  %258 = vmatpush1.msra.mxu0 0.0
  %259 = vmatprep.subr.mxu0 0.0
  %260 = vmatpush1.msra.mxu0 0.0
  %261 = vmatprep.subr.mxu0 0.0
  %262 = vmatpush1.msra.mxu0 0.0
  %263 = vmatprep.subr.mxu0 0.0
  %264 = vmatpush1.msra.mxu0 0.0
  %265 = vmatprep.subr.mxu0 0.0
  %266 = vmatpush1.msra.mxu0 0.0
  %267 = vmatprep.subr.mxu0 0.0
  %268 = vmatpush1.msra.mxu0 0.0
  %269 = vmatprep.subr.mxu0 0.0
  %270 = vmatpush1.msra.mxu0 0.0
  %271 = vmatprep.subr.mxu0 0.0
  %272 = vmatpush1.msra.mxu0 0.0
  %273 = vmatprep.subr.mxu0 0.0
  %274 = vmatpush1.msra.mxu0 0.0
  %275 = vmatprep.subr.mxu0 0.0
  %276 = vmatpush1.msra.mxu0 0.0
  %277 = vmatprep.subr.mxu0 0.0
  %278 = vmatpush1.msra.mxu0 0.0
  %279 = vmatprep.subr.mxu0 0.0
  %280 = vmatpush1.msra.mxu0 0.0
  %281 = vmatprep.subr.mxu0 0.0
  %282 = vmatpush1.msra.mxu0 0.0
  %283 = vmatprep.subr.mxu0 0.0
  %284 = vmatpush1.msra.mxu0 0.0
  %285 = vmatprep.subr.mxu0 0.0
  %286 = vmatpush1.msra.mxu0 0.0
  %287 = vmatprep.subr.mxu0 0.0
  %288 = vmatpush1.msra.mxu0 0.0
  %289 = vmatprep.subr.mxu0 0.0
  %290 = vmatpush1.msra.mxu0 0.0
  %291 = vmatprep.subr.mxu0 0.0
  %292 = vmatpush1.msra.mxu0 0.0
  %293 = vmatprep.subr.mxu0 0.0
  %294 = vmatpush1.msra.mxu0 0.0
  %295 = vmatprep.subr.mxu0 0.0
  %296 = vmatpush1.msra.mxu0 0.0
  %297 = vmatprep.subr.mxu0 0.0
  %298 = vmatpush1.msra.mxu0 0.0
  %299 = vmatprep.subr.mxu0 0.0
  %300 = vmatpush1.msra.mxu0 0.0
  %301 = vmatprep.subr.mxu0 0.0
  %302 = vmatpush1.msra.mxu0 0.0
  %303 = vmatprep.subr.mxu0 0.0
  %304 = vmatpush1.msra.mxu0 0.0
  %305 = vmatprep.subr.mxu0 0.0
  %306 = vmatpush1.msra.mxu0 0.0
  %307 = vmatprep.mubr.f32.mxu0 0.0
  %308 = vmatmul.mubr.f32.gmra.mrb[0].mxu0 %v241
  %v309 = vpop.f32.mrb[0].mxu0
  %v310 = vadd.f32 0.0, %v309
  %v311 = vpop.f32.mrb[0].mxu0
  %312 = vdwg.mxu0
  %313 = vmatprep.subr.mxu0 0.0
  %314 = vmatpush1.msra.mxu0 %v238
  %315 = vmatprep.subr.mxu0 0.0
  %316 = vmatpush1.msra.mxu0 %v239
  %317 = vmatprep.subr.mxu0 0.0
  %318 = vmatpush1.msra.mxu0 0.0
  %319 = vmatprep.subr.mxu0 0.0
  %320 = vmatpush1.msra.mxu0 0.0
  %321 = vmatprep.subr.mxu0 0.0
  %322 = vmatpush1.msra.mxu0 0.0
  %323 = vmatprep.subr.mxu0 0.0
  %324 = vmatpush1.msra.mxu0 0.0
  %325 = vmatprep.subr.mxu0 0.0
  %326 = vmatpush1.msra.mxu0 0.0
  %327 = vmatprep.subr.mxu0 0.0
  %328 = vmatpush1.msra.mxu0 0.0
  %329 = vmatprep.subr.mxu0 0.0
  %330 = vmatpush1.msra.mxu0 0.0
  %331 = vmatprep.subr.mxu0 0.0
  %332 = vmatpush1.msra.mxu0 0.0
  %333 = vmatprep.subr.mxu0 0.0
  %334 = vmatpush1.msra.mxu0 0.0
  %335 = vmatprep.subr.mxu0 0.0
  %336 = vmatpush1.msra.mxu0 0.0
  %337 = vmatprep.subr.mxu0 0.0
  %338 = vmatpush1.msra.mxu0 0.0
  %339 = vmatprep.subr.mxu0 0.0
  %340 = vmatpush1.msra.mxu0 0.0
  %341 = vmatprep.subr.mxu0 0.0
  %342 = vmatpush1.msra.mxu0 0.0
  %343 = vmatprep.subr.mxu0 0.0
  %344 = vmatpush1.msra.mxu0 0.0
  %345 = vmatprep.subr.mxu0 0.0
  %346 = vmatpush1.msra.mxu0 0.0
  %347 = vmatprep.subr.mxu0 0.0
  %348 = vmatpush1.msra.mxu0 0.0
  %349 = vmatprep.subr.mxu0 0.0
  %350 = vmatpush1.msra.mxu0 0.0
  %351 = vmatprep.subr.mxu0 0.0
  %352 = vmatpush1.msra.mxu0 0.0
  %353 = vmatprep.subr.mxu0 0.0
  %354 = vmatpush1.msra.mxu0 0.0
  %355 = vmatprep.subr.mxu0 0.0
  %356 = vmatpush1.msra.mxu0 0.0
  %357 = vmatprep.subr.mxu0 0.0
  %358 = vmatpush1.msra.mxu0 0.0
  %359 = vmatprep.subr.mxu0 0.0
  %360 = vmatpush1.msra.mxu0 0.0
  %361 = vmatprep.subr.mxu0 0.0
  %362 = vmatpush1.msra.mxu0 0.0
  %363 = vmatprep.subr.mxu0 0.0
  %364 = vmatpush1.msra.mxu0 0.0
  %365 = vmatprep.subr.mxu0 0.0
  %366 = vmatpush1.msra.mxu0 0.0
  %367 = vmatprep.subr.mxu0 0.0
  %368 = vmatpush1.msra.mxu0 0.0
  %369 = vmatprep.subr.mxu0 0.0
  %370 = vmatpush1.msra.mxu0 0.0
  %371 = vmatprep.subr.mxu0 0.0
  %372 = vmatpush1.msra.mxu0 0.0
  %373 = vmatprep.subr.mxu0 0.0
  %374 = vmatpush1.msra.mxu0 0.0
  %375 = vmatprep.subr.mxu0 0.0
  %376 = vmatpush1.msra.mxu0 0.0
  %377 = vmatprep.mubr.f32.mxu0 0.0
  %378 = vmatmul.mubr.f32.gmra.mrb[0].mxu0 %v241
  %v379 = vpop.f32.mrb[0].mxu0
  %v380 = vadd.f32 0.0, %v379
  %v381 = vpop.f32.mrb[0].mxu0
  %382 = vdwg.mxu0
  %v383 = vld [vmem:[#allocation2] sm:$0xff]
  %v384 = vadd.f32 %v383, %v310
  %v385 = vxor.u32 %v384, 2147483648
  %v386 = vmul.f32 %v385, 1.442695
  %v387 = vpow.pop %v386
  %v388 = vadd.f32 %v387, 1.0
  %v389 = vrcp.pop %v388
  %v390 = vmul.f32 1.0, %v389
  %v392 = vlaneseq
  %v393 = vshrl.u32 %v392, 7
  %v394 = vsub.s32 0, %v393
  %v395 = vrot.slane %v235, %v394
  %396 = vrot.lane.b32.xlu0 %v395, 32
  %v397 = vpop.permute.xlu0 %396
  %v399 = vadd.f32 %v310, %v397
  %401 = vrot.lane.b32.xlu0 %v399, 96
  %v402 = vpop.permute.xlu0 %401
  %v404 = vmul.f32 %v390, %v402
  %406 = vrot.lane.b32.xlu0 %v404, 32
  %v407 = vpop.permute.xlu0 %406
  %v409 = vadd.f32 %v383, %v407
  %v410 = vtanh.pop %v409
  %v411 = vsub.f32 1.0, %v390
  %413 = vrot.lane.b32.xlu0 %v410, 112
  %v414 = vpop.permute.xlu0 %413
  %v416 = vmul.f32 %v411, %v414
  %v417 = vmul.f32 %v390, 0.0
  %v418 = vadd.f32 %v416, %v417
  %s419 = scalar_lea.vmem [#allocation3], 56
  %v420 = vld [vmem:[%s419] sm:$0xff]
  %v421 = vadd.f32 %v420, %v380
  %v422 = vxor.u32 %v421, 2147483648
  %v423 = vmul.f32 %v422, 1.442695
  %v424 = vpow.pop %v423
  %v425 = vadd.f32 %v424, 1.0
  %v426 = vrcp.pop %v425
  %v427 = vmul.f32 1.0, %v426
  %428 = vrot.lane.b32.xlu0 %v395, 16
  %v429 = vpop.permute.xlu0 %428
  %v431 = vadd.f32 %v380, %v429
  %433 = vrot.lane.b32.xlu0 %v431, 96
  %v434 = vpop.permute.xlu0 %433
  %v436 = vmul.f32 %v427, %v434
  %438 = vrot.lane.b32.xlu0 %v436, 32
  %v439 = vpop.permute.xlu0 %438
  %v441 = vadd.f32 %v420, %v439
  %v442 = vtanh.pop %v441
  %v443 = vsub.f32 1.0, %v427
  %445 = vrot.lane.b32.xlu0 %v442, 112
  %v446 = vpop.permute.xlu0 %445
  %v448 = vmul.f32 %v443, %v446
  %v449 = vmul.f32 %v427, 0.0
  %v450 = vadd.f32 %v448, %v449
  %vm451 = vcmp.gt.s32.totalorder %v234, 0
  %vm452 = vcmp.gt.s32.totalorder %v234, 7
  %v453 = vsel %vm451, 1, 0
  %454 = vset.pattern.permute.xlu0 0
  %455 = vperm.xlu0 %454, %v453
  %v456 = vpop.permute.xlu0 %455
  %vm457 = vcmp.eq.s32.totalorder %v456, 1
  %v458 = vsel %vm457, %v418, 0.0
  %460 = vrot.lane.b32.xlu0 %v458, 112
  %v461 = vpop.permute.xlu0 %460
  %463 = vst.msk [vmem:[#allocation4] sm:$0xff] %vm55, %v461
  %v464 = vsel %vm452, 1, 0
  %465 = vset.pattern.permute.xlu0 0
  %466 = vperm.xlu0 %465, %v464
  %v467 = vpop.permute.xlu0 %466
  %vm468 = vcmp.eq.s32.totalorder %v467, 1
  %v469 = vsel %vm468, %v450, 0.0
  %471 = vrot.lane.b32.xlu0 %v469, 112
  %v472 = vpop.permute.xlu0 %471
  %s474 = scalar_lea.vmem [#allocation5], 56
  %475 = vst.msk [vmem:[%s474] sm:$0xff] %vm55, %v472
  %v476 = vsel %vm55, %v461, 0
  %478 = vmatprep.subr.mxu0 0.0
  %479 = vmatpush1.msra.mxu0 %v236
  %480 = vmatprep.subr.mxu0 0.0
  %481 = vmatpush1.msra.mxu0 %v237
  %482 = vmatprep.subr.mxu0 0.0
  %483 = vmatpush1.msra.mxu0 0.0
  %484 = vmatprep.subr.mxu0 0.0
  %485 = vmatpush1.msra.mxu0 0.0
  %486 = vmatprep.subr.mxu0 0.0
  %487 = vmatpush1.msra.mxu0 0.0
  %488 = vmatprep.subr.mxu0 0.0
  %489 = vmatpush1.msra.mxu0 0.0
  %490 = vmatprep.subr.mxu0 0.0
  %491 = vmatpush1.msra.mxu0 0.0
  %492 = vmatprep.subr.mxu0 0.0
  %493 = vmatpush1.msra.mxu0 0.0
  %494 = vmatprep.subr.mxu0 0.0
  %495 = vmatpush1.msra.mxu0 0.0
  %496 = vmatprep.subr.mxu0 0.0
  %497 = vmatpush1.msra.mxu0 0.0
  %498 = vmatprep.subr.mxu0 0.0
  %499 = vmatpush1.msra.mxu0 0.0
  %500 = vmatprep.subr.mxu0 0.0
  %501 = vmatpush1.msra.mxu0 0.0
  %502 = vmatprep.subr.mxu0 0.0
  %503 = vmatpush1.msra.mxu0 0.0
  %504 = vmatprep.subr.mxu0 0.0
  %505 = vmatpush1.msra.mxu0 0.0
  %506 = vmatprep.subr.mxu0 0.0
  %507 = vmatpush1.msra.mxu0 0.0
  %508 = vmatprep.subr.mxu0 0.0
  %509 = vmatpush1.msra.mxu0 0.0
  %510 = vmatprep.subr.mxu0 0.0
  %511 = vmatpush1.msra.mxu0 0.0
  %512 = vmatprep.subr.mxu0 0.0
  %513 = vmatpush1.msra.mxu0 0.0
  %514 = vmatprep.subr.mxu0 0.0
  %515 = vmatpush1.msra.mxu0 0.0
  %516 = vmatprep.subr.mxu0 0.0
  %517 = vmatpush1.msra.mxu0 0.0
  %518 = vmatprep.subr.mxu0 0.0
  %519 = vmatpush1.msra.mxu0 0.0
  %520 = vmatprep.subr.mxu0 0.0
  %521 = vmatpush1.msra.mxu0 0.0
  %522 = vmatprep.subr.mxu0 0.0
  %523 = vmatpush1.msra.mxu0 0.0
  %524 = vmatprep.subr.mxu0 0.0
  %525 = vmatpush1.msra.mxu0 0.0
  %526 = vmatprep.subr.mxu0 0.0
  %527 = vmatpush1.msra.mxu0 0.0
  %528 = vmatprep.subr.mxu0 0.0
  %529 = vmatpush1.msra.mxu0 0.0
  %530 = vmatprep.subr.mxu0 0.0
  %531 = vmatpush1.msra.mxu0 0.0
  %532 = vmatprep.subr.mxu0 0.0
  %533 = vmatpush1.msra.mxu0 0.0
  %534 = vmatprep.subr.mxu0 0.0
  %535 = vmatpush1.msra.mxu0 0.0
  %536 = vmatprep.subr.mxu0 0.0
  %537 = vmatpush1.msra.mxu0 0.0
  %538 = vmatprep.subr.mxu0 0.0
  %539 = vmatpush1.msra.mxu0 0.0
  %540 = vmatprep.subr.mxu0 0.0
  %541 = vmatpush1.msra.mxu0 0.0
  %542 = vmatprep.mubr.f32.mxu0 0.0
  %543 = vmatmul.mubr.f32.gmra.mrb[0].mxu0 %v476
  %v544 = vpop.f32.mrb[0].mxu0
  %v545 = vadd.f32 0.0, %v544
  %v546 = vpop.f32.mrb[0].mxu0
  %547 = vdwg.mxu0
  %v548 = vsel %vm55, %v472, 0
  %550 = vmatprep.subr.mxu0 0.0
  %551 = vmatpush1.msra.mxu0 %v238
  %552 = vmatprep.subr.mxu0 0.0
  %553 = vmatpush1.msra.mxu0 %v239
  %554 = vmatprep.subr.mxu0 0.0
  %555 = vmatpush1.msra.mxu0 0.0
  %556 = vmatprep.subr.mxu0 0.0
  %557 = vmatpush1.msra.mxu0 0.0
  %558 = vmatprep.subr.mxu0 0.0
  %559 = vmatpush1.msra.mxu0 0.0
  %560 = vmatprep.subr.mxu0 0.0
  %561 = vmatpush1.msra.mxu0 0.0
  %562 = vmatprep.subr.mxu0 0.0
  %563 = vmatpush1.msra.mxu0 0.0
  %564 = vmatprep.subr.mxu0 0.0
  %565 = vmatpush1.msra.mxu0 0.0
  %566 = vmatprep.subr.mxu0 0.0
  %567 = vmatpush1.msra.mxu0 0.0
  %568 = vmatprep.subr.mxu0 0.0
  %569 = vmatpush1.msra.mxu0 0.0
  %570 = vmatprep.subr.mxu0 0.0
  %571 = vmatpush1.msra.mxu0 0.0
  %572 = vmatprep.subr.mxu0 0.0
  %573 = vmatpush1.msra.mxu0 0.0
  %574 = vmatprep.subr.mxu0 0.0
  %575 = vmatpush1.msra.mxu0 0.0
  %576 = vmatprep.subr.mxu0 0.0
  %577 = vmatpush1.msra.mxu0 0.0
  %578 = vmatprep.subr.mxu0 0.0
  %579 = vmatpush1.msra.mxu0 0.0
  %580 = vmatprep.subr.mxu0 0.0
  %581 = vmatpush1.msra.mxu0 0.0
  %582 = vmatprep.subr.mxu0 0.0
  %583 = vmatpush1.msra.mxu0 0.0
  %584 = vmatprep.subr.mxu0 0.0
  %585 = vmatpush1.msra.mxu0 0.0
  %586 = vmatprep.subr.mxu0 0.0
  %587 = vmatpush1.msra.mxu0 0.0
  %588 = vmatprep.subr.mxu0 0.0
  %589 = vmatpush1.msra.mxu0 0.0
  %590 = vmatprep.subr.mxu0 0.0
  %591 = vmatpush1.msra.mxu0 0.0
  %592 = vmatprep.subr.mxu0 0.0
  %593 = vmatpush1.msra.mxu0 0.0
  %594 = vmatprep.subr.mxu0 0.0
  %595 = vmatpush1.msra.mxu0 0.0
  %596 = vmatprep.subr.mxu0 0.0
  %597 = vmatpush1.msra.mxu0 0.0
  %598 = vmatprep.subr.mxu0 0.0
  %599 = vmatpush1.msra.mxu0 0.0
  %600 = vmatprep.subr.mxu0 0.0
  %601 = vmatpush1.msra.mxu0 0.0
  %602 = vmatprep.subr.mxu0 0.0
  %603 = vmatpush1.msra.mxu0 0.0
  %604 = vmatprep.subr.mxu0 0.0
  %605 = vmatpush1.msra.mxu0 0.0
  %606 = vmatprep.subr.mxu0 0.0
  %607 = vmatpush1.msra.mxu0 0.0
  %608 = vmatprep.subr.mxu0 0.0
  %609 = vmatpush1.msra.mxu0 0.0
  %610 = vmatprep.subr.mxu0 0.0
  %611 = vmatpush1.msra.mxu0 0.0
  %612 = vmatprep.subr.mxu0 0.0
  %613 = vmatpush1.msra.mxu0 0.0
  %614 = vmatprep.mubr.f32.mxu0 0.0
  %615 = vmatmul.mubr.f32.gmra.mrb[0].mxu0 %v548
  %v616 = vpop.f32.mrb[0].mxu0
  %v617 = vadd.f32 0.0, %v616
  %v618 = vpop.f32.mrb[0].mxu0
  %619 = vdwg.mxu0
  %s620 = scalar_lea.vmem [#allocation2], 8
  %v621 = vld [vmem:[%s620] sm:$0xff]
  %v622 = vadd.f32 %v621, %v545
  %v623 = vxor.u32 %v622, 2147483648
  %v624 = vmul.f32 %v623, 1.442695
  %v625 = vpow.pop %v624
  %v626 = vadd.f32 %v625, 1.0
  %v627 = vrcp.pop %v626
  %v628 = vmul.f32 1.0, %v627
  %v629 = vadd.f32 %v545, %v397
  %631 = vrot.lane.b32.xlu0 %v629, 96
  %v632 = vpop.permute.xlu0 %631
  %v634 = vmul.f32 %v628, %v632
  %636 = vrot.lane.b32.xlu0 %v634, 32
  %v637 = vpop.permute.xlu0 %636
  %v639 = vadd.f32 %v621, %v637
  %v640 = vtanh.pop %v639
  %v641 = vsub.f32 1.0, %v628
  %643 = vrot.lane.b32.xlu0 %v640, 112
  %v644 = vpop.permute.xlu0 %643
  %v646 = vmul.f32 %v641, %v644
  %v647 = vmul.f32 %v628, %v458
  %v648 = vadd.f32 %v646, %v647
  %s649 = scalar_lea.vmem [#allocation3], 48
  %v650 = vld [vmem:[%s649] sm:$0xff]
  %v651 = vadd.f32 %v650, %v617
  %v652 = vxor.u32 %v651, 2147483648
  %v653 = vmul.f32 %v652, 1.442695
  %v654 = vpow.pop %v653
  %v655 = vadd.f32 %v654, 1.0
  %v656 = vrcp.pop %v655
  %v657 = vmul.f32 1.0, %v656
  %v658 = vadd.f32 %v617, %v429
  %660 = vrot.lane.b32.xlu0 %v658, 96
  %v661 = vpop.permute.xlu0 %660
  %v663 = vmul.f32 %v657, %v661
  %665 = vrot.lane.b32.xlu0 %v663, 32
  %v666 = vpop.permute.xlu0 %665
  %v668 = vadd.f32 %v650, %v666
  %v669 = vtanh.pop %v668
  %v670 = vsub.f32 1.0, %v657
  %672 = vrot.lane.b32.xlu0 %v669, 112
  %v673 = vpop.permute.xlu0 %672
  %v675 = vmul.f32 %v670, %v673
  %v676 = vmul.f32 %v657, %v469
  %v677 = vadd.f32 %v675, %v676
  %vm678 = vcmp.gt.s32.totalorder %v234, 1
  %vm679 = vcmp.gt.s32.totalorder %v234, 6
  %v680 = vsel %vm678, 1, 0
  %681 = vset.pattern.permute.xlu0 0
  %682 = vperm.xlu0 %681, %v680
  %v683 = vpop.permute.xlu0 %682
  %vm684 = vcmp.eq.s32.totalorder %v683, 1
  %v685 = vsel %vm684, %v648, 0.0
  %687 = vrot.lane.b32.xlu0 %v685, 112
  %v688 = vpop.permute.xlu0 %687
  %s690 = scalar_lea.vmem [#allocation4], 8
  %691 = vst.msk [vmem:[%s690] sm:$0xff] %vm55, %v688
  %v692 = vsel %vm679, 1, 0
  %693 = vset.pattern.permute.xlu0 0
  %694 = vperm.xlu0 %693, %v692
  %v695 = vpop.permute.xlu0 %694
  %vm696 = vcmp.eq.s32.totalorder %v695, 1
  %v697 = vsel %vm696, %v677, 0.0
  %699 = vrot.lane.b32.xlu0 %v697, 112
  %v700 = vpop.permute.xlu0 %699
  %s702 = scalar_lea.vmem [#allocation5], 48
  %703 = vst.msk [vmem:[%s702] sm:$0xff] %vm55, %v700
  %v704 = vsel %vm684, %v648, %v458
  %v705 = vsel %vm696, %v677, %v469
  %707 = vrot.lane.b32.xlu0 %v704, 112
  %v708 = vpop.permute.xlu0 %707
  %v709 = vsel %vm55, %v708, 0
  %711 = vmatprep.subr.mxu0 0.0
  %712 = vmatpush1.msra.mxu0 %v236
  %713 = vmatprep.subr.mxu0 0.0
  %714 = vmatpush1.msra.mxu0 %v237
  %715 = vmatprep.subr.mxu0 0.0
  %716 = vmatpush1.msra.mxu0 0.0
  %717 = vmatprep.subr.mxu0 0.0
  %718 = vmatpush1.msra.mxu0 0.0
  %719 = vmatprep.subr.mxu0 0.0
  %720 = vmatpush1.msra.mxu0 0.0
  %721 = vmatprep.subr.mxu0 0.0
  %722 = vmatpush1.msra.mxu0 0.0
  %723 = vmatprep.subr.mxu0 0.0
  %724 = vmatpush1.msra.mxu0 0.0
  %725 = vmatprep.subr.mxu0 0.0
  %726 = vmatpush1.msra.mxu0 0.0
  %727 = vmatprep.subr.mxu0 0.0
  %728 = vmatpush1.msra.mxu0 0.0
  %729 = vmatprep.subr.mxu0 0.0
  %730 = vmatpush1.msra.mxu0 0.0
  %731 = vmatprep.subr.mxu0 0.0
  %732 = vmatpush1.msra.mxu0 0.0
  %733 = vmatprep.subr.mxu0 0.0
  %734 = vmatpush1.msra.mxu0 0.0
  %735 = vmatprep.subr.mxu0 0.0
  %736 = vmatpush1.msra.mxu0 0.0
  %737 = vmatprep.subr.mxu0 0.0
  %738 = vmatpush1.msra.mxu0 0.0
  %739 = vmatprep.subr.mxu0 0.0
  %740 = vmatpush1.msra.mxu0 0.0
  %741 = vmatprep.subr.mxu0 0.0
  %742 = vmatpush1.msra.mxu0 0.0
  %743 = vmatprep.subr.mxu0 0.0
  %744 = vmatpush1.msra.mxu0 0.0
  %745 = vmatprep.subr.mxu0 0.0
  %746 = vmatpush1.msra.mxu0 0.0
  %747 = vmatprep.subr.mxu0 0.0
  %748 = vmatpush1.msra.mxu0 0.0
  %749 = vmatprep.subr.mxu0 0.0
  %750 = vmatpush1.msra.mxu0 0.0
  %751 = vmatprep.subr.mxu0 0.0
  %752 = vmatpush1.msra.mxu0 0.0
  %753 = vmatprep.subr.mxu0 0.0
  %754 = vmatpush1.msra.mxu0 0.0
  %755 = vmatprep.subr.mxu0 0.0
  %756 = vmatpush1.msra.mxu0 0.0
  %757 = vmatprep.subr.mxu0 0.0
  %758 = vmatpush1.msra.mxu0 0.0
  %759 = vmatprep.subr.mxu0 0.0
  %760 = vmatpush1.msra.mxu0 0.0
  %761 = vmatprep.subr.mxu0 0.0
  %762 = vmatpush1.msra.mxu0 0.0
  %763 = vmatprep.subr.mxu0 0.0
  %764 = vmatpush1.msra.mxu0 0.0
  %765 = vmatprep.subr.mxu0 0.0
  %766 = vmatpush1.msra.mxu0 0.0
  %767 = vmatprep.subr.mxu0 0.0
  %768 = vmatpush1.msra.mxu0 0.0
  %769 = vmatprep.subr.mxu0 0.0
  %770 = vmatpush1.msra.mxu0 0.0
  %771 = vmatprep.subr.mxu0 0.0
  %772 = vmatpush1.msra.mxu0 0.0
  %773 = vmatprep.subr.mxu0 0.0
  %774 = vmatpush1.msra.mxu0 0.0
  %775 = vmatprep.mubr.f32.mxu0 0.0
  %776 = vmatmul.mubr.f32.gmra.mrb[0].mxu0 %v709
  %v777 = vpop.f32.mrb[0].mxu0
  %v778 = vadd.f32 0.0, %v777
  %v779 = vpop.f32.mrb[0].mxu0
  %780 = vdwg.mxu0
  %782 = vrot.lane.b32.xlu0 %v705, 112
  %v783 = vpop.permute.xlu0 %782
  %v784 = vsel %vm55, %v783, 0
  %786 = vmatprep.subr.mxu0 0.0
  %787 = vmatpush1.msra.mxu0 %v238
  %788 = vmatprep.subr.mxu0 0.0
  %789 = vmatpush1.msra.mxu0 %v239
  %790 = vmatprep.subr.mxu0 0.0
  %791 = vmatpush1.msra.mxu0 0.0
  %792 = vmatprep.subr.mxu0 0.0
  %793 = vmatpush1.msra.mxu0 0.0
  %794 = vmatprep.subr.mxu0 0.0
  %795 = vmatpush1.msra.mxu0 0.0
  %796 = vmatprep.subr.mxu0 0.0
  %797 = vmatpush1.msra.mxu0 0.0
  %798 = vmatprep.subr.mxu0 0.0
  %799 = vmatpush1.msra.mxu0 0.0
  %800 = vmatprep.subr.mxu0 0.0
  %801 = vmatpush1.msra.mxu0 0.0
  %802 = vmatprep.subr.mxu0 0.0
  %803 = vmatpush1.msra.mxu0 0.0
  %804 = vmatprep.subr.mxu0 0.0
  %805 = vmatpush1.msra.mxu0 0.0
  %806 = vmatprep.subr.mxu0 0.0
  %807 = vmatpush1.msra.mxu0 0.0
  %808 = vmatprep.subr.mxu0 0.0
  %809 = vmatpush1.msra.mxu0 0.0
  %810 = vmatprep.subr.mxu0 0.0
  %811 = vmatpush1.msra.mxu0 0.0
  %812 = vmatprep.subr.mxu0 0.0
  %813 = vmatpush1.msra.mxu0 0.0
  %814 = vmatprep.subr.mxu0 0.0
  %815 = vmatpush1.msra.mxu0 0.0
  %816 = vmatprep.subr.mxu0 0.0
  %817 = vmatpush1.msra.mxu0 0.0
  %818 = vmatprep.subr.mxu0 0.0
  %819 = vmatpush1.msra.mxu0 0.0
  %820 = vmatprep.subr.mxu0 0.0
  %821 = vmatpush1.msra.mxu0 0.0
  %822 = vmatprep.subr.mxu0 0.0
  %823 = vmatpush1.msra.mxu0 0.0
  %824 = vmatprep.subr.mxu0 0.0
  %825 = vmatpush1.msra.mxu0 0.0
  %826 = vmatprep.subr.mxu0 0.0
  %827 = vmatpush1.msra.mxu0 0.0
  %828 = vmatprep.subr.mxu0 0.0
  %829 = vmatpush1.msra.mxu0 0.0
  %830 = vmatprep.subr.mxu0 0.0
  %831 = vmatpush1.msra.mxu0 0.0
  %832 = vmatprep.subr.mxu0 0.0
  %833 = vmatpush1.msra.mxu0 0.0
  %834 = vmatprep.subr.mxu0 0.0
  %835 = vmatpush1.msra.mxu0 0.0
  %836 = vmatprep.subr.mxu0 0.0
  %837 = vmatpush1.msra.mxu0 0.0
  %838 = vmatprep.subr.mxu0 0.0
  %839 = vmatpush1.msra.mxu0 0.0
  %840 = vmatprep.subr.mxu0 0.0
  %841 = vmatpush1.msra.mxu0 0.0
  %842 = vmatprep.subr.mxu0 0.0
  %843 = vmatpush1.msra.mxu0 0.0
  %844 = vmatprep.subr.mxu0 0.0
  %845 = vmatpush1.msra.mxu0 0.0
  %846 = vmatprep.subr.mxu0 0.0
  %847 = vmatpush1.msra.mxu0 0.0
  %848 = vmatprep.subr.mxu0 0.0
  %849 = vmatpush1.msra.mxu0 0.0
  %850 = vmatprep.mubr.f32.mxu0 0.0
  %851 = vmatmul.mubr.f32.gmra.mrb[0].mxu0 %v784
  %v852 = vpop.f32.mrb[0].mxu0
  %v853 = vadd.f32 0.0, %v852
  %v854 = vpop.f32.mrb[0].mxu0
  %855 = vdwg.mxu0
  %s856 = scalar_lea.vmem [#allocation2], 16
  %v857 = vld [vmem:[%s856] sm:$0xff]
  %v858 = vadd.f32 %v857, %v778
  %v859 = vxor.u32 %v858, 2147483648
  %v860 = vmul.f32 %v859, 1.442695
  %v861 = vpow.pop %v860
  %v862 = vadd.f32 %v861, 1.0
  %v863 = vrcp.pop %v862
  %v864 = vmul.f32 1.0, %v863
  %v865 = vadd.f32 %v778, %v397
  %867 = vrot.lane.b32.xlu0 %v865, 96
  %v868 = vpop.permute.xlu0 %867
  %v870 = vmul.f32 %v864, %v868
  %872 = vrot.lane.b32.xlu0 %v870, 32
  %v873 = vpop.permute.xlu0 %872
  %v875 = vadd.f32 %v857, %v873
  %v876 = vtanh.pop %v875
  %v877 = vsub.f32 1.0, %v864
  %879 = vrot.lane.b32.xlu0 %v876, 112
  %v880 = vpop.permute.xlu0 %879
  %v882 = vmul.f32 %v877, %v880
  %v883 = vmul.f32 %v864, %v704
  %v884 = vadd.f32 %v882, %v883
  %s885 = scalar_lea.vmem [#allocation3], 40
  %v886 = vld [vmem:[%s885] sm:$0xff]
  %v887 = vadd.f32 %v886, %v853
  %v888 = vxor.u32 %v887, 2147483648
  %v889 = vmul.f32 %v888, 1.442695
  %v890 = vpow.pop %v889
  %v891 = vadd.f32 %v890, 1.0
  %v892 = vrcp.pop %v891
  %v893 = vmul.f32 1.0, %v892
  %v894 = vadd.f32 %v853, %v429
  %896 = vrot.lane.b32.xlu0 %v894, 96
  %v897 = vpop.permute.xlu0 %896
  %v899 = vmul.f32 %v893, %v897
  %901 = vrot.lane.b32.xlu0 %v899, 32
  %v902 = vpop.permute.xlu0 %901
  %v904 = vadd.f32 %v886, %v902
  %v905 = vtanh.pop %v904
  %v906 = vsub.f32 1.0, %v893
  %908 = vrot.lane.b32.xlu0 %v905, 112
  %v909 = vpop.permute.xlu0 %908
  %v911 = vmul.f32 %v906, %v909
  %v912 = vmul.f32 %v893, %v705
  %v913 = vadd.f32 %v911, %v912
  %vm914 = vcmp.gt.s32.totalorder %v234, 2
  %vm915 = vcmp.gt.s32.totalorder %v234, 5
  %v916 = vsel %vm914, 1, 0
  %917 = vset.pattern.permute.xlu0 0
  %918 = vperm.xlu0 %917, %v916
  %v919 = vpop.permute.xlu0 %918
  %vm920 = vcmp.eq.s32.totalorder %v919, 1
  %v921 = vsel %vm920, %v884, 0.0
  %923 = vrot.lane.b32.xlu0 %v921, 112
  %v924 = vpop.permute.xlu0 %923
  %s926 = scalar_lea.vmem [#allocation4], 16
  %927 = vst.msk [vmem:[%s926] sm:$0xff] %vm55, %v924
  %v928 = vsel %vm915, 1, 0
  %929 = vset.pattern.permute.xlu0 0
  %930 = vperm.xlu0 %929, %v928
  %v931 = vpop.permute.xlu0 %930
  %vm932 = vcmp.eq.s32.totalorder %v931, 1
  %v933 = vsel %vm932, %v913, 0.0
  %935 = vrot.lane.b32.xlu0 %v933, 112
  %v936 = vpop.permute.xlu0 %935
  %s938 = scalar_lea.vmem [#allocation5], 40
  %939 = vst.msk [vmem:[%s938] sm:$0xff] %vm55, %v936
  %v940 = vsel %vm920, %v884, %v704
  %v941 = vsel %vm932, %v913, %v705
  %943 = vrot.lane.b32.xlu0 %v940, 112
  %v944 = vpop.permute.xlu0 %943
  %v945 = vsel %vm55, %v944, 0
  %947 = vmatprep.subr.mxu0 0.0
  %948 = vmatpush1.msra.mxu0 %v236
  %949 = vmatprep.subr.mxu0 0.0
  %950 = vmatpush1.msra.mxu0 %v237
  %951 = vmatprep.subr.mxu0 0.0
  %952 = vmatpush1.msra.mxu0 0.0
  %953 = vmatprep.subr.mxu0 0.0
  %954 = vmatpush1.msra.mxu0 0.0
  %955 = vmatprep.subr.mxu0 0.0
  %956 = vmatpush1.msra.mxu0 0.0
  %957 = vmatprep.subr.mxu0 0.0
  %958 = vmatpush1.msra.mxu0 0.0
  %959 = vmatprep.subr.mxu0 0.0
  %960 = vmatpush1.msra.mxu0 0.0
  %961 = vmatprep.subr.mxu0 0.0
  %962 = vmatpush1.msra.mxu0 0.0
  %963 = vmatprep.subr.mxu0 0.0
  %964 = vmatpush1.msra.mxu0 0.0
  %965 = vmatprep.subr.mxu0 0.0
  %966 = vmatpush1.msra.mxu0 0.0
  %967 = vmatprep.subr.mxu0 0.0
  %968 = vmatpush1.msra.mxu0 0.0
  %969 = vmatprep.subr.mxu0 0.0
  %970 = vmatpush1.msra.mxu0 0.0
  %971 = vmatprep.subr.mxu0 0.0
  %972 = vmatpush1.msra.mxu0 0.0
  %973 = vmatprep.subr.mxu0 0.0
  %974 = vmatpush1.msra.mxu0 0.0
  %975 = vmatprep.subr.mxu0 0.0
  %976 = vmatpush1.msra.mxu0 0.0
  %977 = vmatprep.subr.mxu0 0.0
  %978 = vmatpush1.msra.mxu0 0.0
  %979 = vmatprep.subr.mxu0 0.0
  %980 = vmatpush1.msra.mxu0 0.0
  %981 = vmatprep.subr.mxu0 0.0
  %982 = vmatpush1.msra.mxu0 0.0
  %983 = vmatprep.subr.mxu0 0.0
  %984 = vmatpush1.msra.mxu0 0.0
  %985 = vmatprep.subr.mxu0 0.0
  %986 = vmatpush1.msra.mxu0 0.0
  %987 = vmatprep.subr.mxu0 0.0
  %988 = vmatpush1.msra.mxu0 0.0
  %989 = vmatprep.subr.mxu0 0.0
  %990 = vmatpush1.msra.mxu0 0.0
  %991 = vmatprep.subr.mxu0 0.0
  %992 = vmatpush1.msra.mxu0 0.0
  %993 = vmatprep.subr.mxu0 0.0
  %994 = vmatpush1.msra.mxu0 0.0
  %995 = vmatprep.subr.mxu0 0.0
  %996 = vmatpush1.msra.mxu0 0.0
  %997 = vmatprep.subr.mxu0 0.0
  %998 = vmatpush1.msra.mxu0 0.0
  %999 = vmatprep.subr.mxu0 0.0
  %1000 = vmatpush1.msra.mxu0 0.0
  %1001 = vmatprep.subr.mxu0 0.0
  %1002 = vmatpush1.msra.mxu0 0.0
  %1003 = vmatprep.subr.mxu0 0.0
  %1004 = vmatpush1.msra.mxu0 0.0
  %1005 = vmatprep.subr.mxu0 0.0
  %1006 = vmatpush1.msra.mxu0 0.0
  %1007 = vmatprep.subr.mxu0 0.0
  %1008 = vmatpush1.msra.mxu0 0.0
  %1009 = vmatprep.subr.mxu0 0.0
  %1010 = vmatpush1.msra.mxu0 0.0
  %1011 = vmatprep.mubr.f32.mxu0 0.0
  %1012 = vmatmul.mubr.f32.gmra.mrb[0].mxu0 %v945
  %v1013 = vpop.f32.mrb[0].mxu0
  %v1014 = vadd.f32 0.0, %v1013
  %v1015 = vpop.f32.mrb[0].mxu0
  %1016 = vdwg.mxu0
  %1018 = vrot.lane.b32.xlu0 %v941, 112
  %v1019 = vpop.permute.xlu0 %1018
  %v1020 = vsel %vm55, %v1019, 0
  %1022 = vmatprep.subr.mxu0 0.0
  %1023 = vmatpush1.msra.mxu0 %v238
  %1024 = vmatprep.subr.mxu0 0.0
  %1025 = vmatpush1.msra.mxu0 %v239
  %1026 = vmatprep.subr.mxu0 0.0
  %1027 = vmatpush1.msra.mxu0 0.0
  %1028 = vmatprep.subr.mxu0 0.0
  %1029 = vmatpush1.msra.mxu0 0.0
  %1030 = vmatprep.subr.mxu0 0.0
  %1031 = vmatpush1.msra.mxu0 0.0
  %1032 = vmatprep.subr.mxu0 0.0
  %1033 = vmatpush1.msra.mxu0 0.0
  %1034 = vmatprep.subr.mxu0 0.0
  %1035 = vmatpush1.msra.mxu0 0.0
  %1036 = vmatprep.subr.mxu0 0.0
  %1037 = vmatpush1.msra.mxu0 0.0
  %1038 = vmatprep.subr.mxu0 0.0
  %1039 = vmatpush1.msra.mxu0 0.0
  %1040 = vmatprep.subr.mxu0 0.0
  %1041 = vmatpush1.msra.mxu0 0.0
  %1042 = vmatprep.subr.mxu0 0.0
  %1043 = vmatpush1.msra.mxu0 0.0
  %1044 = vmatprep.subr.mxu0 0.0
  %1045 = vmatpush1.msra.mxu0 0.0
  %1046 = vmatprep.subr.mxu0 0.0
  %1047 = vmatpush1.msra.mxu0 0.0
  %1048 = vmatprep.subr.mxu0 0.0
  %1049 = vmatpush1.msra.mxu0 0.0
  %1050 = vmatprep.subr.mxu0 0.0
  %1051 = vmatpush1.msra.mxu0 0.0
  %1052 = vmatprep.subr.mxu0 0.0
  %1053 = vmatpush1.msra.mxu0 0.0
  %1054 = vmatprep.subr.mxu0 0.0
  %1055 = vmatpush1.msra.mxu0 0.0
  %1056 = vmatprep.subr.mxu0 0.0
  %1057 = vmatpush1.msra.mxu0 0.0
  %1058 = vmatprep.subr.mxu0 0.0
  %1059 = vmatpush1.msra.mxu0 0.0
  %1060 = vmatprep.subr.mxu0 0.0
  %1061 = vmatpush1.msra.mxu0 0.0
  %1062 = vmatprep.subr.mxu0 0.0
  %1063 = vmatpush1.msra.mxu0 0.0
  %1064 = vmatprep.subr.mxu0 0.0
  %1065 = vmatpush1.msra.mxu0 0.0
  %1066 = vmatprep.subr.mxu0 0.0
  %1067 = vmatpush1.msra.mxu0 0.0
  %1068 = vmatprep.subr.mxu0 0.0
  %1069 = vmatpush1.msra.mxu0 0.0
  %1070 = vmatprep.subr.mxu0 0.0
  %1071 = vmatpush1.msra.mxu0 0.0
  %1072 = vmatprep.subr.mxu0 0.0
  %1073 = vmatpush1.msra.mxu0 0.0
  %1074 = vmatprep.subr.mxu0 0.0
  %1075 = vmatpush1.msra.mxu0 0.0
  %1076 = vmatprep.subr.mxu0 0.0
  %1077 = vmatpush1.msra.mxu0 0.0
  %1078 = vmatprep.subr.mxu0 0.0
  %1079 = vmatpush1.msra.mxu0 0.0
  %1080 = vmatprep.subr.mxu0 0.0
  %1081 = vmatpush1.msra.mxu0 0.0
  %1082 = vmatprep.subr.mxu0 0.0
  %1083 = vmatpush1.msra.mxu0 0.0
  %1084 = vmatprep.subr.mxu0 0.0
  %1085 = vmatpush1.msra.mxu0 0.0
  %1086 = vmatprep.mubr.f32.mxu0 0.0
  %1087 = vmatmul.mubr.f32.gmra.mrb[0].mxu0 %v1020
  %v1088 = vpop.f32.mrb[0].mxu0
  %v1089 = vadd.f32 0.0, %v1088
  %v1090 = vpop.f32.mrb[0].mxu0
  %1091 = vdwg.mxu0
  %s1092 = scalar_lea.vmem [#allocation2], 24
  %v1093 = vld [vmem:[%s1092] sm:$0xff]
  %v1094 = vadd.f32 %v1093, %v1014
  %v1095 = vxor.u32 %v1094, 2147483648
  %v1096 = vmul.f32 %v1095, 1.442695
  %v1097 = vpow.pop %v1096
  %v1098 = vadd.f32 %v1097, 1.0
  %v1099 = vrcp.pop %v1098
  %v1100 = vmul.f32 1.0, %v1099
  %v1101 = vadd.f32 %v1014, %v397
  %1103 = vrot.lane.b32.xlu0 %v1101, 96
  %v1104 = vpop.permute.xlu0 %1103
  %v1106 = vmul.f32 %v1100, %v1104
  %1108 = vrot.lane.b32.xlu0 %v1106, 32
  %v1109 = vpop.permute.xlu0 %1108
  %v1111 = vadd.f32 %v1093, %v1109
  %v1112 = vtanh.pop %v1111
  %v1113 = vsub.f32 1.0, %v1100
  %1115 = vrot.lane.b32.xlu0 %v1112, 112
  %v1116 = vpop.permute.xlu0 %1115
  %v1118 = vmul.f32 %v1113, %v1116
  %v1119 = vmul.f32 %v1100, %v940
  %v1120 = vadd.f32 %v1118, %v1119
  %s1121 = scalar_lea.vmem [#allocation3], 32
  %v1122 = vld [vmem:[%s1121] sm:$0xff]
  %v1123 = vadd.f32 %v1122, %v1089
  %v1124 = vxor.u32 %v1123, 2147483648
  %v1125 = vmul.f32 %v1124, 1.442695
  %v1126 = vpow.pop %v1125
  %v1127 = vadd.f32 %v1126, 1.0
  %v1128 = vrcp.pop %v1127
  %v1129 = vmul.f32 1.0, %v1128
  %v1130 = vadd.f32 %v1089, %v429
  %1132 = vrot.lane.b32.xlu0 %v1130, 96
  %v1133 = vpop.permute.xlu0 %1132
  %v1135 = vmul.f32 %v1129, %v1133
  %1137 = vrot.lane.b32.xlu0 %v1135, 32
  %v1138 = vpop.permute.xlu0 %1137
  %v1140 = vadd.f32 %v1122, %v1138
  %v1141 = vtanh.pop %v1140
  %v1142 = vsub.f32 1.0, %v1129
  %1144 = vrot.lane.b32.xlu0 %v1141, 112
  %v1145 = vpop.permute.xlu0 %1144
  %v1147 = vmul.f32 %v1142, %v1145
  %v1148 = vmul.f32 %v1129, %v941
  %v1149 = vadd.f32 %v1147, %v1148
  %vm1150 = vcmp.gt.s32.totalorder %v234, 3
  %vm1151 = vcmp.gt.s32.totalorder %v234, 4
  %v1152 = vsel %vm1150, 1, 0
  %1153 = vset.pattern.permute.xlu0 0
  %1154 = vperm.xlu0 %1153, %v1152
  %v1155 = vpop.permute.xlu0 %1154
  %vm1156 = vcmp.eq.s32.totalorder %v1155, 1
  %v1157 = vsel %vm1156, %v1120, 0.0
  %1159 = vrot.lane.b32.xlu0 %v1157, 112
  %v1160 = vpop.permute.xlu0 %1159
  %s1162 = scalar_lea.vmem [#allocation4], 24
  %1163 = vst.msk [vmem:[%s1162] sm:$0xff] %vm55, %v1160
  %v1164 = vsel %vm1151, 1, 0
  %1165 = vset.pattern.permute.xlu0 0
  %1166 = vperm.xlu0 %1165, %v1164
  %v1167 = vpop.permute.xlu0 %1166
  %vm1168 = vcmp.eq.s32.totalorder %v1167, 1
  %v1169 = vsel %vm1168, %v1149, 0.0
  %1171 = vrot.lane.b32.xlu0 %v1169, 112
  %v1172 = vpop.permute.xlu0 %1171
  %s1174 = scalar_lea.vmem [#allocation5], 32
  %1175 = vst.msk [vmem:[%s1174] sm:$0xff] %vm55, %v1172
  %v1176 = vsel %vm1156, %v1120, %v940
  %v1177 = vsel %vm1168, %v1149, %v941
  %1179 = vrot.lane.b32.xlu0 %v1176, 112
  %v1180 = vpop.permute.xlu0 %1179
  %v1181 = vsel %vm55, %v1180, 0
  %1183 = vmatprep.subr.mxu0 0.0
  %1184 = vmatpush1.msra.mxu0 %v236
  %1185 = vmatprep.subr.mxu0 0.0
  %1186 = vmatpush1.msra.mxu0 %v237
  %1187 = vmatprep.subr.mxu0 0.0
  %1188 = vmatpush1.msra.mxu0 0.0
  %1189 = vmatprep.subr.mxu0 0.0
  %1190 = vmatpush1.msra.mxu0 0.0
  %1191 = vmatprep.subr.mxu0 0.0
  %1192 = vmatpush1.msra.mxu0 0.0
  %1193 = vmatprep.subr.mxu0 0.0
  %1194 = vmatpush1.msra.mxu0 0.0
  %1195 = vmatprep.subr.mxu0 0.0
  %1196 = vmatpush1.msra.mxu0 0.0
  %1197 = vmatprep.subr.mxu0 0.0
  %1198 = vmatpush1.msra.mxu0 0.0
  %1199 = vmatprep.subr.mxu0 0.0
  %1200 = vmatpush1.msra.mxu0 0.0
  %1201 = vmatprep.subr.mxu0 0.0
  %1202 = vmatpush1.msra.mxu0 0.0
  %1203 = vmatprep.subr.mxu0 0.0
  %1204 = vmatpush1.msra.mxu0 0.0
  %1205 = vmatprep.subr.mxu0 0.0
  %1206 = vmatpush1.msra.mxu0 0.0
  %1207 = vmatprep.subr.mxu0 0.0
  %1208 = vmatpush1.msra.mxu0 0.0
  %1209 = vmatprep.subr.mxu0 0.0
  %1210 = vmatpush1.msra.mxu0 0.0
  %1211 = vmatprep.subr.mxu0 0.0
  %1212 = vmatpush1.msra.mxu0 0.0
  %1213 = vmatprep.subr.mxu0 0.0
  %1214 = vmatpush1.msra.mxu0 0.0
  %1215 = vmatprep.subr.mxu0 0.0
  %1216 = vmatpush1.msra.mxu0 0.0
  %1217 = vmatprep.subr.mxu0 0.0
  %1218 = vmatpush1.msra.mxu0 0.0
  %1219 = vmatprep.subr.mxu0 0.0
  %1220 = vmatpush1.msra.mxu0 0.0
  %1221 = vmatprep.subr.mxu0 0.0
  %1222 = vmatpush1.msra.mxu0 0.0
  %1223 = vmatprep.subr.mxu0 0.0
  %1224 = vmatpush1.msra.mxu0 0.0
  %1225 = vmatprep.subr.mxu0 0.0
  %1226 = vmatpush1.msra.mxu0 0.0
  %1227 = vmatprep.subr.mxu0 0.0
  %1228 = vmatpush1.msra.mxu0 0.0
  %1229 = vmatprep.subr.mxu0 0.0
  %1230 = vmatpush1.msra.mxu0 0.0
  %1231 = vmatprep.subr.mxu0 0.0
  %1232 = vmatpush1.msra.mxu0 0.0
  %1233 = vmatprep.subr.mxu0 0.0
  %1234 = vmatpush1.msra.mxu0 0.0
  %1235 = vmatprep.subr.mxu0 0.0
  %1236 = vmatpush1.msra.mxu0 0.0
  %1237 = vmatprep.subr.mxu0 0.0
  %1238 = vmatpush1.msra.mxu0 0.0
  %1239 = vmatprep.subr.mxu0 0.0
  %1240 = vmatpush1.msra.mxu0 0.0
  %1241 = vmatprep.subr.mxu0 0.0
  %1242 = vmatpush1.msra.mxu0 0.0
  %1243 = vmatprep.subr.mxu0 0.0
  %1244 = vmatpush1.msra.mxu0 0.0
  %1245 = vmatprep.subr.mxu0 0.0
  %1246 = vmatpush1.msra.mxu0 0.0
  %1247 = vmatprep.mubr.f32.mxu0 0.0
  %1248 = vmatmul.mubr.f32.gmra.mrb[0].mxu0 %v1181
  %v1249 = vpop.f32.mrb[0].mxu0
  %v1250 = vadd.f32 0.0, %v1249
  %v1251 = vpop.f32.mrb[0].mxu0
  %1252 = vdwg.mxu0
  %1254 = vrot.lane.b32.xlu0 %v1177, 112
  %v1255 = vpop.permute.xlu0 %1254
  %v1256 = vsel %vm55, %v1255, 0
  %1258 = vmatprep.subr.mxu0 0.0
  %1259 = vmatpush1.msra.mxu0 %v238
  %1260 = vmatprep.subr.mxu0 0.0
  %1261 = vmatpush1.msra.mxu0 %v239
  %1262 = vmatprep.subr.mxu0 0.0
  %1263 = vmatpush1.msra.mxu0 0.0
  %1264 = vmatprep.subr.mxu0 0.0
  %1265 = vmatpush1.msra.mxu0 0.0
  %1266 = vmatprep.subr.mxu0 0.0
  %1267 = vmatpush1.msra.mxu0 0.0
  %1268 = vmatprep.subr.mxu0 0.0
  %1269 = vmatpush1.msra.mxu0 0.0
  %1270 = vmatprep.subr.mxu0 0.0
  %1271 = vmatpush1.msra.mxu0 0.0
  %1272 = vmatprep.subr.mxu0 0.0
  %1273 = vmatpush1.msra.mxu0 0.0
  %1274 = vmatprep.subr.mxu0 0.0
  %1275 = vmatpush1.msra.mxu0 0.0
  %1276 = vmatprep.subr.mxu0 0.0
  %1277 = vmatpush1.msra.mxu0 0.0
  %1278 = vmatprep.subr.mxu0 0.0
  %1279 = vmatpush1.msra.mxu0 0.0
  %1280 = vmatprep.subr.mxu0 0.0
  %1281 = vmatpush1.msra.mxu0 0.0
  %1282 = vmatprep.subr.mxu0 0.0
  %1283 = vmatpush1.msra.mxu0 0.0
  %1284 = vmatprep.subr.mxu0 0.0
  %1285 = vmatpush1.msra.mxu0 0.0
  %1286 = vmatprep.subr.mxu0 0.0
  %1287 = vmatpush1.msra.mxu0 0.0
  %1288 = vmatprep.subr.mxu0 0.0
  %1289 = vmatpush1.msra.mxu0 0.0
  %1290 = vmatprep.subr.mxu0 0.0
  %1291 = vmatpush1.msra.mxu0 0.0
  %1292 = vmatprep.subr.mxu0 0.0
  %1293 = vmatpush1.msra.mxu0 0.0
  %1294 = vmatprep.subr.mxu0 0.0
  %1295 = vmatpush1.msra.mxu0 0.0
  %1296 = vmatprep.subr.mxu0 0.0
  %1297 = vmatpush1.msra.mxu0 0.0
  %1298 = vmatprep.subr.mxu0 0.0
  %1299 = vmatpush1.msra.mxu0 0.0
  %1300 = vmatprep.subr.mxu0 0.0
  %1301 = vmatpush1.msra.mxu0 0.0
  %1302 = vmatprep.subr.mxu0 0.0
  %1303 = vmatpush1.msra.mxu0 0.0
  %1304 = vmatprep.subr.mxu0 0.0
  %1305 = vmatpush1.msra.mxu0 0.0
  %1306 = vmatprep.subr.mxu0 0.0
  %1307 = vmatpush1.msra.mxu0 0.0
  %1308 = vmatprep.subr.mxu0 0.0
  %1309 = vmatpush1.msra.mxu0 0.0
  %1310 = vmatprep.subr.mxu0 0.0
  %1311 = vmatpush1.msra.mxu0 0.0
  %1312 = vmatprep.subr.mxu0 0.0
  %1313 = vmatpush1.msra.mxu0 0.0
  %1314 = vmatprep.subr.mxu0 0.0
  %1315 = vmatpush1.msra.mxu0 0.0
  %1316 = vmatprep.subr.mxu0 0.0
  %1317 = vmatpush1.msra.mxu0 0.0
  %1318 = vmatprep.subr.mxu0 0.0
  %1319 = vmatpush1.msra.mxu0 0.0
  %1320 = vmatprep.subr.mxu0 0.0
  %1321 = vmatpush1.msra.mxu0 0.0
  %1322 = vmatprep.mubr.f32.mxu0 0.0
  %1323 = vmatmul.mubr.f32.gmra.mrb[0].mxu0 %v1256
  %v1324 = vpop.f32.mrb[0].mxu0
  %v1325 = vadd.f32 0.0, %v1324
  %v1326 = vpop.f32.mrb[0].mxu0
  %1327 = vdwg.mxu0
  %s1328 = scalar_lea.vmem [#allocation2], 32
  %v1329 = vld [vmem:[%s1328] sm:$0xff]
  %v1330 = vadd.f32 %v1329, %v1250
  %v1331 = vxor.u32 %v1330, 2147483648
  %v1332 = vmul.f32 %v1331, 1.442695
  %v1333 = vpow.pop %v1332
  %v1334 = vadd.f32 %v1333, 1.0
  %v1335 = vrcp.pop %v1334
  %v1336 = vmul.f32 1.0, %v1335
  %v1337 = vadd.f32 %v1250, %v397
  %1339 = vrot.lane.b32.xlu0 %v1337, 96
  %v1340 = vpop.permute.xlu0 %1339
  %v1342 = vmul.f32 %v1336, %v1340
  %1344 = vrot.lane.b32.xlu0 %v1342, 32
  %v1345 = vpop.permute.xlu0 %1344
  %v1347 = vadd.f32 %v1329, %v1345
  %v1348 = vtanh.pop %v1347
  %v1349 = vsub.f32 1.0, %v1336
  %1351 = vrot.lane.b32.xlu0 %v1348, 112
  %v1352 = vpop.permute.xlu0 %1351
  %v1354 = vmul.f32 %v1349, %v1352
  %v1355 = vmul.f32 %v1336, %v1176
  %v1356 = vadd.f32 %v1354, %v1355
  %s1357 = scalar_lea.vmem [#allocation3], 24
  %v1358 = vld [vmem:[%s1357] sm:$0xff]
  %v1359 = vadd.f32 %v1358, %v1325
  %v1360 = vxor.u32 %v1359, 2147483648
  %v1361 = vmul.f32 %v1360, 1.442695
  %v1362 = vpow.pop %v1361
  %v1363 = vadd.f32 %v1362, 1.0
  %v1364 = vrcp.pop %v1363
  %v1365 = vmul.f32 1.0, %v1364
  %v1366 = vadd.f32 %v1325, %v429
  %1368 = vrot.lane.b32.xlu0 %v1366, 96
  %v1369 = vpop.permute.xlu0 %1368
  %v1371 = vmul.f32 %v1365, %v1369
  %1373 = vrot.lane.b32.xlu0 %v1371, 32
  %v1374 = vpop.permute.xlu0 %1373
  %v1376 = vadd.f32 %v1358, %v1374
  %v1377 = vtanh.pop %v1376
  %v1378 = vsub.f32 1.0, %v1365
  %1380 = vrot.lane.b32.xlu0 %v1377, 112
  %v1381 = vpop.permute.xlu0 %1380
  %v1383 = vmul.f32 %v1378, %v1381
  %v1384 = vmul.f32 %v1365, %v1177
  %v1385 = vadd.f32 %v1383, %v1384
  %v1386 = vsel %vm1168, %v1356, 0.0
  %1388 = vrot.lane.b32.xlu0 %v1386, 112
  %v1389 = vpop.permute.xlu0 %1388
  %s1391 = scalar_lea.vmem [#allocation4], 32
  %1392 = vst.msk [vmem:[%s1391] sm:$0xff] %vm55, %v1389
  %v1393 = vsel %vm1156, %v1385, 0.0
  %1395 = vrot.lane.b32.xlu0 %v1393, 112
  %v1396 = vpop.permute.xlu0 %1395
  %s1398 = scalar_lea.vmem [#allocation5], 24
  %1399 = vst.msk [vmem:[%s1398] sm:$0xff] %vm55, %v1396
  %v1400 = vsel %vm1168, %v1356, %v1176
  %v1401 = vsel %vm1156, %v1385, %v1177
  %1403 = vrot.lane.b32.xlu0 %v1400, 112
  %v1404 = vpop.permute.xlu0 %1403
  %v1405 = vsel %vm55, %v1404, 0
  %1407 = vmatprep.subr.mxu0 0.0
  %1408 = vmatpush1.msra.mxu0 %v236
  %1409 = vmatprep.subr.mxu0 0.0
  %1410 = vmatpush1.msra.mxu0 %v237
  %1411 = vmatprep.subr.mxu0 0.0
  %1412 = vmatpush1.msra.mxu0 0.0
  %1413 = vmatprep.subr.mxu0 0.0
  %1414 = vmatpush1.msra.mxu0 0.0
  %1415 = vmatprep.subr.mxu0 0.0
  %1416 = vmatpush1.msra.mxu0 0.0
  %1417 = vmatprep.subr.mxu0 0.0
  %1418 = vmatpush1.msra.mxu0 0.0
  %1419 = vmatprep.subr.mxu0 0.0
  %1420 = vmatpush1.msra.mxu0 0.0
  %1421 = vmatprep.subr.mxu0 0.0
  %1422 = vmatpush1.msra.mxu0 0.0
  %1423 = vmatprep.subr.mxu0 0.0
  %1424 = vmatpush1.msra.mxu0 0.0
  %1425 = vmatprep.subr.mxu0 0.0
  %1426 = vmatpush1.msra.mxu0 0.0
  %1427 = vmatprep.subr.mxu0 0.0
  %1428 = vmatpush1.msra.mxu0 0.0
  %1429 = vmatprep.subr.mxu0 0.0
  %1430 = vmatpush1.msra.mxu0 0.0
  %1431 = vmatprep.subr.mxu0 0.0
  %1432 = vmatpush1.msra.mxu0 0.0
  %1433 = vmatprep.subr.mxu0 0.0
  %1434 = vmatpush1.msra.mxu0 0.0
  %1435 = vmatprep.subr.mxu0 0.0
  %1436 = vmatpush1.msra.mxu0 0.0
  %1437 = vmatprep.subr.mxu0 0.0
  %1438 = vmatpush1.msra.mxu0 0.0
  %1439 = vmatprep.subr.mxu0 0.0
  %1440 = vmatpush1.msra.mxu0 0.0
  %1441 = vmatprep.subr.mxu0 0.0
  %1442 = vmatpush1.msra.mxu0 0.0
  %1443 = vmatprep.subr.mxu0 0.0
  %1444 = vmatpush1.msra.mxu0 0.0
  %1445 = vmatprep.subr.mxu0 0.0
  %1446 = vmatpush1.msra.mxu0 0.0
  %1447 = vmatprep.subr.mxu0 0.0
  %1448 = vmatpush1.msra.mxu0 0.0
  %1449 = vmatprep.subr.mxu0 0.0
  %1450 = vmatpush1.msra.mxu0 0.0
  %1451 = vmatprep.subr.mxu0 0.0
  %1452 = vmatpush1.msra.mxu0 0.0
  %1453 = vmatprep.subr.mxu0 0.0
  %1454 = vmatpush1.msra.mxu0 0.0
  %1455 = vmatprep.subr.mxu0 0.0
  %1456 = vmatpush1.msra.mxu0 0.0
  %1457 = vmatprep.subr.mxu0 0.0
  %1458 = vmatpush1.msra.mxu0 0.0
  %1459 = vmatprep.subr.mxu0 0.0
  %1460 = vmatpush1.msra.mxu0 0.0
  %1461 = vmatprep.subr.mxu0 0.0
  %1462 = vmatpush1.msra.mxu0 0.0
  %1463 = vmatprep.subr.mxu0 0.0
  %1464 = vmatpush1.msra.mxu0 0.0
  %1465 = vmatprep.subr.mxu0 0.0
  %1466 = vmatpush1.msra.mxu0 0.0
  %1467 = vmatprep.subr.mxu0 0.0
  %1468 = vmatpush1.msra.mxu0 0.0
  %1469 = vmatprep.subr.mxu0 0.0
  %1470 = vmatpush1.msra.mxu0 0.0
  %1471 = vmatprep.mubr.f32.mxu0 0.0
  %1472 = vmatmul.mubr.f32.gmra.mrb[0].mxu0 %v1405
  %v1473 = vpop.f32.mrb[0].mxu0
  %v1474 = vadd.f32 0.0, %v1473
  %v1475 = vpop.f32.mrb[0].mxu0
  %1476 = vdwg.mxu0
  %1478 = vrot.lane.b32.xlu0 %v1401, 112
  %v1479 = vpop.permute.xlu0 %1478
  %v1480 = vsel %vm55, %v1479, 0
  %1482 = vmatprep.subr.mxu0 0.0
  %1483 = vmatpush1.msra.mxu0 %v238
  %1484 = vmatprep.subr.mxu0 0.0
  %1485 = vmatpush1.msra.mxu0 %v239
  %1486 = vmatprep.subr.mxu0 0.0
  %1487 = vmatpush1.msra.mxu0 0.0
  %1488 = vmatprep.subr.mxu0 0.0
  %1489 = vmatpush1.msra.mxu0 0.0
  %1490 = vmatprep.subr.mxu0 0.0
  %1491 = vmatpush1.msra.mxu0 0.0
  %1492 = vmatprep.subr.mxu0 0.0
  %1493 = vmatpush1.msra.mxu0 0.0
  %1494 = vmatprep.subr.mxu0 0.0
  %1495 = vmatpush1.msra.mxu0 0.0
  %1496 = vmatprep.subr.mxu0 0.0
  %1497 = vmatpush1.msra.mxu0 0.0
  %1498 = vmatprep.subr.mxu0 0.0
  %1499 = vmatpush1.msra.mxu0 0.0
  %1500 = vmatprep.subr.mxu0 0.0
  %1501 = vmatpush1.msra.mxu0 0.0
  %1502 = vmatprep.subr.mxu0 0.0
  %1503 = vmatpush1.msra.mxu0 0.0
  %1504 = vmatprep.subr.mxu0 0.0
  %1505 = vmatpush1.msra.mxu0 0.0
  %1506 = vmatprep.subr.mxu0 0.0
  %1507 = vmatpush1.msra.mxu0 0.0
  %1508 = vmatprep.subr.mxu0 0.0
  %1509 = vmatpush1.msra.mxu0 0.0
  %1510 = vmatprep.subr.mxu0 0.0
  %1511 = vmatpush1.msra.mxu0 0.0
  %1512 = vmatprep.subr.mxu0 0.0
  %1513 = vmatpush1.msra.mxu0 0.0
  %1514 = vmatprep.subr.mxu0 0.0
  %1515 = vmatpush1.msra.mxu0 0.0
  %1516 = vmatprep.subr.mxu0 0.0
  %1517 = vmatpush1.msra.mxu0 0.0
  %1518 = vmatprep.subr.mxu0 0.0
  %1519 = vmatpush1.msra.mxu0 0.0
  %1520 = vmatprep.subr.mxu0 0.0
  %1521 = vmatpush1.msra.mxu0 0.0
  %1522 = vmatprep.subr.mxu0 0.0
  %1523 = vmatpush1.msra.mxu0 0.0
  %1524 = vmatprep.subr.mxu0 0.0
  %1525 = vmatpush1.msra.mxu0 0.0
  %1526 = vmatprep.subr.mxu0 0.0
  %1527 = vmatpush1.msra.mxu0 0.0
  %1528 = vmatprep.subr.mxu0 0.0
  %1529 = vmatpush1.msra.mxu0 0.0
  %1530 = vmatprep.subr.mxu0 0.0
  %1531 = vmatpush1.msra.mxu0 0.0
  %1532 = vmatprep.subr.mxu0 0.0
  %1533 = vmatpush1.msra.mxu0 0.0
  %1534 = vmatprep.subr.mxu0 0.0
  %1535 = vmatpush1.msra.mxu0 0.0
  %1536 = vmatprep.subr.mxu0 0.0
  %1537 = vmatpush1.msra.mxu0 0.0
  %1538 = vmatprep.subr.mxu0 0.0
  %1539 = vmatpush1.msra.mxu0 0.0
  %1540 = vmatprep.subr.mxu0 0.0
  %1541 = vmatpush1.msra.mxu0 0.0
  %1542 = vmatprep.subr.mxu0 0.0
  %1543 = vmatpush1.msra.mxu0 0.0
  %1544 = vmatprep.subr.mxu0 0.0
  %1545 = vmatpush1.msra.mxu0 0.0
  %1546 = vmatprep.mubr.f32.mxu0 0.0
  %1547 = vmatmul.mubr.f32.gmra.mrb[0].mxu0 %v1480
  %v1548 = vpop.f32.mrb[0].mxu0
  %v1549 = vadd.f32 0.0, %v1548
  %v1550 = vpop.f32.mrb[0].mxu0
  %1551 = vdwg.mxu0
  %s1552 = scalar_lea.vmem [#allocation2], 40
  %v1553 = vld [vmem:[%s1552] sm:$0xff]
  %v1554 = vadd.f32 %v1553, %v1474
  %v1555 = vxor.u32 %v1554, 2147483648
  %v1556 = vmul.f32 %v1555, 1.442695
  %v1557 = vpow.pop %v1556
  %v1558 = vadd.f32 %v1557, 1.0
  %v1559 = vrcp.pop %v1558
  %v1560 = vmul.f32 1.0, %v1559
  %v1561 = vadd.f32 %v1474, %v397
  %1563 = vrot.lane.b32.xlu0 %v1561, 96
  %v1564 = vpop.permute.xlu0 %1563
  %v1566 = vmul.f32 %v1560, %v1564
  %1568 = vrot.lane.b32.xlu0 %v1566, 32
  %v1569 = vpop.permute.xlu0 %1568
  %v1571 = vadd.f32 %v1553, %v1569
  %v1572 = vtanh.pop %v1571
  %v1573 = vsub.f32 1.0, %v1560
  %1575 = vrot.lane.b32.xlu0 %v1572, 112
  %v1576 = vpop.permute.xlu0 %1575
  %v1578 = vmul.f32 %v1573, %v1576
  %v1579 = vmul.f32 %v1560, %v1400
  %v1580 = vadd.f32 %v1578, %v1579
  %s1581 = scalar_lea.vmem [#allocation3], 16
  %v1582 = vld [vmem:[%s1581] sm:$0xff]
  %v1583 = vadd.f32 %v1582, %v1549
  %v1584 = vxor.u32 %v1583, 2147483648
  %v1585 = vmul.f32 %v1584, 1.442695
  %v1586 = vpow.pop %v1585
  %v1587 = vadd.f32 %v1586, 1.0
  %v1588 = vrcp.pop %v1587
  %v1589 = vmul.f32 1.0, %v1588
  %v1590 = vadd.f32 %v1549, %v429
  %1592 = vrot.lane.b32.xlu0 %v1590, 96
  %v1593 = vpop.permute.xlu0 %1592
  %v1595 = vmul.f32 %v1589, %v1593
  %1597 = vrot.lane.b32.xlu0 %v1595, 32
  %v1598 = vpop.permute.xlu0 %1597
  %v1600 = vadd.f32 %v1582, %v1598
  %v1601 = vtanh.pop %v1600
  %v1602 = vsub.f32 1.0, %v1589
  %1604 = vrot.lane.b32.xlu0 %v1601, 112
  %v1605 = vpop.permute.xlu0 %1604
  %v1607 = vmul.f32 %v1602, %v1605
  %v1608 = vmul.f32 %v1589, %v1401
  %v1609 = vadd.f32 %v1607, %v1608
  %v1610 = vsel %vm932, %v1580, 0.0
  %1612 = vrot.lane.b32.xlu0 %v1610, 112
  %v1613 = vpop.permute.xlu0 %1612
  %s1615 = scalar_lea.vmem [#allocation4], 40
  %1616 = vst.msk [vmem:[%s1615] sm:$0xff] %vm55, %v1613
  %v1617 = vsel %vm920, %v1609, 0.0
  %1619 = vrot.lane.b32.xlu0 %v1617, 112
  %v1620 = vpop.permute.xlu0 %1619
  %s1622 = scalar_lea.vmem [#allocation5], 16
  %1623 = vst.msk [vmem:[%s1622] sm:$0xff] %vm55, %v1620
  %v1624 = vsel %vm932, %v1580, %v1400
  %v1625 = vsel %vm920, %v1609, %v1401
  %1627 = vrot.lane.b32.xlu0 %v1624, 112
  %v1628 = vpop.permute.xlu0 %1627
  %v1629 = vsel %vm55, %v1628, 0
  %1631 = vmatprep.subr.mxu0 0.0
  %1632 = vmatpush1.msra.mxu0 %v236
  %1633 = vmatprep.subr.mxu0 0.0
  %1634 = vmatpush1.msra.mxu0 %v237
  %1635 = vmatprep.subr.mxu0 0.0
  %1636 = vmatpush1.msra.mxu0 0.0
  %1637 = vmatprep.subr.mxu0 0.0
  %1638 = vmatpush1.msra.mxu0 0.0
  %1639 = vmatprep.subr.mxu0 0.0
  %1640 = vmatpush1.msra.mxu0 0.0
  %1641 = vmatprep.subr.mxu0 0.0
  %1642 = vmatpush1.msra.mxu0 0.0
  %1643 = vmatprep.subr.mxu0 0.0
  %1644 = vmatpush1.msra.mxu0 0.0
  %1645 = vmatprep.subr.mxu0 0.0
  %1646 = vmatpush1.msra.mxu0 0.0
  %1647 = vmatprep.subr.mxu0 0.0
  %1648 = vmatpush1.msra.mxu0 0.0
  %1649 = vmatprep.subr.mxu0 0.0
  %1650 = vmatpush1.msra.mxu0 0.0
  %1651 = vmatprep.subr.mxu0 0.0
  %1652 = vmatpush1.msra.mxu0 0.0
  %1653 = vmatprep.subr.mxu0 0.0
  %1654 = vmatpush1.msra.mxu0 0.0
  %1655 = vmatprep.subr.mxu0 0.0
  %1656 = vmatpush1.msra.mxu0 0.0
  %1657 = vmatprep.subr.mxu0 0.0
  %1658 = vmatpush1.msra.mxu0 0.0
  %1659 = vmatprep.subr.mxu0 0.0
  %1660 = vmatpush1.msra.mxu0 0.0
  %1661 = vmatprep.subr.mxu0 0.0
  %1662 = vmatpush1.msra.mxu0 0.0
  %1663 = vmatprep.subr.mxu0 0.0
  %1664 = vmatpush1.msra.mxu0 0.0
  %1665 = vmatprep.subr.mxu0 0.0
  %1666 = vmatpush1.msra.mxu0 0.0
  %1667 = vmatprep.subr.mxu0 0.0
  %1668 = vmatpush1.msra.mxu0 0.0
  %1669 = vmatprep.subr.mxu0 0.0
  %1670 = vmatpush1.msra.mxu0 0.0
  %1671 = vmatprep.subr.mxu0 0.0
  %1672 = vmatpush1.msra.mxu0 0.0
  %1673 = vmatprep.subr.mxu0 0.0
  %1674 = vmatpush1.msra.mxu0 0.0
  %1675 = vmatprep.subr.mxu0 0.0
  %1676 = vmatpush1.msra.mxu0 0.0
  %1677 = vmatprep.subr.mxu0 0.0
  %1678 = vmatpush1.msra.mxu0 0.0
  %1679 = vmatprep.subr.mxu0 0.0
  %1680 = vmatpush1.msra.mxu0 0.0
  %1681 = vmatprep.subr.mxu0 0.0
  %1682 = vmatpush1.msra.mxu0 0.0
  %1683 = vmatprep.subr.mxu0 0.0
  %1684 = vmatpush1.msra.mxu0 0.0
  %1685 = vmatprep.subr.mxu0 0.0
  %1686 = vmatpush1.msra.mxu0 0.0
  %1687 = vmatprep.subr.mxu0 0.0
  %1688 = vmatpush1.msra.mxu0 0.0
  %1689 = vmatprep.subr.mxu0 0.0
  %1690 = vmatpush1.msra.mxu0 0.0
  %1691 = vmatprep.subr.mxu0 0.0
  %1692 = vmatpush1.msra.mxu0 0.0
  %1693 = vmatprep.subr.mxu0 0.0
  %1694 = vmatpush1.msra.mxu0 0.0
  %1695 = vmatprep.mubr.f32.mxu0 0.0
  %1696 = vmatmul.mubr.f32.gmra.mrb[0].mxu0 %v1629
  %v1697 = vpop.f32.mrb[0].mxu0
  %v1698 = vadd.f32 0.0, %v1697
  %v1699 = vpop.f32.mrb[0].mxu0
  %1700 = vdwg.mxu0
  %1702 = vrot.lane.b32.xlu0 %v1625, 112
  %v1703 = vpop.permute.xlu0 %1702
  %v1704 = vsel %vm55, %v1703, 0
  %1706 = vmatprep.subr.mxu0 0.0
  %1707 = vmatpush1.msra.mxu0 %v238
  %1708 = vmatprep.subr.mxu0 0.0
  %1709 = vmatpush1.msra.mxu0 %v239
  %1710 = vmatprep.subr.mxu0 0.0
  %1711 = vmatpush1.msra.mxu0 0.0
  %1712 = vmatprep.subr.mxu0 0.0
  %1713 = vmatpush1.msra.mxu0 0.0
  %1714 = vmatprep.subr.mxu0 0.0
  %1715 = vmatpush1.msra.mxu0 0.0
  %1716 = vmatprep.subr.mxu0 0.0
  %1717 = vmatpush1.msra.mxu0 0.0
  %1718 = vmatprep.subr.mxu0 0.0
  %1719 = vmatpush1.msra.mxu0 0.0
  %1720 = vmatprep.subr.mxu0 0.0
  %1721 = vmatpush1.msra.mxu0 0.0
  %1722 = vmatprep.subr.mxu0 0.0
  %1723 = vmatpush1.msra.mxu0 0.0
  %1724 = vmatprep.subr.mxu0 0.0
  %1725 = vmatpush1.msra.mxu0 0.0
  %1726 = vmatprep.subr.mxu0 0.0
  %1727 = vmatpush1.msra.mxu0 0.0
  %1728 = vmatprep.subr.mxu0 0.0
  %1729 = vmatpush1.msra.mxu0 0.0
  %1730 = vmatprep.subr.mxu0 0.0
  %1731 = vmatpush1.msra.mxu0 0.0
  %1732 = vmatprep.subr.mxu0 0.0
  %1733 = vmatpush1.msra.mxu0 0.0
  %1734 = vmatprep.subr.mxu0 0.0
  %1735 = vmatpush1.msra.mxu0 0.0
  %1736 = vmatprep.subr.mxu0 0.0
  %1737 = vmatpush1.msra.mxu0 0.0
  %1738 = vmatprep.subr.mxu0 0.0
  %1739 = vmatpush1.msra.mxu0 0.0
  %1740 = vmatprep.subr.mxu0 0.0
  %1741 = vmatpush1.msra.mxu0 0.0
  %1742 = vmatprep.subr.mxu0 0.0
  %1743 = vmatpush1.msra.mxu0 0.0
  %1744 = vmatprep.subr.mxu0 0.0
  %1745 = vmatpush1.msra.mxu0 0.0
  %1746 = vmatprep.subr.mxu0 0.0
  %1747 = vmatpush1.msra.mxu0 0.0
  %1748 = vmatprep.subr.mxu0 0.0
  %1749 = vmatpush1.msra.mxu0 0.0
  %1750 = vmatprep.subr.mxu0 0.0
  %1751 = vmatpush1.msra.mxu0 0.0
  %1752 = vmatprep.subr.mxu0 0.0
  %1753 = vmatpush1.msra.mxu0 0.0
  %1754 = vmatprep.subr.mxu0 0.0
  %1755 = vmatpush1.msra.mxu0 0.0
  %1756 = vmatprep.subr.mxu0 0.0
  %1757 = vmatpush1.msra.mxu0 0.0
  %1758 = vmatprep.subr.mxu0 0.0
  %1759 = vmatpush1.msra.mxu0 0.0
  %1760 = vmatprep.subr.mxu0 0.0
  %1761 = vmatpush1.msra.mxu0 0.0
  %1762 = vmatprep.subr.mxu0 0.0
  %1763 = vmatpush1.msra.mxu0 0.0
  %1764 = vmatprep.subr.mxu0 0.0
  %1765 = vmatpush1.msra.mxu0 0.0
  %1766 = vmatprep.subr.mxu0 0.0
  %1767 = vmatpush1.msra.mxu0 0.0
  %1768 = vmatprep.subr.mxu0 0.0
  %1769 = vmatpush1.msra.mxu0 0.0
  %1770 = vmatprep.mubr.f32.mxu0 0.0
  %1771 = vmatmul.mubr.f32.gmra.mrb[0].mxu0 %v1704
  %v1772 = vpop.f32.mrb[0].mxu0
  %v1773 = vadd.f32 0.0, %v1772
  %v1774 = vpop.f32.mrb[0].mxu0
  %1775 = vdwg.mxu0
  %s1776 = scalar_lea.vmem [#allocation2], 48
  %v1777 = vld [vmem:[%s1776] sm:$0xff]
  %v1778 = vadd.f32 %v1777, %v1698
  %v1779 = vxor.u32 %v1778, 2147483648
  %v1780 = vmul.f32 %v1779, 1.442695
  %v1781 = vpow.pop %v1780
  %v1782 = vadd.f32 %v1781, 1.0
  %v1783 = vrcp.pop %v1782
  %v1784 = vmul.f32 1.0, %v1783
  %v1785 = vadd.f32 %v1698, %v397
  %1787 = vrot.lane.b32.xlu0 %v1785, 96
  %v1788 = vpop.permute.xlu0 %1787
  %v1790 = vmul.f32 %v1784, %v1788
  %1792 = vrot.lane.b32.xlu0 %v1790, 32
  %v1793 = vpop.permute.xlu0 %1792
  %v1795 = vadd.f32 %v1777, %v1793
  %v1796 = vtanh.pop %v1795
  %v1797 = vsub.f32 1.0, %v1784
  %1799 = vrot.lane.b32.xlu0 %v1796, 112
  %v1800 = vpop.permute.xlu0 %1799
  %v1802 = vmul.f32 %v1797, %v1800
  %v1803 = vmul.f32 %v1784, %v1624
  %v1804 = vadd.f32 %v1802, %v1803
  %s1805 = scalar_lea.vmem [#allocation3], 8
  %v1806 = vld [vmem:[%s1805] sm:$0xff]
  %v1807 = vadd.f32 %v1806, %v1773
  %v1808 = vxor.u32 %v1807, 2147483648
  %v1809 = vmul.f32 %v1808, 1.442695
  %v1810 = vpow.pop %v1809
  %v1811 = vadd.f32 %v1810, 1.0
  %v1812 = vrcp.pop %v1811
  %v1813 = vmul.f32 1.0, %v1812
  %v1814 = vadd.f32 %v1773, %v429
  %1816 = vrot.lane.b32.xlu0 %v1814, 96
  %v1817 = vpop.permute.xlu0 %1816
  %v1819 = vmul.f32 %v1813, %v1817
  %1821 = vrot.lane.b32.xlu0 %v1819, 32
  %v1822 = vpop.permute.xlu0 %1821
  %v1824 = vadd.f32 %v1806, %v1822
  %v1825 = vtanh.pop %v1824
  %v1826 = vsub.f32 1.0, %v1813
  %1828 = vrot.lane.b32.xlu0 %v1825, 112
  %v1829 = vpop.permute.xlu0 %1828
  %v1831 = vmul.f32 %v1826, %v1829
  %v1832 = vmul.f32 %v1813, %v1625
  %v1833 = vadd.f32 %v1831, %v1832
  %v1834 = vsel %vm696, %v1804, 0.0
  %1836 = vrot.lane.b32.xlu0 %v1834, 112
  %v1837 = vpop.permute.xlu0 %1836
  %s1839 = scalar_lea.vmem [#allocation4], 48
  %1840 = vst.msk [vmem:[%s1839] sm:$0xff] %vm55, %v1837
  %v1841 = vsel %vm684, %v1833, 0.0
  %1843 = vrot.lane.b32.xlu0 %v1841, 112
  %v1844 = vpop.permute.xlu0 %1843
  %s1846 = scalar_lea.vmem [#allocation5], 8
  %1847 = vst.msk [vmem:[%s1846] sm:$0xff] %vm55, %v1844
  %v1848 = vsel %vm696, %v1804, %v1624
  %v1849 = vsel %vm684, %v1833, %v1625
  %1851 = vrot.lane.b32.xlu0 %v1848, 112
  %v1852 = vpop.permute.xlu0 %1851
  %v1853 = vsel %vm55, %v1852, 0
  %1855 = vmatprep.subr.mxu0 0.0
  %1856 = vmatpush1.msra.mxu0 %v236
  %1857 = vmatprep.subr.mxu0 0.0
  %1858 = vmatpush1.msra.mxu0 %v237
  %1859 = vmatprep.subr.mxu0 0.0
  %1860 = vmatpush1.msra.mxu0 0.0
  %1861 = vmatprep.subr.mxu0 0.0
  %1862 = vmatpush1.msra.mxu0 0.0
  %1863 = vmatprep.subr.mxu0 0.0
  %1864 = vmatpush1.msra.mxu0 0.0
  %1865 = vmatprep.subr.mxu0 0.0
  %1866 = vmatpush1.msra.mxu0 0.0
  %1867 = vmatprep.subr.mxu0 0.0
  %1868 = vmatpush1.msra.mxu0 0.0
  %1869 = vmatprep.subr.mxu0 0.0
  %1870 = vmatpush1.msra.mxu0 0.0
  %1871 = vmatprep.subr.mxu0 0.0
  %1872 = vmatpush1.msra.mxu0 0.0
  %1873 = vmatprep.subr.mxu0 0.0
  %1874 = vmatpush1.msra.mxu0 0.0
  %1875 = vmatprep.subr.mxu0 0.0
  %1876 = vmatpush1.msra.mxu0 0.0
  %1877 = vmatprep.subr.mxu0 0.0
  %1878 = vmatpush1.msra.mxu0 0.0
  %1879 = vmatprep.subr.mxu0 0.0
  %1880 = vmatpush1.msra.mxu0 0.0
  %1881 = vmatprep.subr.mxu0 0.0
  %1882 = vmatpush1.msra.mxu0 0.0
  %1883 = vmatprep.subr.mxu0 0.0
  %1884 = vmatpush1.msra.mxu0 0.0
  %1885 = vmatprep.subr.mxu0 0.0
  %1886 = vmatpush1.msra.mxu0 0.0
  %1887 = vmatprep.subr.mxu0 0.0
  %1888 = vmatpush1.msra.mxu0 0.0
  %1889 = vmatprep.subr.mxu0 0.0
  %1890 = vmatpush1.msra.mxu0 0.0
  %1891 = vmatprep.subr.mxu0 0.0
  %1892 = vmatpush1.msra.mxu0 0.0
  %1893 = vmatprep.subr.mxu0 0.0
  %1894 = vmatpush1.msra.mxu0 0.0
  %1895 = vmatprep.subr.mxu0 0.0
  %1896 = vmatpush1.msra.mxu0 0.0
  %1897 = vmatprep.subr.mxu0 0.0
  %1898 = vmatpush1.msra.mxu0 0.0
  %1899 = vmatprep.subr.mxu0 0.0
  %1900 = vmatpush1.msra.mxu0 0.0
  %1901 = vmatprep.subr.mxu0 0.0
  %1902 = vmatpush1.msra.mxu0 0.0
  %1903 = vmatprep.subr.mxu0 0.0
  %1904 = vmatpush1.msra.mxu0 0.0
  %1905 = vmatprep.subr.mxu0 0.0
  %1906 = vmatpush1.msra.mxu0 0.0
  %1907 = vmatprep.subr.mxu0 0.0
  %1908 = vmatpush1.msra.mxu0 0.0
  %1909 = vmatprep.subr.mxu0 0.0
  %1910 = vmatpush1.msra.mxu0 0.0
  %1911 = vmatprep.subr.mxu0 0.0
  %1912 = vmatpush1.msra.mxu0 0.0
  %1913 = vmatprep.subr.mxu0 0.0
  %1914 = vmatpush1.msra.mxu0 0.0
  %1915 = vmatprep.subr.mxu0 0.0
  %1916 = vmatpush1.msra.mxu0 0.0
  %1917 = vmatprep.subr.mxu0 0.0
  %1918 = vmatpush1.msra.mxu0 0.0
  %1919 = vmatprep.mubr.f32.mxu0 0.0
  %1920 = vmatmul.mubr.f32.gmra.mrb[0].mxu0 %v1853
  %v1921 = vpop.f32.mrb[0].mxu0
  %v1922 = vadd.f32 0.0, %v1921
  %v1923 = vpop.f32.mrb[0].mxu0
  %1924 = vdwg.mxu0
  %1926 = vrot.lane.b32.xlu0 %v1849, 112
  %v1927 = vpop.permute.xlu0 %1926
  %v1928 = vsel %vm55, %v1927, 0
  %1930 = vmatprep.subr.mxu0 0.0
  %1931 = vmatpush1.msra.mxu0 %v238
  %1932 = vmatprep.subr.mxu0 0.0
  %1933 = vmatpush1.msra.mxu0 %v239
  %1934 = vmatprep.subr.mxu0 0.0
  %1935 = vmatpush1.msra.mxu0 0.0
  %1936 = vmatprep.subr.mxu0 0.0
  %1937 = vmatpush1.msra.mxu0 0.0
  %1938 = vmatprep.subr.mxu0 0.0
  %1939 = vmatpush1.msra.mxu0 0.0
  %1940 = vmatprep.subr.mxu0 0.0
  %1941 = vmatpush1.msra.mxu0 0.0
  %1942 = vmatprep.subr.mxu0 0.0
  %1943 = vmatpush1.msra.mxu0 0.0
  %1944 = vmatprep.subr.mxu0 0.0
  %1945 = vmatpush1.msra.mxu0 0.0
  %1946 = vmatprep.subr.mxu0 0.0
  %1947 = vmatpush1.msra.mxu0 0.0
  %1948 = vmatprep.subr.mxu0 0.0
  %1949 = vmatpush1.msra.mxu0 0.0
  %1950 = vmatprep.subr.mxu0 0.0
  %1951 = vmatpush1.msra.mxu0 0.0
  %1952 = vmatprep.subr.mxu0 0.0
  %1953 = vmatpush1.msra.mxu0 0.0
  %1954 = vmatprep.subr.mxu0 0.0
  %1955 = vmatpush1.msra.mxu0 0.0
  %1956 = vmatprep.subr.mxu0 0.0
  %1957 = vmatpush1.msra.mxu0 0.0
  %1958 = vmatprep.subr.mxu0 0.0
  %1959 = vmatpush1.msra.mxu0 0.0
  %1960 = vmatprep.subr.mxu0 0.0
  %1961 = vmatpush1.msra.mxu0 0.0
  %1962 = vmatprep.subr.mxu0 0.0
  %1963 = vmatpush1.msra.mxu0 0.0
  %1964 = vmatprep.subr.mxu0 0.0
  %1965 = vmatpush1.msra.mxu0 0.0
  %1966 = vmatprep.subr.mxu0 0.0
  %1967 = vmatpush1.msra.mxu0 0.0
  %1968 = vmatprep.subr.mxu0 0.0
  %1969 = vmatpush1.msra.mxu0 0.0
  %1970 = vmatprep.subr.mxu0 0.0
  %1971 = vmatpush1.msra.mxu0 0.0
  %1972 = vmatprep.subr.mxu0 0.0
  %1973 = vmatpush1.msra.mxu0 0.0
  %1974 = vmatprep.subr.mxu0 0.0
  %1975 = vmatpush1.msra.mxu0 0.0
  %1976 = vmatprep.subr.mxu0 0.0
  %1977 = vmatpush1.msra.mxu0 0.0
  %1978 = vmatprep.subr.mxu0 0.0
  %1979 = vmatpush1.msra.mxu0 0.0
  %1980 = vmatprep.subr.mxu0 0.0
  %1981 = vmatpush1.msra.mxu0 0.0
  %1982 = vmatprep.subr.mxu0 0.0
  %1983 = vmatpush1.msra.mxu0 0.0
  %1984 = vmatprep.subr.mxu0 0.0
  %1985 = vmatpush1.msra.mxu0 0.0
  %1986 = vmatprep.subr.mxu0 0.0
  %1987 = vmatpush1.msra.mxu0 0.0
  %1988 = vmatprep.subr.mxu0 0.0
  %1989 = vmatpush1.msra.mxu0 0.0
  %1990 = vmatprep.subr.mxu0 0.0
  %1991 = vmatpush1.msra.mxu0 0.0
  %1992 = vmatprep.subr.mxu0 0.0
  %1993 = vmatpush1.msra.mxu0 0.0
  %1994 = vmatprep.mubr.f32.mxu0 0.0
  %1995 = vmatmul.mubr.f32.gmra.mrb[0].mxu0 %v1928
  %v1996 = vpop.f32.mrb[0].mxu0
  %v1997 = vadd.f32 0.0, %v1996
  %v1998 = vpop.f32.mrb[0].mxu0
  %1999 = vdwg.mxu0
  %s2000 = scalar_lea.vmem [#allocation2], 56
  %v2001 = vld [vmem:[%s2000] sm:$0xff]
  %v2002 = vadd.f32 %v2001, %v1922
  %v2003 = vxor.u32 %v2002, 2147483648
  %v2004 = vmul.f32 %v2003, 1.442695
  %v2005 = vpow.pop %v2004
  %v2006 = vadd.f32 %v2005, 1.0
  %v2007 = vrcp.pop %v2006
  %v2008 = vmul.f32 1.0, %v2007
  %v2009 = vadd.f32 %v1922, %v397
  %2011 = vrot.lane.b32.xlu0 %v2009, 96
  %v2012 = vpop.permute.xlu0 %2011
  %v2014 = vmul.f32 %v2008, %v2012
  %2016 = vrot.lane.b32.xlu0 %v2014, 32
  %v2017 = vpop.permute.xlu0 %2016
  %v2019 = vadd.f32 %v2001, %v2017
  %v2020 = vtanh.pop %v2019
  %v2021 = vsub.f32 1.0, %v2008
  %2023 = vrot.lane.b32.xlu0 %v2020, 112
  %v2024 = vpop.permute.xlu0 %2023
  %v2026 = vmul.f32 %v2021, %v2024
  %v2027 = vmul.f32 %v2008, %v1848
  %v2028 = vadd.f32 %v2026, %v2027
  %v2029 = vld [vmem:[#allocation3] sm:$0xff]
  %v2030 = vadd.f32 %v2029, %v1997
  %v2031 = vxor.u32 %v2030, 2147483648
  %v2032 = vmul.f32 %v2031, 1.442695
  %v2033 = vpow.pop %v2032
  %v2034 = vadd.f32 %v2033, 1.0
  %v2035 = vrcp.pop %v2034
  %v2036 = vmul.f32 1.0, %v2035
  %v2037 = vadd.f32 %v1997, %v429
  %2039 = vrot.lane.b32.xlu0 %v2037, 96
  %v2040 = vpop.permute.xlu0 %2039
  %v2042 = vmul.f32 %v2036, %v2040
  %2044 = vrot.lane.b32.xlu0 %v2042, 32
  %v2045 = vpop.permute.xlu0 %2044
  %v2047 = vadd.f32 %v2029, %v2045
  %v2048 = vtanh.pop %v2047
  %v2049 = vsub.f32 1.0, %v2036
  %2051 = vrot.lane.b32.xlu0 %v2048, 112
  %v2052 = vpop.permute.xlu0 %2051
  %v2054 = vmul.f32 %v2049, %v2052
  %v2055 = vmul.f32 %v2036, %v1849
  %v2056 = vadd.f32 %v2054, %v2055
  %v2057 = vsel %vm468, %v2028, 0.0
  %2059 = vrot.lane.b32.xlu0 %v2057, 112
  %v2060 = vpop.permute.xlu0 %2059
  %s2062 = scalar_lea.vmem [#allocation4], 56
  %2063 = vst.msk [vmem:[%s2062] sm:$0xff] %vm55, %v2060
  %v2064 = vsel %vm457, %v2056, 0.0
  %2066 = vrot.lane.b32.xlu0 %v2064, 112
  %v2067 = vpop.permute.xlu0 %2066
  %2069 = vst.msk [vmem:[#allocation5] sm:$0xff] %vm55, %v2067
  %v2070 = vld [vmem:[#allocation4] sm:$0xff]
  %v2071 = vld [vmem:[#allocation4 + $0x8] sm:$0xff]
  %v2072 = vld [vmem:[#allocation4 + $0x10] sm:$0xff]
  %v2073 = vld [vmem:[#allocation4 + $0x18] sm:$0xff]
  %v2074 = vld [vmem:[#allocation4 + $0x20] sm:$0xff]
  %v2075 = vld [vmem:[#allocation4 + $0x28] sm:$0xff]
  %v2076 = vld [vmem:[#allocation4 + $0x30] sm:$0xff]
  %v2077 = vld [vmem:[#allocation4 + $0x38] sm:$0xff]
  %v2078 = vld [vmem:[#allocation5] sm:$0xff]
  %v2079 = vld [vmem:[#allocation5 + $0x8] sm:$0xff]
  %v2080 = vld [vmem:[#allocation5 + $0x10] sm:$0xff]
  %v2081 = vld [vmem:[#allocation5 + $0x18] sm:$0xff]
  %v2082 = vld [vmem:[#allocation5 + $0x20] sm:$0xff]
  %v2083 = vld [vmem:[#allocation5 + $0x28] sm:$0xff]
  %v2084 = vld [vmem:[#allocation5 + $0x30] sm:$0xff]
  %v2085 = vld [vmem:[#allocation5 + $0x38] sm:$0xff]
  %v2086 = vld [vmem:[%s8] sm:$0xff]
  %v2087 = vld [vmem:[%s8 + $0x8] sm:$0xff]
  %v2088 = vld [vmem:[%s8 + $0x10] sm:$0xff]
  %v2089 = vld [vmem:[%s8 + $0x18] sm:$0xff]
  %v2091 = vsel %vm55, %v2078, 0
  %v2094 = vsel %vm55, %v2079, 0
  %v2097 = vsel %vm55, %v2080, 0
  %v2100 = vsel %vm55, %v2081, 0
  %v2103 = vsel %vm55, %v2082, 0
  %v2106 = vsel %vm55, %v2083, 0
  %v2109 = vsel %vm55, %v2084, 0
  %v2112 = vsel %vm55, %v2085, 0
  %2114 = vmatprep.subr.mxu0 0.0
  %2115 = vmatpush1.msra.mxu0 %v2088
  %2116 = vmatprep.subr.mxu0 0.0
  %2117 = vmatpush1.msra.mxu0 %v2089
  %2118 = vmatprep.subr.mxu0 0.0
  %2119 = vmatpush1.msra.mxu0 0.0
  %2120 = vmatprep.subr.mxu0 0.0
  %2121 = vmatpush1.msra.mxu0 0.0
  %2122 = vmatprep.subr.mxu0 0.0
  %2123 = vmatpush1.msra.mxu0 0.0
  %2124 = vmatprep.subr.mxu0 0.0
  %2125 = vmatpush1.msra.mxu0 0.0
  %2126 = vmatprep.subr.mxu0 0.0
  %2127 = vmatpush1.msra.mxu0 0.0
  %2128 = vmatprep.subr.mxu0 0.0
  %2129 = vmatpush1.msra.mxu0 0.0
  %2130 = vmatprep.subr.mxu0 0.0
  %2131 = vmatpush1.msra.mxu0 0.0
  %2132 = vmatprep.subr.mxu0 0.0
  %2133 = vmatpush1.msra.mxu0 0.0
  %2134 = vmatprep.subr.mxu0 0.0
  %2135 = vmatpush1.msra.mxu0 0.0
  %2136 = vmatprep.subr.mxu0 0.0
  %2137 = vmatpush1.msra.mxu0 0.0
  %2138 = vmatprep.subr.mxu0 0.0
  %2139 = vmatpush1.msra.mxu0 0.0
  %2140 = vmatprep.subr.mxu0 0.0
  %2141 = vmatpush1.msra.mxu0 0.0
  %2142 = vmatprep.subr.mxu0 0.0
  %2143 = vmatpush1.msra.mxu0 0.0
  %2144 = vmatprep.subr.mxu0 0.0
  %2145 = vmatpush1.msra.mxu0 0.0
  %2146 = vmatprep.subr.mxu0 0.0
  %2147 = vmatpush1.msra.mxu0 0.0
  %2148 = vmatprep.subr.mxu0 0.0
  %2149 = vmatpush1.msra.mxu0 0.0
  %2150 = vmatprep.subr.mxu0 0.0
  %2151 = vmatpush1.msra.mxu0 0.0
  %2152 = vmatprep.subr.mxu0 0.0
  %2153 = vmatpush1.msra.mxu0 0.0
  %2154 = vmatprep.subr.mxu0 0.0
  %2155 = vmatpush1.msra.mxu0 0.0
  %2156 = vmatprep.subr.mxu0 0.0
  %2157 = vmatpush1.msra.mxu0 0.0
  %2158 = vmatprep.subr.mxu0 0.0
  %2159 = vmatpush1.msra.mxu0 0.0
  %2160 = vmatprep.subr.mxu0 0.0
  %2161 = vmatpush1.msra.mxu0 0.0
  %2162 = vmatprep.subr.mxu0 0.0
  %2163 = vmatpush1.msra.mxu0 0.0
  %2164 = vmatprep.subr.mxu0 0.0
  %2165 = vmatpush1.msra.mxu0 0.0
  %2166 = vmatprep.subr.mxu0 0.0
  %2167 = vmatpush1.msra.mxu0 0.0
  %2168 = vmatprep.subr.mxu0 0.0
  %2169 = vmatpush1.msra.mxu0 0.0
  %2170 = vmatprep.subr.mxu0 0.0
  %2171 = vmatpush1.msra.mxu0 0.0
  %2172 = vmatprep.subr.mxu0 0.0
  %2173 = vmatpush1.msra.mxu0 0.0
  %2174 = vmatprep.subr.mxu0 0.0
  %2175 = vmatpush1.msra.mxu0 0.0
  %2176 = vmatprep.subr.mxu0 0.0
  %2177 = vmatpush1.msra.mxu0 0.0
  %2178 = vmatprep.mubr.f32.mxu0 0.0
  %2179 = vmatmul.mubr.f32.gmra.mrb[0].mxu0 %v2091
  %v2180 = vpop.f32.mrb[0].mxu0
  %v2181 = vadd.f32 0.0, %v2180
  %v2182 = vpop.f32.mrb[0].mxu0
  %2183 = vmatprep.mubr.f32.mxu0 0.0
  %2184 = vmatmul.mubr.f32.gmra.mrb[0].mxu0 %v2094
  %v2185 = vpop.f32.mrb[0].mxu0
  %v2186 = vadd.f32 0.0, %v2185
  %v2187 = vpop.f32.mrb[0].mxu0
  %2188 = vmatprep.mubr.f32.mxu0 0.0
  %2189 = vmatmul.mubr.f32.gmra.mrb[0].mxu0 %v2097
  %v2190 = vpop.f32.mrb[0].mxu0
  %v2191 = vadd.f32 0.0, %v2190
  %v2192 = vpop.f32.mrb[0].mxu0
  %2193 = vmatprep.mubr.f32.mxu0 0.0
  %2194 = vmatmul.mubr.f32.gmra.mrb[0].mxu0 %v2100
  %v2195 = vpop.f32.mrb[0].mxu0
  %v2196 = vadd.f32 0.0, %v2195
  %v2197 = vpop.f32.mrb[0].mxu0
  %2198 = vmatprep.mubr.f32.mxu0 0.0
  %2199 = vmatmul.mubr.f32.gmra.mrb[0].mxu0 %v2103
  %v2200 = vpop.f32.mrb[0].mxu0
  %v2201 = vadd.f32 0.0, %v2200
  %v2202 = vpop.f32.mrb[0].mxu0
  %2203 = vmatprep.mubr.f32.mxu0 0.0
  %2204 = vmatmul.mubr.f32.gmra.mrb[0].mxu0 %v2106
  %v2205 = vpop.f32.mrb[0].mxu0
  %v2206 = vadd.f32 0.0, %v2205
  %v2207 = vpop.f32.mrb[0].mxu0
  %2208 = vmatprep.mubr.f32.mxu0 0.0
  %2209 = vmatmul.mubr.f32.gmra.mrb[0].mxu0 %v2109
  %v2210 = vpop.f32.mrb[0].mxu0
  %v2211 = vadd.f32 0.0, %v2210
  %v2212 = vpop.f32.mrb[0].mxu0
  %2213 = vmatprep.mubr.f32.mxu0 0.0
  %2214 = vmatmul.mubr.f32.gmra.mrb[0].mxu0 %v2112
  %v2215 = vpop.f32.mrb[0].mxu0
  %v2216 = vadd.f32 0.0, %v2215
  %v2217 = vpop.f32.mrb[0].mxu0
  %2218 = vdwg.mxu0
  %v2220 = vsel %vm55, %v2070, 0
  %v2223 = vsel %vm55, %v2071, 0
  %v2226 = vsel %vm55, %v2072, 0
  %v2229 = vsel %vm55, %v2073, 0
  %v2232 = vsel %vm55, %v2074, 0
  %v2235 = vsel %vm55, %v2075, 0
  %v2238 = vsel %vm55, %v2076, 0
  %v2241 = vsel %vm55, %v2077, 0
  %2243 = vmatprep.subr.mxu0 0.0
  %2244 = vmatpush1.msra.mxu0 %v2086
  %2245 = vmatprep.subr.mxu0 0.0
  %2246 = vmatpush1.msra.mxu0 %v2087
  %2247 = vmatprep.subr.mxu0 0.0
  %2248 = vmatpush1.msra.mxu0 0.0
  %2249 = vmatprep.subr.mxu0 0.0
  %2250 = vmatpush1.msra.mxu0 0.0
  %2251 = vmatprep.subr.mxu0 0.0
  %2252 = vmatpush1.msra.mxu0 0.0
  %2253 = vmatprep.subr.mxu0 0.0
  %2254 = vmatpush1.msra.mxu0 0.0
  %2255 = vmatprep.subr.mxu0 0.0
  %2256 = vmatpush1.msra.mxu0 0.0
  %2257 = vmatprep.subr.mxu0 0.0
  %2258 = vmatpush1.msra.mxu0 0.0
  %2259 = vmatprep.subr.mxu0 0.0
  %2260 = vmatpush1.msra.mxu0 0.0
  %2261 = vmatprep.subr.mxu0 0.0
  %2262 = vmatpush1.msra.mxu0 0.0
  %2263 = vmatprep.subr.mxu0 0.0
  %2264 = vmatpush1.msra.mxu0 0.0
  %2265 = vmatprep.subr.mxu0 0.0
  %2266 = vmatpush1.msra.mxu0 0.0
  %2267 = vmatprep.subr.mxu0 0.0
  %2268 = vmatpush1.msra.mxu0 0.0
  %2269 = vmatprep.subr.mxu0 0.0
  %2270 = vmatpush1.msra.mxu0 0.0
  %2271 = vmatprep.subr.mxu0 0.0
  %2272 = vmatpush1.msra.mxu0 0.0
  %2273 = vmatprep.subr.mxu0 0.0
  %2274 = vmatpush1.msra.mxu0 0.0
  %2275 = vmatprep.subr.mxu0 0.0
  %2276 = vmatpush1.msra.mxu0 0.0
  %2277 = vmatprep.subr.mxu0 0.0
  %2278 = vmatpush1.msra.mxu0 0.0
  %2279 = vmatprep.subr.mxu0 0.0
  %2280 = vmatpush1.msra.mxu0 0.0
  %2281 = vmatprep.subr.mxu0 0.0
  %2282 = vmatpush1.msra.mxu0 0.0
  %2283 = vmatprep.subr.mxu0 0.0
  %2284 = vmatpush1.msra.mxu0 0.0
  %2285 = vmatprep.subr.mxu0 0.0
  %2286 = vmatpush1.msra.mxu0 0.0
  %2287 = vmatprep.subr.mxu0 0.0
  %2288 = vmatpush1.msra.mxu0 0.0
  %2289 = vmatprep.subr.mxu0 0.0
  %2290 = vmatpush1.msra.mxu0 0.0
  %2291 = vmatprep.subr.mxu0 0.0
  %2292 = vmatpush1.msra.mxu0 0.0
  %2293 = vmatprep.subr.mxu0 0.0
  %2294 = vmatpush1.msra.mxu0 0.0
  %2295 = vmatprep.subr.mxu0 0.0
  %2296 = vmatpush1.msra.mxu0 0.0
  %2297 = vmatprep.subr.mxu0 0.0
  %2298 = vmatpush1.msra.mxu0 0.0
  %2299 = vmatprep.subr.mxu0 0.0
  %2300 = vmatpush1.msra.mxu0 0.0
  %2301 = vmatprep.subr.mxu0 0.0
  %2302 = vmatpush1.msra.mxu0 0.0
  %2303 = vmatprep.subr.mxu0 0.0
  %2304 = vmatpush1.msra.mxu0 0.0
  %2305 = vmatprep.subr.mxu0 0.0
  %2306 = vmatpush1.msra.mxu0 0.0
  %2307 = vmatprep.mubr.f32.mxu0 0.0
  %2308 = vmatmul.mubr.f32.gmra.mrb[0].mxu0 %v2220
  %v2309 = vpop.f32.mrb[0].mxu0
  %v2310 = vadd.f32 %v2181, %v2309
  %v2311 = vpop.f32.mrb[0].mxu0
  %2312 = vmatprep.mubr.f32.mxu0 0.0
  %2313 = vmatmul.mubr.f32.gmra.mrb[0].mxu0 %v2223
  %v2314 = vpop.f32.mrb[0].mxu0
  %v2315 = vadd.f32 %v2186, %v2314
  %v2316 = vpop.f32.mrb[0].mxu0
  %2317 = vmatprep.mubr.f32.mxu0 0.0
  %2318 = vmatmul.mubr.f32.gmra.mrb[0].mxu0 %v2226
  %v2319 = vpop.f32.mrb[0].mxu0
  %v2320 = vadd.f32 %v2191, %v2319
  %v2321 = vpop.f32.mrb[0].mxu0
  %2322 = vmatprep.mubr.f32.mxu0 0.0
  %2323 = vmatmul.mubr.f32.gmra.mrb[0].mxu0 %v2229
  %v2324 = vpop.f32.mrb[0].mxu0
  %v2325 = vadd.f32 %v2196, %v2324
  %v2326 = vpop.f32.mrb[0].mxu0
  %2327 = vmatprep.mubr.f32.mxu0 0.0
  %2328 = vmatmul.mubr.f32.gmra.mrb[0].mxu0 %v2232
  %v2329 = vpop.f32.mrb[0].mxu0
  %v2330 = vadd.f32 %v2201, %v2329
  %v2331 = vpop.f32.mrb[0].mxu0
  %2332 = vmatprep.mubr.f32.mxu0 0.0
  %2333 = vmatmul.mubr.f32.gmra.mrb[0].mxu0 %v2235
  %v2334 = vpop.f32.mrb[0].mxu0
  %v2335 = vadd.f32 %v2206, %v2334
  %v2336 = vpop.f32.mrb[0].mxu0
  %2337 = vmatprep.mubr.f32.mxu0 0.0
  %2338 = vmatmul.mubr.f32.gmra.mrb[0].mxu0 %v2238
  %v2339 = vpop.f32.mrb[0].mxu0
  %v2340 = vadd.f32 %v2211, %v2339
  %v2341 = vpop.f32.mrb[0].mxu0
  %2342 = vmatprep.mubr.f32.mxu0 0.0
  %2343 = vmatmul.mubr.f32.gmra.mrb[0].mxu0 %v2241
  %v2344 = vpop.f32.mrb[0].mxu0
  %v2345 = vadd.f32 %v2216, %v2344
  %v2346 = vpop.f32.mrb[0].mxu0
  %2347 = vdwg.mxu0
  %v2348 = vld [vmem:[%s9] sm:$0x1]
  %v2350 = vlaneseq
  %v2351 = vshrl.u32 %v2350, 7
  %v2352 = vsub.s32 0, %v2351
  %v2353 = vrot.slane %v2348, %v2352
  %v2355 = vadd.f32 %v2310, %v2353
  %v2356 = vadd.f32 %v2315, %v2353
  %v2357 = vadd.f32 %v2320, %v2353
  %v2358 = vadd.f32 %v2325, %v2353
  %v2359 = vadd.f32 %v2330, %v2353
  %v2360 = vadd.f32 %v2335, %v2353
  %v2361 = vadd.f32 %v2340, %v2353
  %v2362 = vadd.f32 %v2345, %v2353
  %v2363 = vtanh.pop %v2355
  %v2364 = vtanh.pop %v2356
  %v2365 = vtanh.pop %v2357
  %v2366 = vtanh.pop %v2358
  %v2367 = vtanh.pop %v2359
  %v2368 = vtanh.pop %v2360
  %v2369 = vtanh.pop %v2361
  %v2370 = vtanh.pop %v2362
  %v2371 = vld [vmem:[%s10] sm:$0xff]
  %v2372 = vld [vmem:[%s10 + $0x8] sm:$0xff]
  %v2373 = vld [vmem:[%s10 + $0x10] sm:$0xff]
  %v2374 = vld [vmem:[%s10 + $0x18] sm:$0xff]
  %vm2375 = vcmask 261120
  %v2377 = vsel %vm2375, %v2363, 0
  %v2380 = vsel %vm2375, %v2364, 0
  %v2383 = vsel %vm2375, %v2365, 0
  %v2386 = vsel %vm2375, %v2366, 0
  %v2389 = vsel %vm2375, %v2367, 0
  %v2392 = vsel %vm2375, %v2368, 0
  %v2395 = vsel %vm2375, %v2369, 0
  %v2398 = vsel %vm2375, %v2370, 0
  %2400 = vmatprep.subr.mxu0 0.0
  %2401 = vmatpush1.msra.mxu0 %v2371
  %2402 = vmatprep.subr.mxu0 0.0
  %2403 = vmatpush1.msra.mxu0 %v2372
  %2404 = vmatprep.subr.mxu0 0.0
  %2405 = vmatpush1.msra.mxu0 %v2373
  %2406 = vmatprep.subr.mxu0 0.0
  %2407 = vmatpush1.msra.mxu0 %v2374
  %2408 = vmatprep.subr.mxu0 0.0
  %2409 = vmatpush1.msra.mxu0 0.0
  %2410 = vmatprep.subr.mxu0 0.0
  %2411 = vmatpush1.msra.mxu0 0.0
  %2412 = vmatprep.subr.mxu0 0.0
  %2413 = vmatpush1.msra.mxu0 0.0
  %2414 = vmatprep.subr.mxu0 0.0
  %2415 = vmatpush1.msra.mxu0 0.0
  %2416 = vmatprep.subr.mxu0 0.0
  %2417 = vmatpush1.msra.mxu0 0.0
  %2418 = vmatprep.subr.mxu0 0.0
  %2419 = vmatpush1.msra.mxu0 0.0
  %2420 = vmatprep.subr.mxu0 0.0
  %2421 = vmatpush1.msra.mxu0 0.0
  %2422 = vmatprep.subr.mxu0 0.0
  %2423 = vmatpush1.msra.mxu0 0.0
  %2424 = vmatprep.subr.mxu0 0.0
  %2425 = vmatpush1.msra.mxu0 0.0
  %2426 = vmatprep.subr.mxu0 0.0
  %2427 = vmatpush1.msra.mxu0 0.0
  %2428 = vmatprep.subr.mxu0 0.0
  %2429 = vmatpush1.msra.mxu0 0.0
  %2430 = vmatprep.subr.mxu0 0.0
  %2431 = vmatpush1.msra.mxu0 0.0
  %2432 = vmatprep.subr.mxu0 0.0
  %2433 = vmatpush1.msra.mxu0 0.0
  %2434 = vmatprep.subr.mxu0 0.0
  %2435 = vmatpush1.msra.mxu0 0.0
  %2436 = vmatprep.subr.mxu0 0.0
  %2437 = vmatpush1.msra.mxu0 0.0
  %2438 = vmatprep.subr.mxu0 0.0
  %2439 = vmatpush1.msra.mxu0 0.0
  %2440 = vmatprep.subr.mxu0 0.0
  %2441 = vmatpush1.msra.mxu0 0.0
  %2442 = vmatprep.subr.mxu0 0.0
  %2443 = vmatpush1.msra.mxu0 0.0
  %2444 = vmatprep.subr.mxu0 0.0
  %2445 = vmatpush1.msra.mxu0 0.0
  %2446 = vmatprep.subr.mxu0 0.0
  %2447 = vmatpush1.msra.mxu0 0.0
  %2448 = vmatprep.subr.mxu0 0.0
  %2449 = vmatpush1.msra.mxu0 0.0
  %2450 = vmatprep.subr.mxu0 0.0
  %2451 = vmatpush1.msra.mxu0 0.0
  %2452 = vmatprep.subr.mxu0 0.0
  %2453 = vmatpush1.msra.mxu0 0.0
  %2454 = vmatprep.subr.mxu0 0.0
  %2455 = vmatpush1.msra.mxu0 0.0
  %2456 = vmatprep.subr.mxu0 0.0
  %2457 = vmatpush1.msra.mxu0 0.0
  %2458 = vmatprep.subr.mxu0 0.0
  %2459 = vmatpush1.msra.mxu0 0.0
  %2460 = vmatprep.subr.mxu0 0.0
  %2461 = vmatpush1.msra.mxu0 0.0
  %2462 = vmatprep.subr.mxu0 0.0
  %2463 = vmatpush1.msra.mxu0 0.0
  %2464 = vmatprep.mubr.f32.mxu0 0.0
  %2465 = vmatmul.mubr.f32.gmra.mrb[0].mxu0 %v2377
  %v2466 = vpop.f32.mrb[0].mxu0
  %v2467 = vadd.f32 0.0, %v2466
  %v2468 = vpop.f32.mrb[0].mxu0
  %2469 = vmatprep.mubr.f32.mxu0 0.0
  %2470 = vmatmul.mubr.f32.gmra.mrb[0].mxu0 %v2380
  %v2471 = vpop.f32.mrb[0].mxu0
  %v2472 = vadd.f32 0.0, %v2471
  %v2473 = vpop.f32.mrb[0].mxu0
  %2474 = vmatprep.mubr.f32.mxu0 0.0
  %2475 = vmatmul.mubr.f32.gmra.mrb[0].mxu0 %v2383
  %v2476 = vpop.f32.mrb[0].mxu0
  %v2477 = vadd.f32 0.0, %v2476
  %v2478 = vpop.f32.mrb[0].mxu0
  %2479 = vmatprep.mubr.f32.mxu0 0.0
  %2480 = vmatmul.mubr.f32.gmra.mrb[0].mxu0 %v2386
  %v2481 = vpop.f32.mrb[0].mxu0
  %v2482 = vadd.f32 0.0, %v2481
  %v2483 = vpop.f32.mrb[0].mxu0
  %2484 = vmatprep.mubr.f32.mxu0 0.0
  %2485 = vmatmul.mubr.f32.gmra.mrb[0].mxu0 %v2389
  %v2486 = vpop.f32.mrb[0].mxu0
  %v2487 = vadd.f32 0.0, %v2486
  %v2488 = vpop.f32.mrb[0].mxu0
  %2489 = vmatprep.mubr.f32.mxu0 0.0
  %2490 = vmatmul.mubr.f32.gmra.mrb[0].mxu0 %v2392
  %v2491 = vpop.f32.mrb[0].mxu0
  %v2492 = vadd.f32 0.0, %v2491
  %v2493 = vpop.f32.mrb[0].mxu0
  %2494 = vmatprep.mubr.f32.mxu0 0.0
  %2495 = vmatmul.mubr.f32.gmra.mrb[0].mxu0 %v2395
  %v2496 = vpop.f32.mrb[0].mxu0
  %v2497 = vadd.f32 0.0, %v2496
  %v2498 = vpop.f32.mrb[0].mxu0
  %2499 = vmatprep.mubr.f32.mxu0 0.0
  %2500 = vmatmul.mubr.f32.gmra.mrb[0].mxu0 %v2398
  %v2501 = vpop.f32.mrb[0].mxu0
  %v2502 = vadd.f32 0.0, %v2501
  %v2503 = vpop.f32.mrb[0].mxu0
  %2504 = vdwg.mxu0
  %v2505 = vld [vmem:[%s2] sm:$0xff]
  %v2506 = vld [vmem:[%s2 + $0x8] sm:$0xff]
  %v2507 = vld [vmem:[%s2 + $0x10] sm:$0xff]
  %v2508 = vld [vmem:[%s2 + $0x18] sm:$0xff]
  %v2509 = vld [vmem:[%s2 + $0x20] sm:$0xff]
  %v2510 = vld [vmem:[%s2 + $0x28] sm:$0xff]
  %v2511 = vld [vmem:[%s2 + $0x30] sm:$0xff]
  %v2512 = vld [vmem:[%s2 + $0x38] sm:$0xff]
  %2514 = vset.pattern.permute.xlu0 0
  %2515 = vperm.xlu0 %2514, %v2505
  %v2516 = vpop.permute.xlu0 %2515
  %2519 = vset.pattern.permute.xlu0 0
  %2520 = vperm.xlu0 %2519, %v2506
  %v2521 = vpop.permute.xlu0 %2520
  %2524 = vset.pattern.permute.xlu0 0
  %2525 = vperm.xlu0 %2524, %v2507
  %v2526 = vpop.permute.xlu0 %2525
  %2529 = vset.pattern.permute.xlu0 0
  %2530 = vperm.xlu0 %2529, %v2508
  %v2531 = vpop.permute.xlu0 %2530
  %2534 = vset.pattern.permute.xlu0 0
  %2535 = vperm.xlu0 %2534, %v2509
  %v2536 = vpop.permute.xlu0 %2535
  %2539 = vset.pattern.permute.xlu0 0
  %2540 = vperm.xlu0 %2539, %v2510
  %v2541 = vpop.permute.xlu0 %2540
  %2544 = vset.pattern.permute.xlu0 0
  %2545 = vperm.xlu0 %2544, %v2511
  %v2546 = vpop.permute.xlu0 %2545
  %2549 = vset.pattern.permute.xlu0 0
  %2550 = vperm.xlu0 %2549, %v2512
  %v2551 = vpop.permute.xlu0 %2550
  %v2553 = vadd.f32 %v2467, %v2516
  %v2554 = vadd.f32 %v2472, %v2521
  %v2555 = vadd.f32 %v2477, %v2526
  %v2556 = vadd.f32 %v2482, %v2531
  %v2557 = vadd.f32 %v2487, %v2536
  %v2558 = vadd.f32 %v2492, %v2541
  %v2559 = vadd.f32 %v2497, %v2546
  %v2560 = vadd.f32 %v2502, %v2551
  %v2561 = vsel %vm2375, %v2553, -inf
  %v2562 = vsel %vm2375, %v2554, -inf
  %v2563 = vsel %vm2375, %v2555, -inf
  %v2564 = vsel %vm2375, %v2556, -inf
  %v2565 = vsel %vm2375, %v2557, -inf
  %v2566 = vmax.f32 %v2561, %v2565
  %v2567 = vsel %vm2375, %v2558, -inf
  %v2568 = vmax.f32 %v2562, %v2567
  %v2569 = vsel %vm2375, %v2559, -inf
  %v2570 = vmax.f32 %v2563, %v2569
  %v2571 = vsel %vm2375, %v2560, -inf
  %v2572 = vmax.f32 %v2564, %v2571
  %v2573 = vmax.f32 %v2566, %v2568
  %v2574 = vmax.f32 %v2570, %v2572
  %v2575 = vmax.f32 %v2573, %v2574
  %v2576 = vsub.f32 %v2553, %v2575
  %v2577 = vsub.f32 %v2554, %v2575
  %v2578 = vsub.f32 %v2555, %v2575
  %v2579 = vsub.f32 %v2556, %v2575
  %v2580 = vsub.f32 %v2557, %v2575
  %v2581 = vsub.f32 %v2558, %v2575
  %v2582 = vsub.f32 %v2559, %v2575
  %v2583 = vsub.f32 %v2560, %v2575
  %v2584 = vmul.f32 %v2576, 1.442695
  %v2585 = vpow.pop %v2584
  %v2586 = vmul.f32 %v2577, 1.442695
  %v2587 = vpow.pop %v2586
  %v2588 = vmul.f32 %v2578, 1.442695
  %v2589 = vpow.pop %v2588
  %v2590 = vmul.f32 %v2579, 1.442695
  %v2591 = vpow.pop %v2590
  %v2592 = vmul.f32 %v2580, 1.442695
  %v2593 = vpow.pop %v2592
  %v2594 = vmul.f32 %v2581, 1.442695
  %v2595 = vpow.pop %v2594
  %v2596 = vmul.f32 %v2582, 1.442695
  %v2597 = vpow.pop %v2596
  %v2598 = vmul.f32 %v2583, 1.442695
  %v2599 = vpow.pop %v2598
  %v2600 = vsel %vm2375, %v2585, 0.0
  %v2601 = vsel %vm2375, %v2587, 0.0
  %v2602 = vadd.f32 %v2600, %v2601
  %v2603 = vsel %vm2375, %v2589, 0.0
  %v2604 = vadd.f32 %v2602, %v2603
  %v2605 = vsel %vm2375, %v2591, 0.0
  %v2606 = vadd.f32 %v2604, %v2605
  %v2607 = vsel %vm2375, %v2593, 0.0
  %v2608 = vadd.f32 %v2606, %v2607
  %v2609 = vsel %vm2375, %v2595, 0.0
  %v2610 = vadd.f32 %v2608, %v2609
  %v2611 = vsel %vm2375, %v2597, 0.0
  %v2612 = vadd.f32 %v2610, %v2611
  %v2613 = vsel %vm2375, %v2599, 0.0
  %v2614 = vadd.f32 %v2612, %v2613
  %v2615 = vrcp.pop %v2614
  %v2616 = vmul.f32 %v2585, %v2615
  %v2617 = vmul.f32 %v2587, %v2615
  %v2618 = vmul.f32 %v2589, %v2615
  %v2619 = vmul.f32 %v2591, %v2615
  %v2620 = vmul.f32 %v2593, %v2615
  %v2621 = vmul.f32 %v2595, %v2615
  %v2622 = vmul.f32 %v2597, %v2615
  %v2623 = vmul.f32 %v2599, %v2615
  %v2624 = vmul.f32 %v2616, %v2070
  %v2625 = vmul.f32 %v2617, %v2071
  %v2626 = vmul.f32 %v2618, %v2072
  %v2627 = vmul.f32 %v2619, %v2073
  %v2628 = vmul.f32 %v2620, %v2074
  %v2629 = vmul.f32 %v2621, %v2075
  %v2630 = vmul.f32 %v2622, %v2076
  %v2631 = vmul.f32 %v2623, %v2077
  %v2632 = vsel %vm55, %v2624, 0.0
  %v2633 = vsel %vm55, %v2625, 0.0
  %v2634 = vadd.f32 %v2632, %v2633
  %v2635 = vsel %vm55, %v2626, 0.0
  %v2636 = vadd.f32 %v2634, %v2635
  %v2637 = vsel %vm55, %v2627, 0.0
  %v2638 = vadd.f32 %v2636, %v2637
  %v2639 = vsel %vm55, %v2628, 0.0
  %v2640 = vadd.f32 %v2638, %v2639
  %v2641 = vsel %vm55, %v2629, 0.0
  %v2642 = vadd.f32 %v2640, %v2641
  %v2643 = vsel %vm55, %v2630, 0.0
  %v2644 = vadd.f32 %v2642, %v2643
  %v2645 = vsel %vm55, %v2631, 0.0
  %v2646 = vadd.f32 %v2644, %v2645
  %2647 = vrot.lane.b32.xlu0 %v2078, 16
  %v2648 = vpop.permute.xlu0 %2647
  %2649 = vrot.lane.b32.xlu0 %v2079, 16
  %v2650 = vpop.permute.xlu0 %2649
  %2651 = vrot.lane.b32.xlu0 %v2080, 16
  %v2652 = vpop.permute.xlu0 %2651
  %2653 = vrot.lane.b32.xlu0 %v2081, 16
  %v2654 = vpop.permute.xlu0 %2653
  %2655 = vrot.lane.b32.xlu0 %v2082, 16
  %v2656 = vpop.permute.xlu0 %2655
  %2657 = vrot.lane.b32.xlu0 %v2083, 16
  %v2658 = vpop.permute.xlu0 %2657
  %2659 = vrot.lane.b32.xlu0 %v2084, 16
  %v2660 = vpop.permute.xlu0 %2659
  %2661 = vrot.lane.b32.xlu0 %v2085, 16
  %v2662 = vpop.permute.xlu0 %2661
  %v2671 = vmul.f32 %v2616, %v2648
  %v2672 = vmul.f32 %v2617, %v2650
  %v2673 = vmul.f32 %v2618, %v2652
  %v2674 = vmul.f32 %v2619, %v2654
  %v2675 = vmul.f32 %v2620, %v2656
  %v2676 = vmul.f32 %v2621, %v2658
  %v2677 = vmul.f32 %v2622, %v2660
  %v2678 = vmul.f32 %v2623, %v2662
  %vm2679 = vcmask 261248
  %v2680 = vsel %vm2679, %v2671, 0.0
  %v2681 = vsel %vm2679, %v2672, 0.0
  %v2682 = vadd.f32 %v2680, %v2681
  %v2683 = vsel %vm2679, %v2673, 0.0
  %v2684 = vadd.f32 %v2682, %v2683
  %v2685 = vsel %vm2679, %v2674, 0.0
  %v2686 = vadd.f32 %v2684, %v2685
  %v2687 = vsel %vm2679, %v2675, 0.0
  %v2688 = vadd.f32 %v2686, %v2687
  %v2689 = vsel %vm2679, %v2676, 0.0
  %v2690 = vadd.f32 %v2688, %v2689
  %v2691 = vsel %vm2679, %v2677, 0.0
  %v2692 = vadd.f32 %v2690, %v2691
  %v2693 = vsel %vm2679, %v2678, 0.0
  %v2694 = vadd.f32 %v2692, %v2693
  %2695 = vst.msk [vmem:[%s11] sm:$0xff] %vm55, %v2646
  %2696 = vst.msk [vmem:[%s11] sm:$0xff] %vm2679, %v2694
  // Predicated region
  $region46: #{_han_apply.2} parent=0 // pred_check
    _
  $region47: #{_han_apply.2} parent=0 // pred_check_branch
    %2698 = sbr.rel (0) target = $region49
  $region48: #{_han_apply.2} parent=0 // pred_region
    _
  $region49: #{_han_apply.2} parent=0 // pred_fallthru
    _
  // Predicated region
  $region50: #{_han_apply.2} parent=0 // pred_check
    _
  $region51: #{_han_apply.2} parent=0 // pred_check_branch
    %2700 = sbr.rel (0) target = $region53
  $region52: #{_han_apply.2} parent=0 // pred_region
    _
  $region53: #{_han_apply.2} parent=0 // pred_fallthru
    _

</llo_original>
